<compile_context>
chip_gen: v7x
topology: tpu7x:2x2x1
jax: 0.10.0
libtpu: 0.0.40
codegen_flags: <defaults>
</compile_context>

<pallas_src>
import jax
import jax.numpy as jnp
from jax import lax
from jax.experimental import pallas as pl
from jax.experimental.pallas import tpu as pltpu

_NEG_INF = -1.0e9  # matches masked_fill(mask, -1000000000.0)


# ------------------------------ fused kernel --------------------------------
def _make_vae_kernel(n_enc, out_w):
    def kernel(*refs):
        (x_ref, mask_ref, eps_ref, red_ref, fc1_w_ref) = refs[:5]
        pos = 5
        enc_w_refs = [refs[pos + i] for i in range(n_enc)]
        pos += n_enc
        (mu_w_ref, lv_w_ref, beta_ref, alpha_w_ref,
         lnh_wh_ref, lnh_wr_ref, packed_ref, out_ref) = refs[pos:]

        TB = x_ref.shape[0]
        T = mu_w_ref.shape[1]
        Dh = alpha_w_ref.shape[1]                  # 200

        # ---- packed bias/scale slab (R, PW): static slices, one DMA ----------
        pv = packed_ref[...]
        gin_h, gin_r = pv[0:1, 0:Dh], pv[1:2, 0:Dh]
        bin_h, bin_r = pv[2:3, 0:Dh], pv[3:4, 0:Dh]
        lnh_b = pv[4:5, 0:Dh]
        nh_g, nh_b = pv[5:6, 0:Dh], pv[6:7, 0:Dh]
        fc1_b = pv[7:8, 0:1]                       # scalar bias of Linear(200,1)

        # ---- 1. fc1(x).squeeze(-1): one batched multiply-reduce (no B loop) --
        s = jnp.sum(x_ref[...] * fc1_w_ref[...], axis=-1) + fc1_b       # (TB, N)
        s = jnp.where(mask_ref[...] > 0.5, _NEG_INF, s)
        s_max = jnp.max(s, axis=1, keepdims=True)
        e = jnp.exp(s - s_max)
        net = e / jnp.sum(e, axis=1, keepdims=True)                     # (TB, N)

        # ---- 2. encode: ReLU-MLP, then mu / log_var (dropout = identity) -----
        hid = net
        for l in range(n_enc):
            w = enc_w_refs[l][...]
            b = pv[8 + l:9 + l, 0:w.shape[1]]
            hid = jnp.maximum(
                jnp.dot(hid, w, preferred_element_type=jnp.float32) + b, 0.0)
        mu_b = pv[8 + n_enc:9 + n_enc, 0:T]
        lv_b = pv[9 + n_enc:10 + n_enc, 0:T]
        mu = jnp.dot(hid, mu_w_ref[...], preferred_element_type=jnp.float32) + mu_b
        log_var = jnp.dot(hid, lv_w_ref[...], preferred_element_type=jnp.float32) + lv_b

        # ---- 3. reparameterize + softmax -> theta -----------------------------
        z = mu + eps_ref[...] * jnp.exp(log_var * 0.5)
        z_max = jnp.max(z, axis=1, keepdims=True)
        ez = jnp.exp(z - z_max)
        theta = ez / jnp.sum(ez, axis=1, keepdims=True)                 # (TB, T)

        # ---- 4. decoder with precomputed beta (T, N) --------------------------
        res = jnp.dot(theta, beta_ref[...], preferred_element_type=jnp.float32)  # (TB, N)
        logits = jnp.log(res + 1e-6)

        # ---- 5. topic_vec[argmax(theta)] via one-hot matmul (no gather) -------
        col = lax.broadcasted_iota(jnp.int32, (TB, T), 1)
        t_max = jnp.max(theta, axis=1, keepdims=True)
        first_idx = jnp.min(jnp.where(theta >= t_max, col, T), axis=1, keepdims=True)
        onehot = (col == first_idx).astype(jnp.float32)                 # (TB, T)
        h_emb = jnp.dot(onehot, alpha_w_ref[...],
                        preferred_element_type=jnp.float32)             # (TB, 200)
        red = red_ref[...]                                              # (TB, 200)

        # ---- 6. LayerNorm(400) of cat([h_emb, red]) without the concat --------
        mu4 = (jnp.sum(h_emb, axis=1, keepdims=True)
               + jnp.sum(red, axis=1, keepdims=True)) / (2.0 * Dh)
        var4 = (jnp.sum((h_emb - mu4) ** 2, axis=1, keepdims=True)
                + jnp.sum((red - mu4) ** 2, axis=1, keepdims=True)) / (2.0 * Dh)
        rstd4 = lax.rsqrt(var4 + 1e-5)
        n_h = (h_emb - mu4) * rstd4 * gin_h + bin_h
        n_r = (red - mu4) * rstd4 * gin_r + bin_r

        # ---- 7. Linear(400,200) as two half matmuls + LayerNorm(200) + ReLU ---
        hid2 = (jnp.dot(n_h, lnh_wh_ref[...], preferred_element_type=jnp.float32)
                + jnp.dot(n_r, lnh_wr_ref[...], preferred_element_type=jnp.float32)
                + lnh_b)
        mu2 = jnp.mean(hid2, axis=1, keepdims=True)
        var2 = jnp.mean((hid2 - mu2) ** 2, axis=1, keepdims=True)
        h_z = jnp.maximum(
            (hid2 - mu2) * lax.rsqrt(var2 + 1e-5) * nh_g + nh_b, 0.0)   # (TB, 200)

        # ---- 8. loss = reconstruction + KL -------------------------------------
        l_max = jnp.max(logits, axis=1, keepdims=True)
        lse = l_max + jnp.log(jnp.sum(jnp.exp(logits - l_max), axis=1, keepdims=True))
        rec = -jnp.sum(net * (logits - lse), axis=1, keepdims=True)
        kl = -0.5 * jnp.sum(1.0 + log_var - mu * mu - jnp.exp(log_var),
                            axis=1, keepdims=True)
        loss = rec + kl                                                 # (TB, 1)

        # ---- 9. single lane-dense store: [ h_z | loss broadcast into the pad ] -
        pad = out_w - Dh
        out_ref[...] = jnp.concatenate(
            [h_z, jnp.broadcast_to(loss, (TB, pad))], axis=-1)

    return kernel


# --------------------------- hoisted decoder weights -------------------------
def precompute_beta(params):
    """beta = softmax(alpha(rho.weight), dim=0).T  -> (T, N). Input-independent:
    compute once and reuse across forward calls."""
    wght = params["rho_w"] @ params["alpha_w"].T + params["alpha_b"]    # (N, T)
    return jax.nn.softmax(wght, axis=0).T                               # (T, N)


def _pack_vectors(params):
    """Pack all tiny (1, D) bias / scale vectors into one lane-aligned slab."""
    Dh = params["alpha_w"].shape[1]
    vecs = [params["ln_in_gamma"][:, :Dh], params["ln_in_gamma"][:, Dh:],
            params["ln_in_beta"][:, :Dh], params["ln_in_beta"][:, Dh:],
            params["lnh_b"], params["nh_gamma"], params["nh_beta"],
            params["fc1_b"]]
    vecs += list(params["enc_b"]) + [params["mu_b"], params["lv_b"]]
    vecs = [jnp.reshape(v, (1, -1)) for v in vecs]
    pw = max(max(v.shape[1] for v in vecs), Dh)
    pw = ((pw + 127) // 128) * 128
    rows = [jnp.pad(v, ((0, 0), (0, pw - v.shape[1]))) for v in vecs]
    packed = jnp.concatenate(rows, axis=0)
    pad_r = (-packed.shape[0]) % 8
    if pad_r:
        packed = jnp.pad(packed, ((0, pad_r), (0, 0)))
    return packed


# ------------------------------ python wrapper -------------------------------
def vae_forward(x, mask, params, eps, dropout_rate=0.0, redundancy_embed=None,
                beta=None):
    """Full VAE.forward. dropout_rate accepted for API parity (inference: identity).
    `beta` may be passed precomputed (precompute_beta) to avoid recomputing it per call."""
    del dropout_rate
    B, N, D = x.shape
    Dh = params["alpha_w"].shape[1]            # 200
    T = params["mu_w"].shape[1]
    n_enc = len(params["enc_w"])
    if redundancy_embed is None:
        redundancy_embed = jnp.zeros((B, Dh), jnp.float32)
    if beta is None:
        beta = precompute_beta(params)
    mask_f = mask.astype(jnp.float32)
    packed = _pack_vectors(params)
    lnh_wh = params["lnh_w"][:Dh, :]
    lnh_wr = params["lnh_w"][Dh:, :]

    out_w = ((Dh + 1 + 127) // 128) * 128      # lane-dense output width

    TB = 8 if (B % 8 == 0 and B > 8) else (8 if B == 8 else B)
    if B % TB != 0:
        TB = B
    grid = (B // TB,)

    def const2(shape):
        return pl.BlockSpec(shape, lambda i: (0, 0))

    inputs = [x, mask_f, eps, redundancy_embed, params["fc1_w"]]
    inputs += list(params["enc_w"])
    inputs += [params["mu_w"], params["lv_w"], beta, params["alpha_w"],
               lnh_wh, lnh_wr, packed]

    in_specs = [
        pl.BlockSpec((TB, N, D), lambda i: (i, 0, 0)),      # x streams over the grid
        pl.BlockSpec((TB, N), lambda i: (i, 0)),            # mask
        pl.BlockSpec((TB, T), lambda i: (i, 0)),            # eps
        pl.BlockSpec((TB, Dh), lambda i: (i, 0)),           # redundancy_embed
        const2(params["fc1_w"].shape),
    ]
    in_specs += [const2(w.shape) for w in params["enc_w"]]
    in_specs += [const2(params["mu_w"].shape), const2(params["lv_w"].shape),
                 const2(beta.shape), const2(params["alpha_w"].shape),
                 const2(lnh_wh.shape), const2(lnh_wr.shape), const2(packed.shape)]

    out = pl.pallas_call(
        _make_vae_kernel(n_enc, out_w),
        grid=grid,
        out_shape=jax.ShapeDtypeStruct((B, out_w), jnp.float32),
        in_specs=in_specs,
        out_specs=pl.BlockSpec((TB, out_w), lambda i: (i, 0)),
        compiler_params=pltpu.CompilerParams(
            dimension_semantics=("parallel",)),
    )(*inputs)
    return out[:, :Dh], out[:, Dh]


# --------------------------- deterministic params ----------------------------
def init_params(key, encode_dims):
    in_features = encode_dims[0]
    n_topic = encode_dims[-1]
    d_pen = encode_dims[-2]
    ks = iter(jax.random.split(key, 32))

    def w(shape, s=0.1):
        return jax.random.normal(next(ks), shape, jnp.float32) * s

    enc_w, enc_b = [], []
    for i in range(len(encode_dims) - 2):
        enc_w.append(w((encode_dims[i], encode_dims[i + 1])))
        enc_b.append(w((1, encode_dims[i + 1])))

    return dict(
        fc1_w=w((1, 200)), fc1_b=w((1, 1)),
        enc_w=enc_w, enc_b=enc_b,
        mu_w=w((d_pen, n_topic)), mu_b=w((1, n_topic)),
        lv_w=w((d_pen, n_topic)), lv_b=w((1, n_topic)),
        rho_w=w((in_features, 200)),                          # rho.weight (in_features, 200)
        alpha_w=w((n_topic, 200)), alpha_b=w((1, n_topic)),   # alpha.weight / bias
        ln_in_gamma=1.0 + w((1, 400), 0.05), ln_in_beta=w((1, 400), 0.05),
        lnh_w=w((400, 200)), lnh_b=w((1, 200)),
        nh_gamma=1.0 + w((1, 200), 0.05), nh_beta=w((1, 200), 0.05),
    )


# ------------------------------ pure-JAX reference ---------------------------
def reference_forward(x, mask, params, eps, redundancy_embed=None):
    p = params
    s = jnp.einsum("bnd,d->bn", x, p["fc1_w"][0]) + p["fc1_b"][0, 0]
    s = jnp.where(mask, _NEG_INF, s)
    net = jax.nn.softmax(s, axis=1)
    hid = net
    for w, b in zip(p["enc_w"], p["enc_b"]):
        hid = jax.nn.relu(hid @ w + b)
    mu = hid @ p["mu_w"] + p["mu_b"]
    log_var = hid @ p["lv_w"] + p["lv_b"]
    z = mu + eps * jnp.exp(log_var / 2.0)
    theta = jax.nn.softmax(z, axis=1)
    wght = p["rho_w"] @ p["alpha_w"].T + p["alpha_b"]
    beta = jax.nn.softmax(wght, axis=0).T
    logits = jnp.log(theta @ beta + 1e-6)
    h_emb = p["alpha_w"][jnp.argmax(theta, axis=1)]
    if redundancy_embed is None:
        redundancy_embed = jnp.zeros_like(h_emb)
    cat = jnp.concatenate([h_emb, redundancy_embed], axis=1)
    m4 = cat.mean(-1, keepdims=True)
    v4 = ((cat - m4) ** 2).mean(-1, keepdims=True)
    n4 = (cat - m4) / jnp.sqrt(v4 + 1e-5) * p["ln_in_gamma"] + p["ln_in_beta"]
    hid2 = n4 @ p["lnh_w"] + p["lnh_b"]
    m2 = hid2.mean(-1, keepdims=True)
    v2 = ((hid2 - m2) ** 2).mean(-1, keepdims=True)
    h_z = jax.nn.relu((hid2 - m2) / jnp.sqrt(v2 + 1e-5) * p["nh_gamma"] + p["nh_beta"])
    lsm = jax.nn.log_softmax(logits, axis=1)
    rec = -jnp.sum(net * lsm, axis=1)
    kl = -0.5 * jnp.sum(1.0 + log_var - mu ** 2 - jnp.exp(log_var), axis=1)
    return h_z, rec + kl


if __name__ == "__main__":
    B = 16                                 # 2 batch-blocks of 8 -> parallel grid (2 TCs on v7x)
    encode_dims = [256, 128, 64, 32]       # [in_features, ..., n_topic]
    N, T = encode_dims[0], encode_dims[-1]

    key = jax.random.PRNGKey(0)
    kx, km, ke, kp = jax.random.split(key, 4)
    x = jax.random.normal(kx, (B, N, 200), jnp.float32)
    mask = jax.random.bernoulli(km, 0.25, (B, N))
    mask = mask.at[:, 0].set(False)        # at least one unmasked position per row
    eps = jax.random.normal(ke, (B, T), jnp.float32)   # reparameterization noise
    params = init_params(kp, encode_dims)

    # beta is input-independent: compute once, reuse for every forward call.
    beta = precompute_beta(params)

    h_z, loss = vae_forward(x, mask, params, eps, dropout_rate=0.1, beta=beta)
    h_z = jax.block_until_ready(h_z)
    loss = jax.block_until_ready(loss)

    h_ref, l_ref = reference_forward(x, mask, params, eps)
    assert h_z.shape == (B, 200), h_z.shape
    assert loss.shape == (B,), loss.shape
    ok_h = jnp.allclose(h_z, h_ref, atol=2e-3, rtol=2e-3)
    ok_l = jnp.allclose(loss, l_ref, atol=2e-3, rtol=2e-3)
    if not (ok_h and ok_l):
        err_h = float(jnp.max(jnp.abs(h_z - h_ref)))
        err_l = float(jnp.max(jnp.abs(loss - l_ref)))
        raise AssertionError(f"mismatch vs reference: h_z={err_h}, loss={err_l}")

    print("KERNEL_OK")
</pallas_src>

<mosaic_0001>
module attributes {stable_mosaic.version = 11 : i64} {
  func.func @kernel(%arg0: i32, %arg1: memref<8x256x200xf32, #tpu.memory_space<vmem>>, %arg2: memref<8x256xf32, #tpu.memory_space<vmem>>, %arg3: memref<8x32xf32, #tpu.memory_space<vmem>>, %arg4: memref<8x200xf32, #tpu.memory_space<vmem>>, %arg5: memref<1x200xf32, #tpu.memory_space<vmem>>, %arg6: memref<256x128xf32, #tpu.memory_space<vmem>>, %arg7: memref<128x64xf32, #tpu.memory_space<vmem>>, %arg8: memref<64x32xf32, #tpu.memory_space<vmem>>, %arg9: memref<64x32xf32, #tpu.memory_space<vmem>>, %arg10: memref<32x256xf32, #tpu.memory_space<vmem>>, %arg11: memref<32x200xf32, #tpu.memory_space<vmem>>, %arg12: memref<200x200xf32, #tpu.memory_space<vmem>>, %arg13: memref<200x200xf32, #tpu.memory_space<vmem>>, %arg14: memref<16x256xf32, #tpu.memory_space<vmem>>, %arg15: memref<8x256xf32, #tpu.memory_space<vmem>>) attributes {dimension_semantics = [#tpu.dimension_semantics<parallel>], iteration_bounds = array<i64: 2>, scalar_prefetch = 0 : i64, scratch_operands = 0 : i64, tpu.core_type = #tpu.core_type<tc>, window_params = [{transform_indices = @transform_0, window_bounds = array<i64: 8, 256, 200>}, {transform_indices = @transform_1, window_bounds = array<i64: 8, 256>}, {transform_indices = @transform_2, window_bounds = array<i64: 8, 32>}, {transform_indices = @transform_3, window_bounds = array<i64: 8, 200>}, {pipeline_mode = #tpu.pipeline_mode<synchronous>, transform_indices = @transform_4, window_bounds = array<i64: 1, 200>}, {pipeline_mode = #tpu.pipeline_mode<synchronous>, transform_indices = @transform_5, window_bounds = array<i64: 256, 128>}, {pipeline_mode = #tpu.pipeline_mode<synchronous>, transform_indices = @transform_6, window_bounds = array<i64: 128, 64>}, {pipeline_mode = #tpu.pipeline_mode<synchronous>, transform_indices = @transform_7, window_bounds = array<i64: 64, 32>}, {pipeline_mode = #tpu.pipeline_mode<synchronous>, transform_indices = @transform_8, window_bounds = array<i64: 64, 32>}, {pipeline_mode = #tpu.pipeline_mode<synchronous>, transform_indices = @transform_9, window_bounds = array<i64: 32, 256>}, {pipeline_mode = #tpu.pipeline_mode<synchronous>, transform_indices = @transform_10, window_bounds = array<i64: 32, 200>}, {pipeline_mode = #tpu.pipeline_mode<synchronous>, transform_indices = @transform_11, window_bounds = array<i64: 200, 200>}, {pipeline_mode = #tpu.pipeline_mode<synchronous>, transform_indices = @transform_12, window_bounds = array<i64: 200, 200>}, {pipeline_mode = #tpu.pipeline_mode<synchronous>, transform_indices = @transform_13, window_bounds = array<i64: 16, 256>}, {transform_indices = @transform_14, window_bounds = array<i64: 8, 256>}]} {
    %c0 = arith.constant 0 : index
    %c0_0 = arith.constant 0 : index
    %0 = vector.load %arg14[%c0, %c0_0] : memref<16x256xf32, #tpu.memory_space<vmem>>, vector<16x256xf32>
    %1 = vector.extract_strided_slice %0 {offsets = [0, 0], sizes = [1, 200], strides = [1, 1]} : vector<16x256xf32> to vector<1x200xf32>
    %2 = vector.extract_strided_slice %0 {offsets = [1, 0], sizes = [1, 200], strides = [1, 1]} : vector<16x256xf32> to vector<1x200xf32>
    %3 = vector.extract_strided_slice %0 {offsets = [2, 0], sizes = [1, 200], strides = [1, 1]} : vector<16x256xf32> to vector<1x200xf32>
    %4 = vector.extract_strided_slice %0 {offsets = [3, 0], sizes = [1, 200], strides = [1, 1]} : vector<16x256xf32> to vector<1x200xf32>
    %5 = vector.extract_strided_slice %0 {offsets = [4, 0], sizes = [1, 200], strides = [1, 1]} : vector<16x256xf32> to vector<1x200xf32>
    %6 = vector.extract_strided_slice %0 {offsets = [5, 0], sizes = [1, 200], strides = [1, 1]} : vector<16x256xf32> to vector<1x200xf32>
    %7 = vector.extract_strided_slice %0 {offsets = [6, 0], sizes = [1, 200], strides = [1, 1]} : vector<16x256xf32> to vector<1x200xf32>
    %8 = vector.extract_strided_slice %0 {offsets = [7, 0], sizes = [1, 1], strides = [1, 1]} : vector<16x256xf32> to vector<1x1xf32>
    %c0_1 = arith.constant 0 : index
    %c0_2 = arith.constant 0 : index
    %c0_3 = arith.constant 0 : index
    %9 = vector.load %arg1[%c0_1, %c0_2, %c0_3] : memref<8x256x200xf32, #tpu.memory_space<vmem>>, vector<8x256x200xf32>
    %c0_4 = arith.constant 0 : index
    %c0_5 = arith.constant 0 : index
    %10 = vector.load %arg5[%c0_4, %c0_5] : memref<1x200xf32, #tpu.memory_space<vmem>>, vector<1x200xf32>
    %11 = vector.shape_cast %10 : vector<1x200xf32> to vector<1x1x200xf32>
    %12 = vector.broadcast %11 : vector<1x1x200xf32> to vector<8x256x200xf32>
    %13 = arith.mulf %9, %12 : vector<8x256x200xf32>
    %cst = arith.constant dense<0.000000e+00> : vector<8x256xf32>
    %14 = vector.multi_reduction <add>, %13, %cst [2] : vector<8x256x200xf32> to vector<8x256xf32>
    %15 = vector.broadcast %8 : vector<1x1xf32> to vector<8x256xf32>
    %16 = arith.addf %14, %15 : vector<8x256xf32>
    %c0_6 = arith.constant 0 : index
    %c0_7 = arith.constant 0 : index
    %17 = vector.load %arg2[%c0_6, %c0_7] : memref<8x256xf32, #tpu.memory_space<vmem>>, vector<8x256xf32>
    %cst_8 = arith.constant 5.000000e-01 : f32
    %18 = vector.broadcast %cst_8 : f32 to vector<8x256xf32>
    %19 = arith.cmpf ogt, %17, %18 : vector<8x256xf32>
    %cst_9 = arith.constant -1.000000e+09 : f32
    %20 = vector.broadcast %cst_9 : f32 to vector<8x256xf32>
    %21 = arith.select %19, %20, %16 : vector<8x256xi1>, vector<8x256xf32>
    %cst_10 = arith.constant dense<0xFF800000> : vector<8xf32>
    %22 = vector.multi_reduction <maximumf>, %21, %cst_10 [1] : vector<8x256xf32> to vector<8xf32>
    %23 = vector.shape_cast %22 : vector<8xf32> to vector<8x1xf32>
    %24 = vector.broadcast %23 : vector<8x1xf32> to vector<8x256xf32>
    %25 = arith.subf %21, %24 : vector<8x256xf32>
    %26 = math.exp %25 : vector<8x256xf32>
    %cst_11 = arith.constant dense<0.000000e+00> : vector<8xf32>
    %27 = vector.multi_reduction <add>, %26, %cst_11 [1] : vector<8x256xf32> to vector<8xf32>
    %28 = vector.shape_cast %27 : vector<8xf32> to vector<8x1xf32>
    %29 = vector.broadcast %28 : vector<8x1xf32> to vector<8x256xf32>
    %30 = arith.divf %26, %29 : vector<8x256xf32>
    %c0_12 = arith.constant 0 : index
    %c0_13 = arith.constant 0 : index
    %31 = vector.load %arg6[%c0_12, %c0_13] : memref<256x128xf32, #tpu.memory_space<vmem>>, vector<256x128xf32>
    %32 = vector.extract_strided_slice %0 {offsets = [8, 0], sizes = [1, 128], strides = [1, 1]} : vector<16x256xf32> to vector<1x128xf32>
    %cst_14 = arith.constant dense<0.000000e+00> : vector<8x128xf32>
    %33 = tpu.matmul %30, %31, %cst_14 {dimension_numbers = #tpu.dot_dimension_numbers<[1], [0], [0], [1], [0, 0, 1, 1], [], []>} : vector<8x256xf32>, vector<256x128xf32>, vector<8x128xf32> -> vector<8x128xf32>
    %34 = vector.broadcast %32 : vector<1x128xf32> to vector<8x128xf32>
    %35 = arith.addf %33, %34 : vector<8x128xf32>
    %cst_15 = arith.constant 0.000000e+00 : f32
    %36 = vector.broadcast %cst_15 : f32 to vector<8x128xf32>
    %37 = arith.maximumf %35, %36 : vector<8x128xf32>
    %c0_16 = arith.constant 0 : index
    %c0_17 = arith.constant 0 : index
    %38 = vector.load %arg7[%c0_16, %c0_17] : memref<128x64xf32, #tpu.memory_space<vmem>>, vector<128x64xf32>
    %39 = vector.extract_strided_slice %0 {offsets = [9, 0], sizes = [1, 64], strides = [1, 1]} : vector<16x256xf32> to vector<1x64xf32>
    %cst_18 = arith.constant dense<0.000000e+00> : vector<8x64xf32>
    %40 = tpu.matmul %37, %38, %cst_18 {dimension_numbers = #tpu.dot_dimension_numbers<[1], [0], [0], [1], [0, 0, 1, 1], [], []>} : vector<8x128xf32>, vector<128x64xf32>, vector<8x64xf32> -> vector<8x64xf32>
    %41 = vector.broadcast %39 : vector<1x64xf32> to vector<8x64xf32>
    %42 = arith.addf %40, %41 : vector<8x64xf32>
    %cst_19 = arith.constant 0.000000e+00 : f32
    %43 = vector.broadcast %cst_19 : f32 to vector<8x64xf32>
    %44 = arith.maximumf %42, %43 : vector<8x64xf32>
    %45 = vector.extract_strided_slice %0 {offsets = [10, 0], sizes = [1, 32], strides = [1, 1]} : vector<16x256xf32> to vector<1x32xf32>
    %46 = vector.extract_strided_slice %0 {offsets = [11, 0], sizes = [1, 32], strides = [1, 1]} : vector<16x256xf32> to vector<1x32xf32>
    %c0_20 = arith.constant 0 : index
    %c0_21 = arith.constant 0 : index
    %47 = vector.load %arg8[%c0_20, %c0_21] : memref<64x32xf32, #tpu.memory_space<vmem>>, vector<64x32xf32>
    %cst_22 = arith.constant dense<0.000000e+00> : vector<8x32xf32>
    %48 = tpu.matmul %44, %47, %cst_22 {dimension_numbers = #tpu.dot_dimension_numbers<[1], [0], [0], [1], [0, 0, 1, 1], [], []>} : vector<8x64xf32>, vector<64x32xf32>, vector<8x32xf32> -> vector<8x32xf32>
    %49 = vector.broadcast %45 : vector<1x32xf32> to vector<8x32xf32>
    %50 = arith.addf %48, %49 : vector<8x32xf32>
    %c0_23 = arith.constant 0 : index
    %c0_24 = arith.constant 0 : index
    %51 = vector.load %arg9[%c0_23, %c0_24] : memref<64x32xf32, #tpu.memory_space<vmem>>, vector<64x32xf32>
    %cst_25 = arith.constant dense<0.000000e+00> : vector<8x32xf32>
    %52 = tpu.matmul %44, %51, %cst_25 {dimension_numbers = #tpu.dot_dimension_numbers<[1], [0], [0], [1], [0, 0, 1, 1], [], []>} : vector<8x64xf32>, vector<64x32xf32>, vector<8x32xf32> -> vector<8x32xf32>
    %53 = vector.broadcast %46 : vector<1x32xf32> to vector<8x32xf32>
    %54 = arith.addf %52, %53 : vector<8x32xf32>
    %c0_26 = arith.constant 0 : index
    %c0_27 = arith.constant 0 : index
    %55 = vector.load %arg3[%c0_26, %c0_27] : memref<8x32xf32, #tpu.memory_space<vmem>>, vector<8x32xf32>
    %cst_28 = arith.constant 5.000000e-01 : f32
    %56 = vector.broadcast %cst_28 : f32 to vector<8x32xf32>
    %57 = arith.mulf %54, %56 : vector<8x32xf32>
    %58 = math.exp %57 : vector<8x32xf32>
    %59 = arith.mulf %55, %58 : vector<8x32xf32>
    %60 = arith.addf %50, %59 : vector<8x32xf32>
    %cst_29 = arith.constant dense<0xFF800000> : vector<8xf32>
    %61 = vector.multi_reduction <maximumf>, %60, %cst_29 [1] : vector<8x32xf32> to vector<8xf32>
    %62 = vector.shape_cast %61 : vector<8xf32> to vector<8x1xf32>
    %63 = vector.broadcast %62 : vector<8x1xf32> to vector<8x32xf32>
    %64 = arith.subf %60, %63 : vector<8x32xf32>
    %65 = math.exp %64 : vector<8x32xf32>
    %cst_30 = arith.constant dense<0.000000e+00> : vector<8xf32>
    %66 = vector.multi_reduction <add>, %65, %cst_30 [1] : vector<8x32xf32> to vector<8xf32>
    %67 = vector.shape_cast %66 : vector<8xf32> to vector<8x1xf32>
    %68 = vector.broadcast %67 : vector<8x1xf32> to vector<8x32xf32>
    %69 = arith.divf %65, %68 : vector<8x32xf32>
    %c0_31 = arith.constant 0 : index
    %c0_32 = arith.constant 0 : index
    %70 = vector.load %arg10[%c0_31, %c0_32] : memref<32x256xf32, #tpu.memory_space<vmem>>, vector<32x256xf32>
    %cst_33 = arith.constant dense<0.000000e+00> : vector<8x256xf32>
    %71 = tpu.matmul %69, %70, %cst_33 {dimension_numbers = #tpu.dot_dimension_numbers<[1], [0], [0], [1], [0, 0, 1, 1], [], []>} : vector<8x32xf32>, vector<32x256xf32>, vector<8x256xf32> -> vector<8x256xf32>
    %cst_34 = arith.constant 9.99999997E-7 : f32
    %72 = vector.broadcast %cst_34 : f32 to vector<8x256xf32>
    %73 = arith.addf %71, %72 : vector<8x256xf32>
    %74 = math.log %73 : vector<8x256xf32>
    %75 = tpu.iota {dimensions = array<i32: 1>} : vector<8x32xi32>
    %cst_35 = arith.constant dense<0xFF800000> : vector<8xf32>
    %76 = vector.multi_reduction <maximumf>, %69, %cst_35 [1] : vector<8x32xf32> to vector<8xf32>
    %77 = vector.shape_cast %76 : vector<8xf32> to vector<8x1xf32>
    %78 = vector.broadcast %77 : vector<8x1xf32> to vector<8x32xf32>
    %79 = arith.cmpf oge, %69, %78 : vector<8x32xf32>
    %c32_i32 = arith.constant 32 : i32
    %80 = vector.broadcast %c32_i32 : i32 to vector<8x32xi32>
    %81 = arith.select %79, %75, %80 : vector<8x32xi1>, vector<8x32xi32>
    %cst_36 = arith.constant dense<2147483647> : vector<8xi32>
    %82 = vector.multi_reduction <minsi>, %81, %cst_36 [1] : vector<8x32xi32> to vector<8xi32>
    %83 = vector.shape_cast %82 : vector<8xi32> to vector<8x1xi32>
    %84 = vector.broadcast %83 : vector<8x1xi32> to vector<8x32xi32>
    %85 = arith.cmpi eq, %75, %84 : vector<8x32xi32>
    %86 = arith.extui %85 : vector<8x32xi1> to vector<8x32xi32>
    %87 = arith.sitofp %86 : vector<8x32xi32> to vector<8x32xf32>
    %c0_37 = arith.constant 0 : index
    %c0_38 = arith.constant 0 : index
    %88 = vector.load %arg11[%c0_37, %c0_38] : memref<32x200xf32, #tpu.memory_space<vmem>>, vector<32x200xf32>
    %cst_39 = arith.constant dense<0.000000e+00> : vector<8x200xf32>
    %89 = tpu.matmul %87, %88, %cst_39 {dimension_numbers = #tpu.dot_dimension_numbers<[1], [0], [0], [1], [0, 0, 1, 1], [], []>} : vector<8x32xf32>, vector<32x200xf32>, vector<8x200xf32> -> vector<8x200xf32>
    %c0_40 = arith.constant 0 : index
    %c0_41 = arith.constant 0 : index
    %90 = vector.load %arg4[%c0_40, %c0_41] : memref<8x200xf32, #tpu.memory_space<vmem>>, vector<8x200xf32>
    %cst_42 = arith.constant dense<0.000000e+00> : vector<8xf32>
    %91 = vector.multi_reduction <add>, %89, %cst_42 [1] : vector<8x200xf32> to vector<8xf32>
    %92 = vector.shape_cast %91 : vector<8xf32> to vector<8x1xf32>
    %cst_43 = arith.constant dense<0.000000e+00> : vector<8xf32>
    %93 = vector.multi_reduction <add>, %90, %cst_43 [1] : vector<8x200xf32> to vector<8xf32>
    %94 = vector.shape_cast %93 : vector<8xf32> to vector<8x1xf32>
    %95 = arith.addf %92, %94 : vector<8x1xf32>
    %cst_44 = arith.constant 4.000000e+02 : f32
    %96 = vector.broadcast %cst_44 : f32 to vector<8x1xf32>
    %97 = arith.divf %95, %96 : vector<8x1xf32>
    %98 = vector.broadcast %97 : vector<8x1xf32> to vector<8x200xf32>
    %99 = arith.subf %89, %98 : vector<8x200xf32>
    %100 = arith.mulf %99, %99 : vector<8x200xf32>
    %cst_45 = arith.constant dense<0.000000e+00> : vector<8xf32>
    %101 = vector.multi_reduction <add>, %100, %cst_45 [1] : vector<8x200xf32> to vector<8xf32>
    %102 = vector.shape_cast %101 : vector<8xf32> to vector<8x1xf32>
    %103 = vector.broadcast %97 : vector<8x1xf32> to vector<8x200xf32>
    %104 = arith.subf %90, %103 : vector<8x200xf32>
    %105 = arith.mulf %104, %104 : vector<8x200xf32>
    %cst_46 = arith.constant dense<0.000000e+00> : vector<8xf32>
    %106 = vector.multi_reduction <add>, %105, %cst_46 [1] : vector<8x200xf32> to vector<8xf32>
    %107 = vector.shape_cast %106 : vector<8xf32> to vector<8x1xf32>
    %108 = arith.addf %102, %107 : vector<8x1xf32>
    %cst_47 = arith.constant 4.000000e+02 : f32
    %109 = vector.broadcast %cst_47 : f32 to vector<8x1xf32>
    %110 = arith.divf %108, %109 : vector<8x1xf32>
    %cst_48 = arith.constant 9.99999974E-6 : f32
    %111 = vector.broadcast %cst_48 : f32 to vector<8x1xf32>
    %112 = arith.addf %110, %111 : vector<8x1xf32>
    %113 = math.rsqrt %112 : vector<8x1xf32>
    %114 = vector.broadcast %97 : vector<8x1xf32> to vector<8x200xf32>
    %115 = arith.subf %89, %114 : vector<8x200xf32>
    %116 = vector.broadcast %113 : vector<8x1xf32> to vector<8x200xf32>
    %117 = arith.mulf %115, %116 : vector<8x200xf32>
    %118 = vector.broadcast %1 : vector<1x200xf32> to vector<8x200xf32>
    %119 = arith.mulf %117, %118 : vector<8x200xf32>
    %120 = vector.broadcast %3 : vector<1x200xf32> to vector<8x200xf32>
    %121 = arith.addf %119, %120 : vector<8x200xf32>
    %122 = vector.broadcast %97 : vector<8x1xf32> to vector<8x200xf32>
    %123 = arith.subf %90, %122 : vector<8x200xf32>
    %124 = vector.broadcast %113 : vector<8x1xf32> to vector<8x200xf32>
    %125 = arith.mulf %123, %124 : vector<8x200xf32>
    %126 = vector.broadcast %2 : vector<1x200xf32> to vector<8x200xf32>
    %127 = arith.mulf %125, %126 : vector<8x200xf32>
    %128 = vector.broadcast %4 : vector<1x200xf32> to vector<8x200xf32>
    %129 = arith.addf %127, %128 : vector<8x200xf32>
    %c0_49 = arith.constant 0 : index
    %c0_50 = arith.constant 0 : index
    %130 = vector.load %arg12[%c0_49, %c0_50] : memref<200x200xf32, #tpu.memory_space<vmem>>, vector<200x200xf32>
    %cst_51 = arith.constant dense<0.000000e+00> : vector<8x200xf32>
    %131 = tpu.matmul %121, %130, %cst_51 {dimension_numbers = #tpu.dot_dimension_numbers<[1], [0], [0], [1], [0, 0, 1, 1], [], []>} : vector<8x200xf32>, vector<200x200xf32>, vector<8x200xf32> -> vector<8x200xf32>
    %c0_52 = arith.constant 0 : index
    %c0_53 = arith.constant 0 : index
    %132 = vector.load %arg13[%c0_52, %c0_53] : memref<200x200xf32, #tpu.memory_space<vmem>>, vector<200x200xf32>
    %cst_54 = arith.constant dense<0.000000e+00> : vector<8x200xf32>
    %133 = tpu.matmul %129, %132, %cst_54 {dimension_numbers = #tpu.dot_dimension_numbers<[1], [0], [0], [1], [0, 0, 1, 1], [], []>} : vector<8x200xf32>, vector<200x200xf32>, vector<8x200xf32> -> vector<8x200xf32>
    %134 = arith.addf %131, %133 : vector<8x200xf32>
    %135 = vector.broadcast %5 : vector<1x200xf32> to vector<8x200xf32>
    %136 = arith.addf %134, %135 : vector<8x200xf32>
    %cst_55 = arith.constant dense<0.000000e+00> : vector<8xf32>
    %137 = vector.multi_reduction <add>, %136, %cst_55 [1] : vector<8x200xf32> to vector<8xf32>
    %138 = vector.shape_cast %137 : vector<8xf32> to vector<8x1xf32>
    %cst_56 = arith.constant 2.000000e+02 : f32
    %139 = vector.broadcast %cst_56 : f32 to vector<8x1xf32>
    %140 = arith.divf %138, %139 : vector<8x1xf32>
    %141 = vector.broadcast %140 : vector<8x1xf32> to vector<8x200xf32>
    %142 = arith.subf %136, %141 : vector<8x200xf32>
    %143 = arith.mulf %142, %142 : vector<8x200xf32>
    %cst_57 = arith.constant dense<0.000000e+00> : vector<8xf32>
    %144 = vector.multi_reduction <add>, %143, %cst_57 [1] : vector<8x200xf32> to vector<8xf32>
    %145 = vector.shape_cast %144 : vector<8xf32> to vector<8x1xf32>
    %cst_58 = arith.constant 2.000000e+02 : f32
    %146 = vector.broadcast %cst_58 : f32 to vector<8x1xf32>
    %147 = arith.divf %145, %146 : vector<8x1xf32>
    %148 = vector.broadcast %140 : vector<8x1xf32> to vector<8x200xf32>
    %149 = arith.subf %136, %148 : vector<8x200xf32>
    %cst_59 = arith.constant 9.99999974E-6 : f32
    %150 = vector.broadcast %cst_59 : f32 to vector<8x1xf32>
    %151 = arith.addf %147, %150 : vector<8x1xf32>
    %152 = math.rsqrt %151 : vector<8x1xf32>
    %153 = vector.broadcast %152 : vector<8x1xf32> to vector<8x200xf32>
    %154 = arith.mulf %149, %153 : vector<8x200xf32>
    %155 = vector.broadcast %6 : vector<1x200xf32> to vector<8x200xf32>
    %156 = arith.mulf %154, %155 : vector<8x200xf32>
    %157 = vector.broadcast %7 : vector<1x200xf32> to vector<8x200xf32>
    %158 = arith.addf %156, %157 : vector<8x200xf32>
    %cst_60 = arith.constant 0.000000e+00 : f32
    %159 = vector.broadcast %cst_60 : f32 to vector<8x200xf32>
    %160 = arith.maximumf %158, %159 : vector<8x200xf32>
    %cst_61 = arith.constant dense<0xFF800000> : vector<8xf32>
    %161 = vector.multi_reduction <maximumf>, %74, %cst_61 [1] : vector<8x256xf32> to vector<8xf32>
    %162 = vector.shape_cast %161 : vector<8xf32> to vector<8x1xf32>
    %163 = vector.broadcast %162 : vector<8x1xf32> to vector<8x256xf32>
    %164 = arith.subf %74, %163 : vector<8x256xf32>
    %165 = math.exp %164 : vector<8x256xf32>
    %cst_62 = arith.constant dense<0.000000e+00> : vector<8xf32>
    %166 = vector.multi_reduction <add>, %165, %cst_62 [1] : vector<8x256xf32> to vector<8xf32>
    %167 = vector.shape_cast %166 : vector<8xf32> to vector<8x1xf32>
    %168 = math.log %167 : vector<8x1xf32>
    %169 = arith.addf %162, %168 : vector<8x1xf32>
    %170 = vector.broadcast %169 : vector<8x1xf32> to vector<8x256xf32>
    %171 = arith.subf %74, %170 : vector<8x256xf32>
    %172 = arith.mulf %30, %171 : vector<8x256xf32>
    %cst_63 = arith.constant dense<0.000000e+00> : vector<8xf32>
    %173 = vector.multi_reduction <add>, %172, %cst_63 [1] : vector<8x256xf32> to vector<8xf32>
    %174 = vector.shape_cast %173 : vector<8xf32> to vector<8x1xf32>
    %cst_64 = arith.constant 0.000000e+00 : f32
    %175 = vector.broadcast %cst_64 : f32 to vector<8x1xf32>
    %176 = arith.subf %175, %174 : vector<8x1xf32>
    %cst_65 = arith.constant 1.000000e+00 : f32
    %177 = vector.broadcast %cst_65 : f32 to vector<8x32xf32>
    %178 = arith.addf %177, %54 : vector<8x32xf32>
    %179 = arith.mulf %50, %50 : vector<8x32xf32>
    %180 = arith.subf %178, %179 : vector<8x32xf32>
    %181 = math.exp %54 : vector<8x32xf32>
    %182 = arith.subf %180, %181 : vector<8x32xf32>
    %cst_66 = arith.constant dense<0.000000e+00> : vector<8xf32>
    %183 = vector.multi_reduction <add>, %182, %cst_66 [1] : vector<8x32xf32> to vector<8xf32>
    %184 = vector.shape_cast %183 : vector<8xf32> to vector<8x1xf32>
    %cst_67 = arith.constant -5.000000e-01 : f32
    %185 = vector.broadcast %cst_67 : f32 to vector<8x1xf32>
    %186 = arith.mulf %185, %184 : vector<8x1xf32>
    %187 = arith.addf %176, %186 : vector<8x1xf32>
    %188 = vector.shape_cast %187 : vector<8x1xf32> to vector<8x1xf32>
    %189 = vector.broadcast %188 : vector<8x1xf32> to vector<8x56xf32>
    %190 = tpu.concatenate %160, %189 in 1 : vector<8x200xf32>, vector<8x56xf32> -> vector<8x256xf32>
    %c0_68 = arith.constant 0 : index
    %c0_69 = arith.constant 0 : index
    %191 = vector.load %arg15[%c0_68, %c0_69] : memref<8x256xf32, #tpu.memory_space<vmem>>, vector<8x256xf32>
    tpu.vector_store %arg15[%c0_68, %c0_69], %190 {strides = array<i32>} : memref<8x256xf32, #tpu.memory_space<vmem>>, vector<8x256xf32>,
    return
  }
  func.func @transform_0(%arg0: i32) -> (i32, i32, i32) {
    %c0_i32 = arith.constant 0 : i32
    %c0_i32_0 = arith.constant 0 : i32
    %c0_i32_1 = arith.constant 0 : i32
    return %arg0, %c0_i32, %c0_i32_0 : i32, i32, i32
  }
  func.func @transform_1(%arg0: i32) -> (i32, i32) {
    %c0_i32 = arith.constant 0 : i32
    %c0_i32_0 = arith.constant 0 : i32
    return %arg0, %c0_i32 : i32, i32
  }
  func.func @transform_2(%arg0: i32) -> (i32, i32) {
    %c0_i32 = arith.constant 0 : i32
    %c0_i32_0 = arith.constant 0 : i32
    return %arg0, %c0_i32 : i32, i32
  }
  func.func @transform_3(%arg0: i32) -> (i32, i32) {
    %c0_i32 = arith.constant 0 : i32
    %c0_i32_0 = arith.constant 0 : i32
    return %arg0, %c0_i32 : i32, i32
  }
  func.func @transform_4(%arg0: i32) -> (i32, i32) {
    %c0_i32 = arith.constant 0 : i32
    %c0_i32_0 = arith.constant 0 : i32
    %c0_i32_1 = arith.constant 0 : i32
    return %c0_i32, %c0_i32_0 : i32, i32
  }
  func.func @transform_5(%arg0: i32) -> (i32, i32) {
    %c0_i32 = arith.constant 0 : i32
    %c0_i32_0 = arith.constant 0 : i32
    %c0_i32_1 = arith.constant 0 : i32
    return %c0_i32, %c0_i32_0 : i32, i32
  }
  func.func @transform_6(%arg0: i32) -> (i32, i32) {
    %c0_i32 = arith.constant 0 : i32
    %c0_i32_0 = arith.constant 0 : i32
    %c0_i32_1 = arith.constant 0 : i32
    return %c0_i32, %c0_i32_0 : i32, i32
  }
  func.func @transform_7(%arg0: i32) -> (i32, i32) {
    %c0_i32 = arith.constant 0 : i32
    %c0_i32_0 = arith.constant 0 : i32
    %c0_i32_1 = arith.constant 0 : i32
    return %c0_i32, %c0_i32_0 : i32, i32
  }
  func.func @transform_8(%arg0: i32) -> (i32, i32) {
    %c0_i32 = arith.constant 0 : i32
    %c0_i32_0 = arith.constant 0 : i32
    %c0_i32_1 = arith.constant 0 : i32
    return %c0_i32, %c0_i32_0 : i32, i32
  }
  func.func @transform_9(%arg0: i32) -> (i32, i32) {
    %c0_i32 = arith.constant 0 : i32
    %c0_i32_0 = arith.constant 0 : i32
    %c0_i32_1 = arith.constant 0 : i32
    return %c0_i32, %c0_i32_0 : i32, i32
  }
  func.func @transform_10(%arg0: i32) -> (i32, i32) {
    %c0_i32 = arith.constant 0 : i32
    %c0_i32_0 = arith.constant 0 : i32
    %c0_i32_1 = arith.constant 0 : i32
    return %c0_i32, %c0_i32_0 : i32, i32
  }
  func.func @transform_11(%arg0: i32) -> (i32, i32) {
    %c0_i32 = arith.constant 0 : i32
    %c0_i32_0 = arith.constant 0 : i32
    %c0_i32_1 = arith.constant 0 : i32
    return %c0_i32, %c0_i32_0 : i32, i32
  }
  func.func @transform_12(%arg0: i32) -> (i32, i32) {
    %c0_i32 = arith.constant 0 : i32
    %c0_i32_0 = arith.constant 0 : i32
    %c0_i32_1 = arith.constant 0 : i32
    return %c0_i32, %c0_i32_0 : i32, i32
  }
  func.func @transform_13(%arg0: i32) -> (i32, i32) {
    %c0_i32 = arith.constant 0 : i32
    %c0_i32_0 = arith.constant 0 : i32
    %c0_i32_1 = arith.constant 0 : i32
    return %c0_i32, %c0_i32_0 : i32, i32
  }
  func.func @transform_14(%arg0: i32) -> (i32, i32) {
    %c0_i32 = arith.constant 0 : i32
    %c0_i32_0 = arith.constant 0 : i32
    return %arg0, %c0_i32 : i32, i32
  }
}

</mosaic_0001>

<llo_original>
// kernel: tpu_custom_call.1
$region0: #{tpu_custom_call.1}
  #allocation0 [shape = 'u32[]', space=smem, size = 0x4, offset = 0x4, fixed_abs, tag = 'smem constant byte address 0x4 - core index']
  #allocation1 [shape = 'u32[144,128]{1,0:T(1,128)}', space=vmem, size = 0x12000, scoped, tag = 'internal scratch']
  %s0 = inlined_call_operand.vmem [shape: f32[16,256,200], index: 0, kind: input, shape index: {}]
  %s1 = inlined_call_operand.vmem [shape: f32[16,256], index: 1, kind: input, shape index: {}]
  %s2 = inlined_call_operand.vmem [shape: f32[16,32], index: 2, kind: input, shape index: {}]
  %s3 = inlined_call_operand.vmem [shape: f32[16,200], index: 3, kind: input, shape index: {}]
  %s4 = inlined_call_operand.vmem [shape: f32[1,200], index: 4, kind: input, shape index: {}]
  %s5 = inlined_call_operand.vmem [shape: f32[256,128], index: 5, kind: input, shape index: {}]
  %s6 = inlined_call_operand.vmem [shape: f32[128,64], index: 6, kind: input, shape index: {}]
  %s7 = inlined_call_operand.vmem [shape: f32[64,32], index: 7, kind: input, shape index: {}]
  %s8 = inlined_call_operand.vmem [shape: f32[64,32], index: 8, kind: input, shape index: {}]
  %s9 = inlined_call_operand.vmem [shape: f32[32,256], index: 9, kind: input, shape index: {}]
  %s10 = inlined_call_operand.vmem [shape: f32[32,200], index: 10, kind: input, shape index: {}]
  %s11 = inlined_call_operand.vmem [shape: f32[200,200], index: 11, kind: input, shape index: {}]
  %s12 = inlined_call_operand.vmem [shape: f32[200,200], index: 12, kind: input, shape index: {}]
  %s13 = inlined_call_operand.vmem [shape: f32[16,256], index: 13, kind: input, shape index: {}]
  %s14 = inlined_call_operand.hbm [shape: f32[16,256], index: 14, kind: output, shape index: {}]
  %s15 = sld [smem:[#allocation0]]
  $region89: #{tpu_custom_call.1} parent=0
    _
  %s17 = ssub.s32 1, %s15
  %s18 = scalar_select 0, %s17, %s15
  $region1: #{tpu_custom_call.1} parent=0
    #allocation2 [shape = 'u8[16384]{0}', space=vmem, size = 0x4000, scoped, tag = 'output window, operand 0']
    #allocation3 [shape = 's32[2]{0}', space=sflag, size = 0x8, scoped, tag = 'scoped memory for tpu_custom_call.1']
    %19 = vsyncpa [#allocation3], 0
    %s20 = scalar_lea.sflag [#allocation3], 1
    %21 = vsyncpa %s20, 0
    loop: start=0, step=1, limit=4
    $region2: #{tpu_custom_call.1} parent=1 // loop_pre_header
      _
    $region3: #{tpu_custom_call.1} parent=1 // loop_header
      %s23 = sphi 0, %s27
      %p24 = scmp.ge.s32.totalorder %s23, 4
      %s33 = sphi 0, %s35
      %s36 = sphi 0, %s33
      %s37 = sphi 0, %s36
      %s53 = sphi 0, %s37
      %s59 = sphi 0, %s61
      %s62 = sphi 0, %s59
      %s63 = sphi 0, %s62
      %s79 = sphi 0, %s63
      %s85 = sphi 0, %s87
      %s88 = sphi 0, %s85
      %s89 = sphi 0, %s88
      %s105 = sphi 0, %s89
      %s111 = sphi 0, %s113
      %s114 = sphi 0, %s111
      %s115 = sphi 0, %s114
      %s131 = sphi 0, %s115
      %s135 = sphi 0, %s135
      %s137 = sphi 0, %s135
      %s138 = sphi 0, %s137
      %s152 = sphi 0, %s138
      %s156 = sphi 0, %s156
      %s158 = sphi 0, %s156
      %s159 = sphi 0, %s158
      %s173 = sphi 0, %s159
      %s177 = sphi 0, %s177
      %s179 = sphi 0, %s177
      %s180 = sphi 0, %s179
      %s194 = sphi 0, %s180
      %s198 = sphi 0, %s198
      %s200 = sphi 0, %s198
      %s201 = sphi 0, %s200
      %s215 = sphi 0, %s201
      %s219 = sphi 0, %s219
      %s221 = sphi 0, %s219
      %s222 = sphi 0, %s221
      %s236 = sphi 0, %s222
      %s240 = sphi 0, %s240
      %s242 = sphi 0, %s240
      %s243 = sphi 0, %s242
      %s257 = sphi 0, %s243
      %s261 = sphi 0, %s261
      %s263 = sphi 0, %s261
      %s264 = sphi 0, %s263
      %s278 = sphi 0, %s264
      %s282 = sphi 0, %s282
      %s284 = sphi 0, %s282
      %s285 = sphi 0, %s284
      %s299 = sphi 0, %s285
      %s303 = sphi 0, %s303
      %s305 = sphi 0, %s303
      %s306 = sphi 0, %s305
      %s320 = sphi 0, %s306
      %s324 = sphi 0, %s324
      %s326 = sphi 0, %s324
      %s327 = sphi 0, %s326
      %s341 = sphi 0, %s327
      %s347 = sphi 0, %s349
      %s350 = sphi 0, %s347
      %s351 = sphi 0, %s350
      %s367 = sphi 0, %s351
    $region4: #{tpu_custom_call.1} parent=1 // loop_header_branch
      %26 = sbr.rel (%p24) target = $region8
    $region5: #{tpu_custom_call.1} parent=1 // loop_body
      %s28 = ssub.s32 %s23, 1
      %s29 = ssub.s32 %s23, 2
      %s30 = sadd.s32 %s23, 1
      %s31 = ssub.s32 %s23, %s30
      %p32 = scmp.eq.s32.totalorder %s31, 0
      %s34 = sadd.s32 %s33, 1
      %s35 = scalar_select %p32, %s33, %s34
      %p38 = pneg %p32
      %p39 = scmp.eq.s32.totalorder %s23, 1
      %p40 = por %p38, %p39
      %p41 = scmp.ne.s32.totalorder %s33, %s36
      %p42 = scmp.eq.s32.totalorder %s23, 0
      %p43 = por %p41, %p42
      %p44 = scmp.ne.s32.totalorder %s33, %s36
      %p45 = scmp.eq.s32.totalorder %s28, 1
      %p46 = por %p44, %p45
      %p47 = scmp.ne.s32.totalorder %s36, %s37
      %p48 = scmp.eq.s32.totalorder %s28, 0
      %p49 = por %p47, %p48
      %p50 = scmp.ne.s32.totalorder %s36, %s37
      %p51 = scmp.eq.s32.totalorder %s29, 1
      %p52 = por %p50, %p51
      %p54 = scmp.ne.s32.totalorder %s37, %s53
      %p55 = scmp.eq.s32.totalorder %s29, 0
      %p56 = por %p54, %p55
      %s57 = ssub.s32 %s23, %s30
      %p58 = scmp.eq.s32.totalorder %s57, 0
      %s60 = sadd.s32 %s59, 1
      %s61 = scalar_select %p58, %s59, %s60
      %p64 = pneg %p58
      %p65 = scmp.eq.s32.totalorder %s23, 1
      %p66 = por %p64, %p65
      %p67 = scmp.ne.s32.totalorder %s59, %s62
      %p68 = scmp.eq.s32.totalorder %s23, 0
      %p69 = por %p67, %p68
      %p70 = scmp.ne.s32.totalorder %s59, %s62
      %p71 = scmp.eq.s32.totalorder %s28, 1
      %p72 = por %p70, %p71
      %p73 = scmp.ne.s32.totalorder %s62, %s63
      %p74 = scmp.eq.s32.totalorder %s28, 0
      %p75 = por %p73, %p74
      %p76 = scmp.ne.s32.totalorder %s62, %s63
      %p77 = scmp.eq.s32.totalorder %s29, 1
      %p78 = por %p76, %p77
      %p80 = scmp.ne.s32.totalorder %s63, %s79
      %p81 = scmp.eq.s32.totalorder %s29, 0
      %p82 = por %p80, %p81
      %s83 = ssub.s32 %s23, %s30
      %p84 = scmp.eq.s32.totalorder %s83, 0
      %s86 = sadd.s32 %s85, 1
      %s87 = scalar_select %p84, %s85, %s86
      %p90 = pneg %p84
      %p91 = scmp.eq.s32.totalorder %s23, 1
      %p92 = por %p90, %p91
      %p93 = scmp.ne.s32.totalorder %s85, %s88
      %p94 = scmp.eq.s32.totalorder %s23, 0
      %p95 = por %p93, %p94
      %p96 = scmp.ne.s32.totalorder %s85, %s88
      %p97 = scmp.eq.s32.totalorder %s28, 1
      %p98 = por %p96, %p97
      %p99 = scmp.ne.s32.totalorder %s88, %s89
      %p100 = scmp.eq.s32.totalorder %s28, 0
      %p101 = por %p99, %p100
      %p102 = scmp.ne.s32.totalorder %s88, %s89
      %p103 = scmp.eq.s32.totalorder %s29, 1
      %p104 = por %p102, %p103
      %p106 = scmp.ne.s32.totalorder %s89, %s105
      %p107 = scmp.eq.s32.totalorder %s29, 0
      %p108 = por %p106, %p107
      %s109 = ssub.s32 %s23, %s30
      %p110 = scmp.eq.s32.totalorder %s109, 0
      %s112 = sadd.s32 %s111, 1
      %s113 = scalar_select %p110, %s111, %s112
      %p116 = pneg %p110
      %p117 = scmp.eq.s32.totalorder %s23, 1
      %p118 = por %p116, %p117
      %p119 = scmp.ne.s32.totalorder %s111, %s114
      %p120 = scmp.eq.s32.totalorder %s23, 0
      %p121 = por %p119, %p120
      %p122 = scmp.ne.s32.totalorder %s111, %s114
      %p123 = scmp.eq.s32.totalorder %s28, 1
      %p124 = por %p122, %p123
      %p125 = scmp.ne.s32.totalorder %s114, %s115
      %p126 = scmp.eq.s32.totalorder %s28, 0
      %p127 = por %p125, %p126
      %p128 = scmp.ne.s32.totalorder %s114, %s115
      %p129 = scmp.eq.s32.totalorder %s29, 1
      %p130 = por %p128, %p129
      %p132 = scmp.ne.s32.totalorder %s115, %s131
      %p133 = scmp.eq.s32.totalorder %s29, 0
      %p134 = por %p132, %p133
      %s136 = sadd.s32 %s135, 1
      %p139 = scmp.eq.s32.totalorder %s23, 1
      %p140 = scmp.ne.s32.totalorder %s135, %s137
      %p141 = scmp.eq.s32.totalorder %s23, 0
      %p142 = por %p140, %p141
      %p143 = scmp.ne.s32.totalorder %s135, %s137
      %p144 = scmp.eq.s32.totalorder %s28, 1
      %p145 = por %p143, %p144
      %p146 = scmp.ne.s32.totalorder %s137, %s138
      %p147 = scmp.eq.s32.totalorder %s28, 0
      %p148 = por %p146, %p147
      %p149 = scmp.ne.s32.totalorder %s137, %s138
      %p150 = scmp.eq.s32.totalorder %s29, 1
      %p151 = por %p149, %p150
      %p153 = scmp.ne.s32.totalorder %s138, %s152
      %p154 = scmp.eq.s32.totalorder %s29, 0
      %p155 = por %p153, %p154
      %s157 = sadd.s32 %s156, 1
      %p160 = scmp.eq.s32.totalorder %s23, 1
      %p161 = scmp.ne.s32.totalorder %s156, %s158
      %p162 = scmp.eq.s32.totalorder %s23, 0
      %p163 = por %p161, %p162
      %p164 = scmp.ne.s32.totalorder %s156, %s158
      %p165 = scmp.eq.s32.totalorder %s28, 1
      %p166 = por %p164, %p165
      %p167 = scmp.ne.s32.totalorder %s158, %s159
      %p168 = scmp.eq.s32.totalorder %s28, 0
      %p169 = por %p167, %p168
      %p170 = scmp.ne.s32.totalorder %s158, %s159
      %p171 = scmp.eq.s32.totalorder %s29, 1
      %p172 = por %p170, %p171
      %p174 = scmp.ne.s32.totalorder %s159, %s173
      %p175 = scmp.eq.s32.totalorder %s29, 0
      %p176 = por %p174, %p175
      %s178 = sadd.s32 %s177, 1
      %p181 = scmp.eq.s32.totalorder %s23, 1
      %p182 = scmp.ne.s32.totalorder %s177, %s179
      %p183 = scmp.eq.s32.totalorder %s23, 0
      %p184 = por %p182, %p183
      %p185 = scmp.ne.s32.totalorder %s177, %s179
      %p186 = scmp.eq.s32.totalorder %s28, 1
      %p187 = por %p185, %p186
      %p188 = scmp.ne.s32.totalorder %s179, %s180
      %p189 = scmp.eq.s32.totalorder %s28, 0
      %p190 = por %p188, %p189
      %p191 = scmp.ne.s32.totalorder %s179, %s180
      %p192 = scmp.eq.s32.totalorder %s29, 1
      %p193 = por %p191, %p192
      %p195 = scmp.ne.s32.totalorder %s180, %s194
      %p196 = scmp.eq.s32.totalorder %s29, 0
      %p197 = por %p195, %p196
      %s199 = sadd.s32 %s198, 1
      %p202 = scmp.eq.s32.totalorder %s23, 1
      %p203 = scmp.ne.s32.totalorder %s198, %s200
      %p204 = scmp.eq.s32.totalorder %s23, 0
      %p205 = por %p203, %p204
      %p206 = scmp.ne.s32.totalorder %s198, %s200
      %p207 = scmp.eq.s32.totalorder %s28, 1
      %p208 = por %p206, %p207
      %p209 = scmp.ne.s32.totalorder %s200, %s201
      %p210 = scmp.eq.s32.totalorder %s28, 0
      %p211 = por %p209, %p210
      %p212 = scmp.ne.s32.totalorder %s200, %s201
      %p213 = scmp.eq.s32.totalorder %s29, 1
      %p214 = por %p212, %p213
      %p216 = scmp.ne.s32.totalorder %s201, %s215
      %p217 = scmp.eq.s32.totalorder %s29, 0
      %p218 = por %p216, %p217
      %s220 = sadd.s32 %s219, 1
      %p223 = scmp.eq.s32.totalorder %s23, 1
      %p224 = scmp.ne.s32.totalorder %s219, %s221
      %p225 = scmp.eq.s32.totalorder %s23, 0
      %p226 = por %p224, %p225
      %p227 = scmp.ne.s32.totalorder %s219, %s221
      %p228 = scmp.eq.s32.totalorder %s28, 1
      %p229 = por %p227, %p228
      %p230 = scmp.ne.s32.totalorder %s221, %s222
      %p231 = scmp.eq.s32.totalorder %s28, 0
      %p232 = por %p230, %p231
      %p233 = scmp.ne.s32.totalorder %s221, %s222
      %p234 = scmp.eq.s32.totalorder %s29, 1
      %p235 = por %p233, %p234
      %p237 = scmp.ne.s32.totalorder %s222, %s236
      %p238 = scmp.eq.s32.totalorder %s29, 0
      %p239 = por %p237, %p238
      %s241 = sadd.s32 %s240, 1
      %p244 = scmp.eq.s32.totalorder %s23, 1
      %p245 = scmp.ne.s32.totalorder %s240, %s242
      %p246 = scmp.eq.s32.totalorder %s23, 0
      %p247 = por %p245, %p246
      %p248 = scmp.ne.s32.totalorder %s240, %s242
      %p249 = scmp.eq.s32.totalorder %s28, 1
      %p250 = por %p248, %p249
      %p251 = scmp.ne.s32.totalorder %s242, %s243
      %p252 = scmp.eq.s32.totalorder %s28, 0
      %p253 = por %p251, %p252
      %p254 = scmp.ne.s32.totalorder %s242, %s243
      %p255 = scmp.eq.s32.totalorder %s29, 1
      %p256 = por %p254, %p255
      %p258 = scmp.ne.s32.totalorder %s243, %s257
      %p259 = scmp.eq.s32.totalorder %s29, 0
      %p260 = por %p258, %p259
      %s262 = sadd.s32 %s261, 1
      %p265 = scmp.eq.s32.totalorder %s23, 1
      %p266 = scmp.ne.s32.totalorder %s261, %s263
      %p267 = scmp.eq.s32.totalorder %s23, 0
      %p268 = por %p266, %p267
      %p269 = scmp.ne.s32.totalorder %s261, %s263
      %p270 = scmp.eq.s32.totalorder %s28, 1
      %p271 = por %p269, %p270
      %p272 = scmp.ne.s32.totalorder %s263, %s264
      %p273 = scmp.eq.s32.totalorder %s28, 0
      %p274 = por %p272, %p273
      %p275 = scmp.ne.s32.totalorder %s263, %s264
      %p276 = scmp.eq.s32.totalorder %s29, 1
      %p277 = por %p275, %p276
      %p279 = scmp.ne.s32.totalorder %s264, %s278
      %p280 = scmp.eq.s32.totalorder %s29, 0
      %p281 = por %p279, %p280
      %s283 = sadd.s32 %s282, 1
      %p286 = scmp.eq.s32.totalorder %s23, 1
      %p287 = scmp.ne.s32.totalorder %s282, %s284
      %p288 = scmp.eq.s32.totalorder %s23, 0
      %p289 = por %p287, %p288
      %p290 = scmp.ne.s32.totalorder %s282, %s284
      %p291 = scmp.eq.s32.totalorder %s28, 1
      %p292 = por %p290, %p291
      %p293 = scmp.ne.s32.totalorder %s284, %s285
      %p294 = scmp.eq.s32.totalorder %s28, 0
      %p295 = por %p293, %p294
      %p296 = scmp.ne.s32.totalorder %s284, %s285
      %p297 = scmp.eq.s32.totalorder %s29, 1
      %p298 = por %p296, %p297
      %p300 = scmp.ne.s32.totalorder %s285, %s299
      %p301 = scmp.eq.s32.totalorder %s29, 0
      %p302 = por %p300, %p301
      %s304 = sadd.s32 %s303, 1
      %p307 = scmp.eq.s32.totalorder %s23, 1
      %p308 = scmp.ne.s32.totalorder %s303, %s305
      %p309 = scmp.eq.s32.totalorder %s23, 0
      %p310 = por %p308, %p309
      %p311 = scmp.ne.s32.totalorder %s303, %s305
      %p312 = scmp.eq.s32.totalorder %s28, 1
      %p313 = por %p311, %p312
      %p314 = scmp.ne.s32.totalorder %s305, %s306
      %p315 = scmp.eq.s32.totalorder %s28, 0
      %p316 = por %p314, %p315
      %p317 = scmp.ne.s32.totalorder %s305, %s306
      %p318 = scmp.eq.s32.totalorder %s29, 1
      %p319 = por %p317, %p318
      %p321 = scmp.ne.s32.totalorder %s306, %s320
      %p322 = scmp.eq.s32.totalorder %s29, 0
      %p323 = por %p321, %p322
      %s325 = sadd.s32 %s324, 1
      %p328 = scmp.eq.s32.totalorder %s23, 1
      %p329 = scmp.ne.s32.totalorder %s324, %s326
      %p330 = scmp.eq.s32.totalorder %s23, 0
      %p331 = por %p329, %p330
      %p332 = scmp.ne.s32.totalorder %s324, %s326
      %p333 = scmp.eq.s32.totalorder %s28, 1
      %p334 = por %p332, %p333
      %p335 = scmp.ne.s32.totalorder %s326, %s327
      %p336 = scmp.eq.s32.totalorder %s28, 0
      %p337 = por %p335, %p336
      %p338 = scmp.ne.s32.totalorder %s326, %s327
      %p339 = scmp.eq.s32.totalorder %s29, 1
      %p340 = por %p338, %p339
      %p342 = scmp.ne.s32.totalorder %s327, %s341
      %p343 = scmp.eq.s32.totalorder %s29, 0
      %p344 = por %p342, %p343
      %s345 = ssub.s32 %s23, %s30
      %p346 = scmp.eq.s32.totalorder %s345, 0
      %s348 = sadd.s32 %s347, 1
      %s349 = scalar_select %p346, %s347, %s348
      %p352 = pneg %p346
      %p353 = scmp.eq.s32.totalorder %s23, 1
      %p354 = por %p352, %p353
      %p355 = scmp.ne.s32.totalorder %s347, %s350
      %p356 = scmp.eq.s32.totalorder %s23, 0
      %p357 = por %p355, %p356
      %p358 = scmp.ne.s32.totalorder %s347, %s350
      %p359 = scmp.eq.s32.totalorder %s28, 1
      %p360 = por %p358, %p359
      %p361 = scmp.ne.s32.totalorder %s350, %s351
      %p362 = scmp.eq.s32.totalorder %s28, 0
      %p363 = por %p361, %p362
      %p364 = scmp.ne.s32.totalorder %s350, %s351
      %p365 = scmp.eq.s32.totalorder %s29, 1
      %p366 = por %p364, %p365
      %p368 = scmp.ne.s32.totalorder %s351, %s367
      %p369 = scmp.eq.s32.totalorder %s29, 0
      %p370 = por %p368, %p369
      %p371 = scmp.le.s32.totalorder 1, %s23
      %p372 = scmp.lt.s32.totalorder %s23, 3
      %p373 = pnand %p371, %p372
      %p374 = pneg %p373
      // Predicated region
      $region9: #{tpu_custom_call.1} parent=5 // pred_check
        _
      $region10: #{tpu_custom_call.1} parent=5 // pred_check_branch
        %376 = sbr.rel (%p373) target = $region12
      $region11: #{tpu_custom_call.1} parent=5 // pred_region
        %s377 = ssub.s32 %s23, 1
        // Predicated region
        $region13: #{tpu_custom_call.1} parent=11 // pred_check
          %p378 = pneg %p148
        $region14: #{tpu_custom_call.1} parent=11 // pred_check_branch
          %380 = sbr.rel (%p378) target = $region16
        $region15: #{tpu_custom_call.1} parent=11 // pred_region
          _
        $region16: #{tpu_custom_call.1} parent=11 // pred_fallthru
          _
        // Predicated region
        $region17: #{tpu_custom_call.1} parent=11 // pred_check
          %p381 = pneg %p169
        $region18: #{tpu_custom_call.1} parent=11 // pred_check_branch
          %383 = sbr.rel (%p381) target = $region20
        $region19: #{tpu_custom_call.1} parent=11 // pred_region
          _
        $region20: #{tpu_custom_call.1} parent=11 // pred_fallthru
          _
        // Predicated region
        $region21: #{tpu_custom_call.1} parent=11 // pred_check
          %p384 = pneg %p190
        $region22: #{tpu_custom_call.1} parent=11 // pred_check_branch
          %386 = sbr.rel (%p384) target = $region24
        $region23: #{tpu_custom_call.1} parent=11 // pred_region
          _
        $region24: #{tpu_custom_call.1} parent=11 // pred_fallthru
          _
        // Predicated region
        $region25: #{tpu_custom_call.1} parent=11 // pred_check
          %p387 = pneg %p211
        $region26: #{tpu_custom_call.1} parent=11 // pred_check_branch
          %389 = sbr.rel (%p387) target = $region28
        $region27: #{tpu_custom_call.1} parent=11 // pred_region
          _
        $region28: #{tpu_custom_call.1} parent=11 // pred_fallthru
          _
        // Predicated region
        $region29: #{tpu_custom_call.1} parent=11 // pred_check
          %p390 = pneg %p232
        $region30: #{tpu_custom_call.1} parent=11 // pred_check_branch
          %392 = sbr.rel (%p390) target = $region32
        $region31: #{tpu_custom_call.1} parent=11 // pred_region
          _
        $region32: #{tpu_custom_call.1} parent=11 // pred_fallthru
          _
        // Predicated region
        $region33: #{tpu_custom_call.1} parent=11 // pred_check
          %p393 = pneg %p253
        $region34: #{tpu_custom_call.1} parent=11 // pred_check_branch
          %395 = sbr.rel (%p393) target = $region36
        $region35: #{tpu_custom_call.1} parent=11 // pred_region
          _
        $region36: #{tpu_custom_call.1} parent=11 // pred_fallthru
          _
        // Predicated region
        $region37: #{tpu_custom_call.1} parent=11 // pred_check
          %p396 = pneg %p274
        $region38: #{tpu_custom_call.1} parent=11 // pred_check_branch
          %398 = sbr.rel (%p396) target = $region40
        $region39: #{tpu_custom_call.1} parent=11 // pred_region
          _
        $region40: #{tpu_custom_call.1} parent=11 // pred_fallthru
          _
        // Predicated region
        $region41: #{tpu_custom_call.1} parent=11 // pred_check
          %p399 = pneg %p295
        $region42: #{tpu_custom_call.1} parent=11 // pred_check_branch
          %401 = sbr.rel (%p399) target = $region44
        $region43: #{tpu_custom_call.1} parent=11 // pred_region
          _
        $region44: #{tpu_custom_call.1} parent=11 // pred_fallthru
          _
        // Predicated region
        $region45: #{tpu_custom_call.1} parent=11 // pred_check
          %p402 = pneg %p316
        $region46: #{tpu_custom_call.1} parent=11 // pred_check_branch
          %404 = sbr.rel (%p402) target = $region48
        $region47: #{tpu_custom_call.1} parent=11 // pred_region
          _
        $region48: #{tpu_custom_call.1} parent=11 // pred_fallthru
          _
        // Predicated region
        $region49: #{tpu_custom_call.1} parent=11 // pred_check
          %p405 = pneg %p337
        $region50: #{tpu_custom_call.1} parent=11 // pred_check_branch
          %407 = sbr.rel (%p405) target = $region52
        $region51: #{tpu_custom_call.1} parent=11 // pred_region
          _
        $region52: #{tpu_custom_call.1} parent=11 // pred_fallthru
          _
      $region12: #{tpu_custom_call.1} parent=5 // pred_fallthru
        _
      %p408 = scmp.lt.s32.totalorder %s23, 2
      // Predicated region
      $region53: #{tpu_custom_call.1} parent=5 // pred_check
        %p409 = pneg %p408
      $region54: #{tpu_custom_call.1} parent=5 // pred_check_branch
        %411 = sbr.rel (%p409) target = $region56
      $region55: #{tpu_custom_call.1} parent=5 // pred_region
        // Predicated region
        $region57: #{tpu_custom_call.1} parent=55 // pred_check
          %p412 = pneg %p43
        $region58: #{tpu_custom_call.1} parent=55 // pred_check_branch
          %414 = sbr.rel (%p412) target = $region60
        $region59: #{tpu_custom_call.1} parent=55 // pred_region
          %s415 = smul.u32 8, %s23
          %p416 = scmp.lt.s32.totalorder %s415, 15
          %s417 = scalar_select %p416, %s415, 15
          %s418 = smul.addr %s417, 64
          %s419 = smul.addr %s418, 8
          %s420 = scalar_lea.vmem %s0, %s419
          %s421 = smul.u32 8, %s23
        $region60: #{tpu_custom_call.1} parent=55 // pred_fallthru
          _
        // Predicated region
        $region61: #{tpu_custom_call.1} parent=55 // pred_check
          %p422 = pneg %p69
        $region62: #{tpu_custom_call.1} parent=55 // pred_check_branch
          %424 = sbr.rel (%p422) target = $region64
        $region63: #{tpu_custom_call.1} parent=55 // pred_region
          %p425 = scmp.lt.s32.totalorder %s23, 1
          %s426 = scalar_select %p425, %s23, 1
          %s427 = smul.addr %s426, 2
          %s428 = smul.addr %s427, 8
          %s429 = scalar_lea.vmem %s1, %s428
        $region64: #{tpu_custom_call.1} parent=55 // pred_fallthru
          _
        // Predicated region
        $region65: #{tpu_custom_call.1} parent=55 // pred_check
          %p430 = pneg %p95
        $region66: #{tpu_custom_call.1} parent=55 // pred_check_branch
          %432 = sbr.rel (%p430) target = $region68
        $region67: #{tpu_custom_call.1} parent=55 // pred_region
          %p433 = scmp.lt.s32.totalorder %s23, 1
          %s434 = scalar_select %p433, %s23, 1
          %s435 = smul.addr %s434, 8
          %s436 = scalar_lea.vmem %s2, %s435
        $region68: #{tpu_custom_call.1} parent=55 // pred_fallthru
          _
        // Predicated region
        $region69: #{tpu_custom_call.1} parent=55 // pred_check
          %p437 = pneg %p121
        $region70: #{tpu_custom_call.1} parent=55 // pred_check_branch
          %439 = sbr.rel (%p437) target = $region72
        $region71: #{tpu_custom_call.1} parent=55 // pred_region
          %p440 = scmp.lt.s32.totalorder %s23, 1
          %s441 = scalar_select %p440, %s23, 1
          %s442 = smul.addr %s441, 2
          %s443 = smul.addr %s442, 8
          %s444 = scalar_lea.vmem %s3, %s443
        $region72: #{tpu_custom_call.1} parent=55 // pred_fallthru
          _
      $region56: #{tpu_custom_call.1} parent=5 // pred_fallthru
        _
      %p445 = scmp.le.s32.totalorder 1, %s23
      %p446 = scmp.lt.s32.totalorder %s23, 3
      %p447 = pnand %p445, %p446
      %p448 = pneg %p447
      // Predicated region
      $region73: #{tpu_custom_call.1} parent=5 // pred_check
        _
      $region74: #{tpu_custom_call.1} parent=5 // pred_check_branch
        %450 = sbr.rel (%p447) target = $region76
      $region75: #{tpu_custom_call.1} parent=5 // pred_region
        %s451 = ssub.s32 %s23, 1
        %s452 = smul.u32 8, %s28
        %p453 = scmp.lt.s32.totalorder %s452, 15
        %s454 = scalar_select %p453, %s452, 15
        %s455 = smul.addr %s454, 64
        %s456 = smul.addr %s455, 8
        %s457 = scalar_lea.vmem %s0, %s456
        %p458 = pneg %p49
        %p459 = pneg %p46
        %p460 = scmp.lt.s32.totalorder %s28, 1
        %s461 = scalar_select %p460, %s28, 1
        %s462 = smul.addr %s461, 2
        %s463 = smul.addr %s462, 8
        %s464 = scalar_lea.vmem %s1, %s463
        %p465 = pneg %p75
        %p466 = pneg %p72
        %p467 = scmp.lt.s32.totalorder %s28, 1
        %s468 = scalar_select %p467, %s28, 1
        %s469 = smul.addr %s468, 8
        %s470 = scalar_lea.vmem %s2, %s469
        %p471 = pneg %p101
        %p472 = pneg %p98
        %p473 = scmp.lt.s32.totalorder %s28, 1
        %s474 = scalar_select %p473, %s28, 1
        %s475 = smul.addr %s474, 2
        %s476 = smul.addr %s475, 8
        %s477 = scalar_lea.vmem %s3, %s476
        %p478 = pneg %p127
        %p479 = pneg %p124
        %p480 = pneg %p148
        %p481 = pneg %p145
        %p482 = pneg %p169
        %p483 = pneg %p166
        %p484 = pneg %p190
        %p485 = pneg %p187
        %p486 = pneg %p211
        %p487 = pneg %p208
        %p488 = pneg %p232
        %p489 = pneg %p229
        %p490 = pneg %p253
        %p491 = pneg %p250
        %p492 = pneg %p274
        %p493 = pneg %p271
        %p494 = pneg %p295
        %p495 = pneg %p292
        %p496 = pneg %p316
        %p497 = pneg %p313
        %p498 = pneg %p337
        %p499 = pneg %p334
        %p500 = pneg %p363
        %p501 = pneg %p360
        %s502 = sand.u32 %s350, 1
        %s503 = scalar_lea.sflag [#allocation3], %s502
        %s504 = sand.u32 %s350, 1
        %s505 = smul.addr %s504, 16
        %s506 = scalar_lea.vmem [#allocation2], %s505
        %s507 = smul.u32 8, %s28
        %p508 = scmp.lt.s32.totalorder %s507, 15
        %s509 = scalar_select %p508, %s507, 15
        %s510 = smul.addr %s509, 64
        %s511 = smul.addr %s510, 8
        %s512 = scalar_lea.vmem %s0, %s511
        %s513 = smul.u32 8, %s28
        %p514 = scmp.lt.s32.totalorder %s28, 1
        %s515 = scalar_select %p514, %s28, 1
        %s516 = smul.addr %s515, 2
        %s517 = smul.addr %s516, 8
        %s518 = scalar_lea.vmem %s1, %s517
        %p519 = scmp.lt.s32.totalorder %s28, 1
        %s520 = scalar_select %p519, %s28, 1
        %s521 = smul.addr %s520, 8
        %s522 = scalar_lea.vmem %s2, %s521
        %p523 = scmp.lt.s32.totalorder %s28, 1
        %s524 = scalar_select %p523, %s28, 1
        %s525 = smul.addr %s524, 2
        %s526 = smul.addr %s525, 8
        %s527 = scalar_lea.vmem %s3, %s526
        %v528 = vld [vmem:[%s13] sm:$0xff]
        %v529 = vld [vmem:[%s13 + $0x8] sm:$0xff]
        %v530 = vld [vmem:[%s13 + $0x10] sm:$0xff]
        %v531 = vld [vmem:[%s512] sm:$0xff]
        %v532 = vld [vmem:[%s512 + $0x8] sm:$0xff]
        %v533 = vld [vmem:[%s512 + $0x10] sm:$0xff]
        %v534 = vld [vmem:[%s512 + $0x18] sm:$0xff]
        %v535 = vld [vmem:[%s512 + $0x20] sm:$0xff]
        %v536 = vld [vmem:[%s512 + $0x28] sm:$0xff]
        %v537 = vld [vmem:[%s512 + $0x30] sm:$0xff]
        %v538 = vld [vmem:[%s512 + $0x38] sm:$0xff]
        %v539 = vld [vmem:[%s512 + $0x40] sm:$0xff]
        %v540 = vld [vmem:[%s512 + $0x48] sm:$0xff]
        %v541 = vld [vmem:[%s512 + $0x50] sm:$0xff]
        %v542 = vld [vmem:[%s512 + $0x58] sm:$0xff]
        %v543 = vld [vmem:[%s512 + $0x60] sm:$0xff]
        %v544 = vld [vmem:[%s512 + $0x68] sm:$0xff]
        %v545 = vld [vmem:[%s512 + $0x70] sm:$0xff]
        %v546 = vld [vmem:[%s512 + $0x78] sm:$0xff]
        %v547 = vld [vmem:[%s512 + $0x80] sm:$0xff]
        %v548 = vld [vmem:[%s512 + $0x88] sm:$0xff]
        %v549 = vld [vmem:[%s512 + $0x90] sm:$0xff]
        %v550 = vld [vmem:[%s512 + $0x98] sm:$0xff]
        %v551 = vld [vmem:[%s512 + $0xa0] sm:$0xff]
        %v552 = vld [vmem:[%s512 + $0xa8] sm:$0xff]
        %v553 = vld [vmem:[%s512 + $0xb0] sm:$0xff]
        %v554 = vld [vmem:[%s512 + $0xb8] sm:$0xff]
        %v555 = vld [vmem:[%s512 + $0xc0] sm:$0xff]
        %v556 = vld [vmem:[%s512 + $0xc8] sm:$0xff]
        %v557 = vld [vmem:[%s512 + $0xd0] sm:$0xff]
        %v558 = vld [vmem:[%s512 + $0xd8] sm:$0xff]
        %v559 = vld [vmem:[%s512 + $0xe0] sm:$0xff]
        %v560 = vld [vmem:[%s512 + $0xe8] sm:$0xff]
        %v561 = vld [vmem:[%s512 + $0xf0] sm:$0xff]
        %v562 = vld [vmem:[%s512 + $0xf8] sm:$0xff]
        %v563 = vld [vmem:[%s512 + $0x100] sm:$0xff]
        %v564 = vld [vmem:[%s512 + $0x108] sm:$0xff]
        %v565 = vld [vmem:[%s512 + $0x110] sm:$0xff]
        %v566 = vld [vmem:[%s512 + $0x118] sm:$0xff]
        %v567 = vld [vmem:[%s512 + $0x120] sm:$0xff]
        %v568 = vld [vmem:[%s512 + $0x128] sm:$0xff]
        %v569 = vld [vmem:[%s512 + $0x130] sm:$0xff]
        %v570 = vld [vmem:[%s512 + $0x138] sm:$0xff]
        %v571 = vld [vmem:[%s512 + $0x140] sm:$0xff]
        %v572 = vld [vmem:[%s512 + $0x148] sm:$0xff]
        %v573 = vld [vmem:[%s512 + $0x150] sm:$0xff]
        %v574 = vld [vmem:[%s512 + $0x158] sm:$0xff]
        %v575 = vld [vmem:[%s512 + $0x160] sm:$0xff]
        %v576 = vld [vmem:[%s512 + $0x168] sm:$0xff]
        %v577 = vld [vmem:[%s512 + $0x170] sm:$0xff]
        %v578 = vld [vmem:[%s512 + $0x178] sm:$0xff]
        %v579 = vld [vmem:[%s512 + $0x180] sm:$0xff]
        %v580 = vld [vmem:[%s512 + $0x188] sm:$0xff]
        %v581 = vld [vmem:[%s512 + $0x190] sm:$0xff]
        %v582 = vld [vmem:[%s512 + $0x198] sm:$0xff]
        %v583 = vld [vmem:[%s512 + $0x1a0] sm:$0xff]
        %v584 = vld [vmem:[%s512 + $0x1a8] sm:$0xff]
        %v585 = vld [vmem:[%s512 + $0x1b0] sm:$0xff]
        %v586 = vld [vmem:[%s512 + $0x1b8] sm:$0xff]
        %v587 = vld [vmem:[%s512 + $0x1c0] sm:$0xff]
        %v588 = vld [vmem:[%s512 + $0x1c8] sm:$0xff]
        %v589 = vld [vmem:[%s512 + $0x1d0] sm:$0xff]
        %v590 = vld [vmem:[%s512 + $0x1d8] sm:$0xff]
        %v591 = vld [vmem:[%s512 + $0x1e0] sm:$0xff]
        %v592 = vld [vmem:[%s512 + $0x1e8] sm:$0xff]
        %v593 = vld [vmem:[%s512 + $0x1f0] sm:$0xff]
        %v594 = vld [vmem:[%s512 + $0x1f8] sm:$0xff]
        %v595 = vld [vmem:[%s512 + $0x200] sm:$0xff]
        %v596 = vld [vmem:[%s512 + $0x208] sm:$0xff]
        %v597 = vld [vmem:[%s512 + $0x210] sm:$0xff]
        %v598 = vld [vmem:[%s512 + $0x218] sm:$0xff]
        %v599 = vld [vmem:[%s512 + $0x220] sm:$0xff]
        %v600 = vld [vmem:[%s512 + $0x228] sm:$0xff]
        %v601 = vld [vmem:[%s512 + $0x230] sm:$0xff]
        %v602 = vld [vmem:[%s512 + $0x238] sm:$0xff]
        %v603 = vld [vmem:[%s512 + $0x240] sm:$0xff]
        %v604 = vld [vmem:[%s512 + $0x248] sm:$0xff]
        %v605 = vld [vmem:[%s512 + $0x250] sm:$0xff]
        %v606 = vld [vmem:[%s512 + $0x258] sm:$0xff]
        %v607 = vld [vmem:[%s512 + $0x260] sm:$0xff]
        %v608 = vld [vmem:[%s512 + $0x268] sm:$0xff]
        %v609 = vld [vmem:[%s512 + $0x270] sm:$0xff]
        %v610 = vld [vmem:[%s512 + $0x278] sm:$0xff]
        %v611 = vld [vmem:[%s512 + $0x280] sm:$0xff]
        %v612 = vld [vmem:[%s512 + $0x288] sm:$0xff]
        %v613 = vld [vmem:[%s512 + $0x290] sm:$0xff]
        %v614 = vld [vmem:[%s512 + $0x298] sm:$0xff]
        %v615 = vld [vmem:[%s512 + $0x2a0] sm:$0xff]
        %v616 = vld [vmem:[%s512 + $0x2a8] sm:$0xff]
        %v617 = vld [vmem:[%s512 + $0x2b0] sm:$0xff]
        %v618 = vld [vmem:[%s512 + $0x2b8] sm:$0xff]
        %v619 = vld [vmem:[%s512 + $0x2c0] sm:$0xff]
        %v620 = vld [vmem:[%s512 + $0x2c8] sm:$0xff]
        %v621 = vld [vmem:[%s512 + $0x2d0] sm:$0xff]
        %v622 = vld [vmem:[%s512 + $0x2d8] sm:$0xff]
        %v623 = vld [vmem:[%s512 + $0x2e0] sm:$0xff]
        %v624 = vld [vmem:[%s512 + $0x2e8] sm:$0xff]
        %v625 = vld [vmem:[%s512 + $0x2f0] sm:$0xff]
        %v626 = vld [vmem:[%s512 + $0x2f8] sm:$0xff]
        %v627 = vld [vmem:[%s512 + $0x300] sm:$0xff]
        %v628 = vld [vmem:[%s512 + $0x308] sm:$0xff]
        %v629 = vld [vmem:[%s512 + $0x310] sm:$0xff]
        %v630 = vld [vmem:[%s512 + $0x318] sm:$0xff]
        %v631 = vld [vmem:[%s512 + $0x320] sm:$0xff]
        %v632 = vld [vmem:[%s512 + $0x328] sm:$0xff]
        %v633 = vld [vmem:[%s512 + $0x330] sm:$0xff]
        %v634 = vld [vmem:[%s512 + $0x338] sm:$0xff]
        %v635 = vld [vmem:[%s512 + $0x340] sm:$0xff]
        %v636 = vld [vmem:[%s512 + $0x348] sm:$0xff]
        %v637 = vld [vmem:[%s512 + $0x350] sm:$0xff]
        %v638 = vld [vmem:[%s512 + $0x358] sm:$0xff]
        %v639 = vld [vmem:[%s512 + $0x360] sm:$0xff]
        %v640 = vld [vmem:[%s512 + $0x368] sm:$0xff]
        %v641 = vld [vmem:[%s512 + $0x370] sm:$0xff]
        %v642 = vld [vmem:[%s512 + $0x378] sm:$0xff]
        %v643 = vld [vmem:[%s512 + $0x380] sm:$0xff]
        %v644 = vld [vmem:[%s512 + $0x388] sm:$0xff]
        %v645 = vld [vmem:[%s512 + $0x390] sm:$0xff]
        %v646 = vld [vmem:[%s512 + $0x398] sm:$0xff]
        %v647 = vld [vmem:[%s512 + $0x3a0] sm:$0xff]
        %v648 = vld [vmem:[%s512 + $0x3a8] sm:$0xff]
        %v649 = vld [vmem:[%s512 + $0x3b0] sm:$0xff]
        %v650 = vld [vmem:[%s512 + $0x3b8] sm:$0xff]
        %v651 = vld [vmem:[%s512 + $0x3c0] sm:$0xff]
        %v652 = vld [vmem:[%s512 + $0x3c8] sm:$0xff]
        %v653 = vld [vmem:[%s512 + $0x3d0] sm:$0xff]
        %v654 = vld [vmem:[%s512 + $0x3d8] sm:$0xff]
        %v655 = vld [vmem:[%s512 + $0x3e0] sm:$0xff]
        %v656 = vld [vmem:[%s512 + $0x3e8] sm:$0xff]
        %v657 = vld [vmem:[%s512 + $0x3f0] sm:$0xff]
        %v658 = vld [vmem:[%s512 + $0x3f8] sm:$0xff]
        %v659 = vld [vmem:[%s512 + $0x400] sm:$0xff]
        %v660 = vld [vmem:[%s512 + $0x408] sm:$0xff]
        %v661 = vld [vmem:[%s512 + $0x410] sm:$0xff]
        %v662 = vld [vmem:[%s512 + $0x418] sm:$0xff]
        %v663 = vld [vmem:[%s512 + $0x420] sm:$0xff]
        %v664 = vld [vmem:[%s512 + $0x428] sm:$0xff]
        %v665 = vld [vmem:[%s512 + $0x430] sm:$0xff]
        %v666 = vld [vmem:[%s512 + $0x438] sm:$0xff]
        %v667 = vld [vmem:[%s512 + $0x440] sm:$0xff]
        %v668 = vld [vmem:[%s512 + $0x448] sm:$0xff]
        %v669 = vld [vmem:[%s512 + $0x450] sm:$0xff]
        %v670 = vld [vmem:[%s512 + $0x458] sm:$0xff]
        %v671 = vld [vmem:[%s512 + $0x460] sm:$0xff]
        %v672 = vld [vmem:[%s512 + $0x468] sm:$0xff]
        %v673 = vld [vmem:[%s512 + $0x470] sm:$0xff]
        %v674 = vld [vmem:[%s512 + $0x478] sm:$0xff]
        %v675 = vld [vmem:[%s512 + $0x480] sm:$0xff]
        %v676 = vld [vmem:[%s512 + $0x488] sm:$0xff]
        %v677 = vld [vmem:[%s512 + $0x490] sm:$0xff]
        %v678 = vld [vmem:[%s512 + $0x498] sm:$0xff]
        %v679 = vld [vmem:[%s512 + $0x4a0] sm:$0xff]
        %v680 = vld [vmem:[%s512 + $0x4a8] sm:$0xff]
        %v681 = vld [vmem:[%s512 + $0x4b0] sm:$0xff]
        %v682 = vld [vmem:[%s512 + $0x4b8] sm:$0xff]
        %v683 = vld [vmem:[%s512 + $0x4c0] sm:$0xff]
        %v684 = vld [vmem:[%s512 + $0x4c8] sm:$0xff]
        %v685 = vld [vmem:[%s512 + $0x4d0] sm:$0xff]
        %v686 = vld [vmem:[%s512 + $0x4d8] sm:$0xff]
        %v687 = vld [vmem:[%s512 + $0x4e0] sm:$0xff]
        %v688 = vld [vmem:[%s512 + $0x4e8] sm:$0xff]
        %v689 = vld [vmem:[%s512 + $0x4f0] sm:$0xff]
        %v690 = vld [vmem:[%s512 + $0x4f8] sm:$0xff]
        %v691 = vld [vmem:[%s512 + $0x500] sm:$0xff]
        %v692 = vld [vmem:[%s512 + $0x508] sm:$0xff]
        %v693 = vld [vmem:[%s512 + $0x510] sm:$0xff]
        %v694 = vld [vmem:[%s512 + $0x518] sm:$0xff]
        %v695 = vld [vmem:[%s512 + $0x520] sm:$0xff]
        %v696 = vld [vmem:[%s512 + $0x528] sm:$0xff]
        %v697 = vld [vmem:[%s512 + $0x530] sm:$0xff]
        %v698 = vld [vmem:[%s512 + $0x538] sm:$0xff]
        %v699 = vld [vmem:[%s512 + $0x540] sm:$0xff]
        %v700 = vld [vmem:[%s512 + $0x548] sm:$0xff]
        %v701 = vld [vmem:[%s512 + $0x550] sm:$0xff]
        %v702 = vld [vmem:[%s512 + $0x558] sm:$0xff]
        %v703 = vld [vmem:[%s512 + $0x560] sm:$0xff]
        %v704 = vld [vmem:[%s512 + $0x568] sm:$0xff]
        %v705 = vld [vmem:[%s512 + $0x570] sm:$0xff]
        %v706 = vld [vmem:[%s512 + $0x578] sm:$0xff]
        %v707 = vld [vmem:[%s512 + $0x580] sm:$0xff]
        %v708 = vld [vmem:[%s512 + $0x588] sm:$0xff]
        %v709 = vld [vmem:[%s512 + $0x590] sm:$0xff]
        %v710 = vld [vmem:[%s512 + $0x598] sm:$0xff]
        %v711 = vld [vmem:[%s512 + $0x5a0] sm:$0xff]
        %v712 = vld [vmem:[%s512 + $0x5a8] sm:$0xff]
        %v713 = vld [vmem:[%s512 + $0x5b0] sm:$0xff]
        %v714 = vld [vmem:[%s512 + $0x5b8] sm:$0xff]
        %v715 = vld [vmem:[%s512 + $0x5c0] sm:$0xff]
        %v716 = vld [vmem:[%s512 + $0x5c8] sm:$0xff]
        %v717 = vld [vmem:[%s512 + $0x5d0] sm:$0xff]
        %v718 = vld [vmem:[%s512 + $0x5d8] sm:$0xff]
        %v719 = vld [vmem:[%s512 + $0x5e0] sm:$0xff]
        %v720 = vld [vmem:[%s512 + $0x5e8] sm:$0xff]
        %v721 = vld [vmem:[%s512 + $0x5f0] sm:$0xff]
        %v722 = vld [vmem:[%s512 + $0x5f8] sm:$0xff]
        %v723 = vld [vmem:[%s512 + $0x600] sm:$0xff]
        %v724 = vld [vmem:[%s512 + $0x608] sm:$0xff]
        %v725 = vld [vmem:[%s512 + $0x610] sm:$0xff]
        %v726 = vld [vmem:[%s512 + $0x618] sm:$0xff]
        %v727 = vld [vmem:[%s512 + $0x620] sm:$0xff]
        %v728 = vld [vmem:[%s512 + $0x628] sm:$0xff]
        %v729 = vld [vmem:[%s512 + $0x630] sm:$0xff]
        %v730 = vld [vmem:[%s512 + $0x638] sm:$0xff]
        %v731 = vld [vmem:[%s512 + $0x640] sm:$0xff]
        %v732 = vld [vmem:[%s512 + $0x648] sm:$0xff]
        %v733 = vld [vmem:[%s512 + $0x650] sm:$0xff]
        %v734 = vld [vmem:[%s512 + $0x658] sm:$0xff]
        %v735 = vld [vmem:[%s512 + $0x660] sm:$0xff]
        %v736 = vld [vmem:[%s512 + $0x668] sm:$0xff]
        %v737 = vld [vmem:[%s512 + $0x670] sm:$0xff]
        %v738 = vld [vmem:[%s512 + $0x678] sm:$0xff]
        %v739 = vld [vmem:[%s512 + $0x680] sm:$0xff]
        %v740 = vld [vmem:[%s512 + $0x688] sm:$0xff]
        %v741 = vld [vmem:[%s512 + $0x690] sm:$0xff]
        %v742 = vld [vmem:[%s512 + $0x698] sm:$0xff]
        %v743 = vld [vmem:[%s512 + $0x6a0] sm:$0xff]
        %v744 = vld [vmem:[%s512 + $0x6a8] sm:$0xff]
        %v745 = vld [vmem:[%s512 + $0x6b0] sm:$0xff]
        %v746 = vld [vmem:[%s512 + $0x6b8] sm:$0xff]
        %v747 = vld [vmem:[%s512 + $0x6c0] sm:$0xff]
        %v748 = vld [vmem:[%s512 + $0x6c8] sm:$0xff]
        %v749 = vld [vmem:[%s512 + $0x6d0] sm:$0xff]
        %v750 = vld [vmem:[%s512 + $0x6d8] sm:$0xff]
        %v751 = vld [vmem:[%s512 + $0x6e0] sm:$0xff]
        %v752 = vld [vmem:[%s512 + $0x6e8] sm:$0xff]
        %v753 = vld [vmem:[%s512 + $0x6f0] sm:$0xff]
        %v754 = vld [vmem:[%s512 + $0x6f8] sm:$0xff]
        %v755 = vld [vmem:[%s512 + $0x700] sm:$0xff]
        %v756 = vld [vmem:[%s512 + $0x708] sm:$0xff]
        %v757 = vld [vmem:[%s512 + $0x710] sm:$0xff]
        %v758 = vld [vmem:[%s512 + $0x718] sm:$0xff]
        %v759 = vld [vmem:[%s512 + $0x720] sm:$0xff]
        %v760 = vld [vmem:[%s512 + $0x728] sm:$0xff]
        %v761 = vld [vmem:[%s512 + $0x730] sm:$0xff]
        %v762 = vld [vmem:[%s512 + $0x738] sm:$0xff]
        %v763 = vld [vmem:[%s512 + $0x740] sm:$0xff]
        %v764 = vld [vmem:[%s512 + $0x748] sm:$0xff]
        %v765 = vld [vmem:[%s512 + $0x750] sm:$0xff]
        %v766 = vld [vmem:[%s512 + $0x758] sm:$0xff]
        %v767 = vld [vmem:[%s512 + $0x760] sm:$0xff]
        %v768 = vld [vmem:[%s512 + $0x768] sm:$0xff]
        %v769 = vld [vmem:[%s512 + $0x770] sm:$0xff]
        %v770 = vld [vmem:[%s512 + $0x778] sm:$0xff]
        %v771 = vld [vmem:[%s512 + $0x780] sm:$0xff]
        %v772 = vld [vmem:[%s512 + $0x788] sm:$0xff]
        %v773 = vld [vmem:[%s512 + $0x790] sm:$0xff]
        %v774 = vld [vmem:[%s512 + $0x798] sm:$0xff]
        %v775 = vld [vmem:[%s512 + $0x7a0] sm:$0xff]
        %v776 = vld [vmem:[%s512 + $0x7a8] sm:$0xff]
        %v777 = vld [vmem:[%s512 + $0x7b0] sm:$0xff]
        %v778 = vld [vmem:[%s512 + $0x7b8] sm:$0xff]
        %v779 = vld [vmem:[%s512 + $0x7c0] sm:$0xff]
        %v780 = vld [vmem:[%s512 + $0x7c8] sm:$0xff]
        %v781 = vld [vmem:[%s512 + $0x7d0] sm:$0xff]
        %v782 = vld [vmem:[%s512 + $0x7d8] sm:$0xff]
        %v783 = vld [vmem:[%s512 + $0x7e0] sm:$0xff]
        %v784 = vld [vmem:[%s512 + $0x7e8] sm:$0xff]
        %v785 = vld [vmem:[%s512 + $0x7f0] sm:$0xff]
        %v786 = vld [vmem:[%s512 + $0x7f8] sm:$0xff]
        %v787 = vld [vmem:[%s512 + $0x800] sm:$0xff]
        %v788 = vld [vmem:[%s512 + $0x808] sm:$0xff]
        %v789 = vld [vmem:[%s512 + $0x810] sm:$0xff]
        %v790 = vld [vmem:[%s512 + $0x818] sm:$0xff]
        %v791 = vld [vmem:[%s512 + $0x820] sm:$0xff]
        %v792 = vld [vmem:[%s512 + $0x828] sm:$0xff]
        %v793 = vld [vmem:[%s512 + $0x830] sm:$0xff]
        %v794 = vld [vmem:[%s512 + $0x838] sm:$0xff]
        %v795 = vld [vmem:[%s512 + $0x840] sm:$0xff]
        %v796 = vld [vmem:[%s512 + $0x848] sm:$0xff]
        %v797 = vld [vmem:[%s512 + $0x850] sm:$0xff]
        %v798 = vld [vmem:[%s512 + $0x858] sm:$0xff]
        %v799 = vld [vmem:[%s512 + $0x860] sm:$0xff]
        %v800 = vld [vmem:[%s512 + $0x868] sm:$0xff]
        %v801 = vld [vmem:[%s512 + $0x870] sm:$0xff]
        %v802 = vld [vmem:[%s512 + $0x878] sm:$0xff]
        %v803 = vld [vmem:[%s512 + $0x880] sm:$0xff]
        %v804 = vld [vmem:[%s512 + $0x888] sm:$0xff]
        %v805 = vld [vmem:[%s512 + $0x890] sm:$0xff]
        %v806 = vld [vmem:[%s512 + $0x898] sm:$0xff]
        %v807 = vld [vmem:[%s512 + $0x8a0] sm:$0xff]
        %v808 = vld [vmem:[%s512 + $0x8a8] sm:$0xff]
        %v809 = vld [vmem:[%s512 + $0x8b0] sm:$0xff]
        %v810 = vld [vmem:[%s512 + $0x8b8] sm:$0xff]
        %v811 = vld [vmem:[%s512 + $0x8c0] sm:$0xff]
        %v812 = vld [vmem:[%s512 + $0x8c8] sm:$0xff]
        %v813 = vld [vmem:[%s512 + $0x8d0] sm:$0xff]
        %v814 = vld [vmem:[%s512 + $0x8d8] sm:$0xff]
        %v815 = vld [vmem:[%s512 + $0x8e0] sm:$0xff]
        %v816 = vld [vmem:[%s512 + $0x8e8] sm:$0xff]
        %v817 = vld [vmem:[%s512 + $0x8f0] sm:$0xff]
        %v818 = vld [vmem:[%s512 + $0x8f8] sm:$0xff]
        %v819 = vld [vmem:[%s512 + $0x900] sm:$0xff]
        %v820 = vld [vmem:[%s512 + $0x908] sm:$0xff]
        %v821 = vld [vmem:[%s512 + $0x910] sm:$0xff]
        %v822 = vld [vmem:[%s512 + $0x918] sm:$0xff]
        %v823 = vld [vmem:[%s512 + $0x920] sm:$0xff]
        %v824 = vld [vmem:[%s512 + $0x928] sm:$0xff]
        %v825 = vld [vmem:[%s512 + $0x930] sm:$0xff]
        %v826 = vld [vmem:[%s512 + $0x938] sm:$0xff]
        %v827 = vld [vmem:[%s512 + $0x940] sm:$0xff]
        %v828 = vld [vmem:[%s512 + $0x948] sm:$0xff]
        %v829 = vld [vmem:[%s512 + $0x950] sm:$0xff]
        %v830 = vld [vmem:[%s512 + $0x958] sm:$0xff]
        %v831 = vld [vmem:[%s512 + $0x960] sm:$0xff]
        %v832 = vld [vmem:[%s512 + $0x968] sm:$0xff]
        %v833 = vld [vmem:[%s512 + $0x970] sm:$0xff]
        %v834 = vld [vmem:[%s512 + $0x978] sm:$0xff]
        %v835 = vld [vmem:[%s512 + $0x980] sm:$0xff]
        %v836 = vld [vmem:[%s512 + $0x988] sm:$0xff]
        %v837 = vld [vmem:[%s512 + $0x990] sm:$0xff]
        %v838 = vld [vmem:[%s512 + $0x998] sm:$0xff]
        %v839 = vld [vmem:[%s512 + $0x9a0] sm:$0xff]
        %v840 = vld [vmem:[%s512 + $0x9a8] sm:$0xff]
        %v841 = vld [vmem:[%s512 + $0x9b0] sm:$0xff]
        %v842 = vld [vmem:[%s512 + $0x9b8] sm:$0xff]
        %v843 = vld [vmem:[%s512 + $0x9c0] sm:$0xff]
        %v844 = vld [vmem:[%s512 + $0x9c8] sm:$0xff]
        %v845 = vld [vmem:[%s512 + $0x9d0] sm:$0xff]
        %v846 = vld [vmem:[%s512 + $0x9d8] sm:$0xff]
        %v847 = vld [vmem:[%s512 + $0x9e0] sm:$0xff]
        %v848 = vld [vmem:[%s512 + $0x9e8] sm:$0xff]
        %v849 = vld [vmem:[%s512 + $0x9f0] sm:$0xff]
        %v850 = vld [vmem:[%s512 + $0x9f8] sm:$0xff]
        %v851 = vld [vmem:[%s512 + $0xa00] sm:$0xff]
        %v852 = vld [vmem:[%s512 + $0xa08] sm:$0xff]
        %v853 = vld [vmem:[%s512 + $0xa10] sm:$0xff]
        %v854 = vld [vmem:[%s512 + $0xa18] sm:$0xff]
        %v855 = vld [vmem:[%s512 + $0xa20] sm:$0xff]
        %v856 = vld [vmem:[%s512 + $0xa28] sm:$0xff]
        %v857 = vld [vmem:[%s512 + $0xa30] sm:$0xff]
        %v858 = vld [vmem:[%s512 + $0xa38] sm:$0xff]
        %v859 = vld [vmem:[%s512 + $0xa40] sm:$0xff]
        %v860 = vld [vmem:[%s512 + $0xa48] sm:$0xff]
        %v861 = vld [vmem:[%s512 + $0xa50] sm:$0xff]
        %v862 = vld [vmem:[%s512 + $0xa58] sm:$0xff]
        %v863 = vld [vmem:[%s512 + $0xa60] sm:$0xff]
        %v864 = vld [vmem:[%s512 + $0xa68] sm:$0xff]
        %v865 = vld [vmem:[%s512 + $0xa70] sm:$0xff]
        %v866 = vld [vmem:[%s512 + $0xa78] sm:$0xff]
        %v867 = vld [vmem:[%s512 + $0xa80] sm:$0xff]
        %v868 = vld [vmem:[%s512 + $0xa88] sm:$0xff]
        %v869 = vld [vmem:[%s512 + $0xa90] sm:$0xff]
        %v870 = vld [vmem:[%s512 + $0xa98] sm:$0xff]
        %v871 = vld [vmem:[%s512 + $0xaa0] sm:$0xff]
        %v872 = vld [vmem:[%s512 + $0xaa8] sm:$0xff]
        %v873 = vld [vmem:[%s512 + $0xab0] sm:$0xff]
        %v874 = vld [vmem:[%s512 + $0xab8] sm:$0xff]
        %v875 = vld [vmem:[%s512 + $0xac0] sm:$0xff]
        %v876 = vld [vmem:[%s512 + $0xac8] sm:$0xff]
        %v877 = vld [vmem:[%s512 + $0xad0] sm:$0xff]
        %v878 = vld [vmem:[%s512 + $0xad8] sm:$0xff]
        %v879 = vld [vmem:[%s512 + $0xae0] sm:$0xff]
        %v880 = vld [vmem:[%s512 + $0xae8] sm:$0xff]
        %v881 = vld [vmem:[%s512 + $0xaf0] sm:$0xff]
        %v882 = vld [vmem:[%s512 + $0xaf8] sm:$0xff]
        %v883 = vld [vmem:[%s512 + $0xb00] sm:$0xff]
        %v884 = vld [vmem:[%s512 + $0xb08] sm:$0xff]
        %v885 = vld [vmem:[%s512 + $0xb10] sm:$0xff]
        %v886 = vld [vmem:[%s512 + $0xb18] sm:$0xff]
        %v887 = vld [vmem:[%s512 + $0xb20] sm:$0xff]
        %v888 = vld [vmem:[%s512 + $0xb28] sm:$0xff]
        %v889 = vld [vmem:[%s512 + $0xb30] sm:$0xff]
        %v890 = vld [vmem:[%s512 + $0xb38] sm:$0xff]
        %v891 = vld [vmem:[%s512 + $0xb40] sm:$0xff]
        %v892 = vld [vmem:[%s512 + $0xb48] sm:$0xff]
        %v893 = vld [vmem:[%s512 + $0xb50] sm:$0xff]
        %v894 = vld [vmem:[%s512 + $0xb58] sm:$0xff]
        %v895 = vld [vmem:[%s512 + $0xb60] sm:$0xff]
        %v896 = vld [vmem:[%s512 + $0xb68] sm:$0xff]
        %v897 = vld [vmem:[%s512 + $0xb70] sm:$0xff]
        %v898 = vld [vmem:[%s512 + $0xb78] sm:$0xff]
        %v899 = vld [vmem:[%s512 + $0xb80] sm:$0xff]
        %v900 = vld [vmem:[%s512 + $0xb88] sm:$0xff]
        %v901 = vld [vmem:[%s512 + $0xb90] sm:$0xff]
        %v902 = vld [vmem:[%s512 + $0xb98] sm:$0xff]
        %v903 = vld [vmem:[%s512 + $0xba0] sm:$0xff]
        %v904 = vld [vmem:[%s512 + $0xba8] sm:$0xff]
        %v905 = vld [vmem:[%s512 + $0xbb0] sm:$0xff]
        %v906 = vld [vmem:[%s512 + $0xbb8] sm:$0xff]
        %v907 = vld [vmem:[%s512 + $0xbc0] sm:$0xff]
        %v908 = vld [vmem:[%s512 + $0xbc8] sm:$0xff]
        %v909 = vld [vmem:[%s512 + $0xbd0] sm:$0xff]
        %v910 = vld [vmem:[%s512 + $0xbd8] sm:$0xff]
        %v911 = vld [vmem:[%s512 + $0xbe0] sm:$0xff]
        %v912 = vld [vmem:[%s512 + $0xbe8] sm:$0xff]
        %v913 = vld [vmem:[%s512 + $0xbf0] sm:$0xff]
        %v914 = vld [vmem:[%s512 + $0xbf8] sm:$0xff]
        %v915 = vld [vmem:[%s512 + $0xc00] sm:$0xff]
        %v916 = vld [vmem:[%s512 + $0xc08] sm:$0xff]
        %v917 = vld [vmem:[%s512 + $0xc10] sm:$0xff]
        %v918 = vld [vmem:[%s512 + $0xc18] sm:$0xff]
        %v919 = vld [vmem:[%s512 + $0xc20] sm:$0xff]
        %v920 = vld [vmem:[%s512 + $0xc28] sm:$0xff]
        %v921 = vld [vmem:[%s512 + $0xc30] sm:$0xff]
        %v922 = vld [vmem:[%s512 + $0xc38] sm:$0xff]
        %v923 = vld [vmem:[%s512 + $0xc40] sm:$0xff]
        %v924 = vld [vmem:[%s512 + $0xc48] sm:$0xff]
        %v925 = vld [vmem:[%s512 + $0xc50] sm:$0xff]
        %v926 = vld [vmem:[%s512 + $0xc58] sm:$0xff]
        %v927 = vld [vmem:[%s512 + $0xc60] sm:$0xff]
        %v928 = vld [vmem:[%s512 + $0xc68] sm:$0xff]
        %v929 = vld [vmem:[%s512 + $0xc70] sm:$0xff]
        %v930 = vld [vmem:[%s512 + $0xc78] sm:$0xff]
        %v931 = vld [vmem:[%s512 + $0xc80] sm:$0xff]
        %v932 = vld [vmem:[%s512 + $0xc88] sm:$0xff]
        %v933 = vld [vmem:[%s512 + $0xc90] sm:$0xff]
        %v934 = vld [vmem:[%s512 + $0xc98] sm:$0xff]
        %v935 = vld [vmem:[%s512 + $0xca0] sm:$0xff]
        %v936 = vld [vmem:[%s512 + $0xca8] sm:$0xff]
        %v937 = vld [vmem:[%s512 + $0xcb0] sm:$0xff]
        %v938 = vld [vmem:[%s512 + $0xcb8] sm:$0xff]
        %v939 = vld [vmem:[%s512 + $0xcc0] sm:$0xff]
        %v940 = vld [vmem:[%s512 + $0xcc8] sm:$0xff]
        %v941 = vld [vmem:[%s512 + $0xcd0] sm:$0xff]
        %v942 = vld [vmem:[%s512 + $0xcd8] sm:$0xff]
        %v943 = vld [vmem:[%s512 + $0xce0] sm:$0xff]
        %v944 = vld [vmem:[%s512 + $0xce8] sm:$0xff]
        %v945 = vld [vmem:[%s512 + $0xcf0] sm:$0xff]
        %v946 = vld [vmem:[%s512 + $0xcf8] sm:$0xff]
        %v947 = vld [vmem:[%s512 + $0xd00] sm:$0xff]
        %v948 = vld [vmem:[%s512 + $0xd08] sm:$0xff]
        %v949 = vld [vmem:[%s512 + $0xd10] sm:$0xff]
        %v950 = vld [vmem:[%s512 + $0xd18] sm:$0xff]
        %v951 = vld [vmem:[%s512 + $0xd20] sm:$0xff]
        %v952 = vld [vmem:[%s512 + $0xd28] sm:$0xff]
        %v953 = vld [vmem:[%s512 + $0xd30] sm:$0xff]
        %v954 = vld [vmem:[%s512 + $0xd38] sm:$0xff]
        %v955 = vld [vmem:[%s512 + $0xd40] sm:$0xff]
        %v956 = vld [vmem:[%s512 + $0xd48] sm:$0xff]
        %v957 = vld [vmem:[%s512 + $0xd50] sm:$0xff]
        %v958 = vld [vmem:[%s512 + $0xd58] sm:$0xff]
        %v959 = vld [vmem:[%s512 + $0xd60] sm:$0xff]
        %v960 = vld [vmem:[%s512 + $0xd68] sm:$0xff]
        %v961 = vld [vmem:[%s512 + $0xd70] sm:$0xff]
        %v962 = vld [vmem:[%s512 + $0xd78] sm:$0xff]
        %v963 = vld [vmem:[%s512 + $0xd80] sm:$0xff]
        %v964 = vld [vmem:[%s512 + $0xd88] sm:$0xff]
        %v965 = vld [vmem:[%s512 + $0xd90] sm:$0xff]
        %v966 = vld [vmem:[%s512 + $0xd98] sm:$0xff]
        %v967 = vld [vmem:[%s512 + $0xda0] sm:$0xff]
        %v968 = vld [vmem:[%s512 + $0xda8] sm:$0xff]
        %v969 = vld [vmem:[%s512 + $0xdb0] sm:$0xff]
        %v970 = vld [vmem:[%s512 + $0xdb8] sm:$0xff]
        %v971 = vld [vmem:[%s512 + $0xdc0] sm:$0xff]
        %v972 = vld [vmem:[%s512 + $0xdc8] sm:$0xff]
        %v973 = vld [vmem:[%s512 + $0xdd0] sm:$0xff]
        %v974 = vld [vmem:[%s512 + $0xdd8] sm:$0xff]
        %v975 = vld [vmem:[%s512 + $0xde0] sm:$0xff]
        %v976 = vld [vmem:[%s512 + $0xde8] sm:$0xff]
        %v977 = vld [vmem:[%s512 + $0xdf0] sm:$0xff]
        %v978 = vld [vmem:[%s512 + $0xdf8] sm:$0xff]
        %v979 = vld [vmem:[%s512 + $0xe00] sm:$0xff]
        %v980 = vld [vmem:[%s512 + $0xe08] sm:$0xff]
        %v981 = vld [vmem:[%s512 + $0xe10] sm:$0xff]
        %v982 = vld [vmem:[%s512 + $0xe18] sm:$0xff]
        %v983 = vld [vmem:[%s512 + $0xe20] sm:$0xff]
        %v984 = vld [vmem:[%s512 + $0xe28] sm:$0xff]
        %v985 = vld [vmem:[%s512 + $0xe30] sm:$0xff]
        %v986 = vld [vmem:[%s512 + $0xe38] sm:$0xff]
        %v987 = vld [vmem:[%s512 + $0xe40] sm:$0xff]
        %v988 = vld [vmem:[%s512 + $0xe48] sm:$0xff]
        %v989 = vld [vmem:[%s512 + $0xe50] sm:$0xff]
        %v990 = vld [vmem:[%s512 + $0xe58] sm:$0xff]
        %v991 = vld [vmem:[%s512 + $0xe60] sm:$0xff]
        %v992 = vld [vmem:[%s512 + $0xe68] sm:$0xff]
        %v993 = vld [vmem:[%s512 + $0xe70] sm:$0xff]
        %v994 = vld [vmem:[%s512 + $0xe78] sm:$0xff]
        %v995 = vld [vmem:[%s512 + $0xe80] sm:$0xff]
        %v996 = vld [vmem:[%s512 + $0xe88] sm:$0xff]
        %v997 = vld [vmem:[%s512 + $0xe90] sm:$0xff]
        %v998 = vld [vmem:[%s512 + $0xe98] sm:$0xff]
        %v999 = vld [vmem:[%s512 + $0xea0] sm:$0xff]
        %v1000 = vld [vmem:[%s512 + $0xea8] sm:$0xff]
        %v1001 = vld [vmem:[%s512 + $0xeb0] sm:$0xff]
        %v1002 = vld [vmem:[%s512 + $0xeb8] sm:$0xff]
        %v1003 = vld [vmem:[%s512 + $0xec0] sm:$0xff]
        %v1004 = vld [vmem:[%s512 + $0xec8] sm:$0xff]
        %v1005 = vld [vmem:[%s512 + $0xed0] sm:$0xff]
        %v1006 = vld [vmem:[%s512 + $0xed8] sm:$0xff]
        %v1007 = vld [vmem:[%s512 + $0xee0] sm:$0xff]
        %v1008 = vld [vmem:[%s512 + $0xee8] sm:$0xff]
        %v1009 = vld [vmem:[%s512 + $0xef0] sm:$0xff]
        %v1010 = vld [vmem:[%s512 + $0xef8] sm:$0xff]
        %v1011 = vld [vmem:[%s512 + $0xf00] sm:$0xff]
        %v1012 = vld [vmem:[%s512 + $0xf08] sm:$0xff]
        %v1013 = vld [vmem:[%s512 + $0xf10] sm:$0xff]
        %v1014 = vld [vmem:[%s512 + $0xf18] sm:$0xff]
        %v1015 = vld [vmem:[%s512 + $0xf20] sm:$0xff]
        %v1016 = vld [vmem:[%s512 + $0xf28] sm:$0xff]
        %v1017 = vld [vmem:[%s512 + $0xf30] sm:$0xff]
        %v1018 = vld [vmem:[%s512 + $0xf38] sm:$0xff]
        %v1019 = vld [vmem:[%s512 + $0xf40] sm:$0xff]
        %v1020 = vld [vmem:[%s512 + $0xf48] sm:$0xff]
        %v1021 = vld [vmem:[%s512 + $0xf50] sm:$0xff]
        %v1022 = vld [vmem:[%s512 + $0xf58] sm:$0xff]
        %v1023 = vld [vmem:[%s512 + $0xf60] sm:$0xff]
        %v1024 = vld [vmem:[%s512 + $0xf68] sm:$0xff]
        %v1025 = vld [vmem:[%s512 + $0xf70] sm:$0xff]
        %v1026 = vld [vmem:[%s512 + $0xf78] sm:$0xff]
        %v1027 = vld [vmem:[%s512 + $0xf80] sm:$0xff]
        %v1028 = vld [vmem:[%s512 + $0xf88] sm:$0xff]
        %v1029 = vld [vmem:[%s512 + $0xf90] sm:$0xff]
        %v1030 = vld [vmem:[%s512 + $0xf98] sm:$0xff]
        %v1031 = vld [vmem:[%s512 + $0xfa0] sm:$0xff]
        %v1032 = vld [vmem:[%s512 + $0xfa8] sm:$0xff]
        %v1033 = vld [vmem:[%s512 + $0xfb0] sm:$0xff]
        %v1034 = vld [vmem:[%s512 + $0xfb8] sm:$0xff]
        %v1035 = vld [vmem:[%s512 + $0xfc0] sm:$0xff]
        %v1036 = vld [vmem:[%s512 + $0xfc8] sm:$0xff]
        %v1037 = vld [vmem:[%s512 + $0xfd0] sm:$0xff]
        %v1038 = vld [vmem:[%s512 + $0xfd8] sm:$0xff]
        %v1039 = vld [vmem:[%s512 + $0xfe0] sm:$0xff]
        %v1040 = vld [vmem:[%s512 + $0xfe8] sm:$0xff]
        %v1041 = vld [vmem:[%s512 + $0xff0] sm:$0xff]
        %v1042 = vld [vmem:[%s512 + $0xff8] sm:$0xff]
        %v1043 = vld [vmem:[%s4] sm:$0x3]
        %v1045 = vlaneseq
        %v1046 = vshrl.u32 %v1045, 7
        %v1047 = vsub.s32 0, %v1046
        %v1048 = vrot.slane %v1043, %v1047
        %v1049 = vlaneseq
        %v1050 = vshrl.u32 %v1049, 7
        %v1051 = vsub.s32 1, %v1050
        %v1052 = vrot.slane %v1043, %v1051
        %v1055 = vmul.f32 %v531, %v1048
        %v1056 = vmul.f32 %v532, %v1052
        %v1057 = vmul.f32 %v533, %v1048
        %v1058 = vmul.f32 %v534, %v1052
        %v1059 = vmul.f32 %v535, %v1048
        %v1060 = vmul.f32 %v536, %v1052
        %v1061 = vmul.f32 %v537, %v1048
        %v1062 = vmul.f32 %v538, %v1052
        %v1063 = vmul.f32 %v539, %v1048
        %v1064 = vmul.f32 %v540, %v1052
        %v1065 = vmul.f32 %v541, %v1048
        %v1066 = vmul.f32 %v542, %v1052
        %v1067 = vmul.f32 %v543, %v1048
        %v1068 = vmul.f32 %v544, %v1052
        %v1069 = vmul.f32 %v545, %v1048
        %v1070 = vmul.f32 %v546, %v1052
        %v1071 = vmul.f32 %v547, %v1048
        %v1072 = vmul.f32 %v548, %v1052
        %v1073 = vmul.f32 %v549, %v1048
        %v1074 = vmul.f32 %v550, %v1052
        %v1075 = vmul.f32 %v551, %v1048
        %v1076 = vmul.f32 %v552, %v1052
        %v1077 = vmul.f32 %v553, %v1048
        %v1078 = vmul.f32 %v554, %v1052
        %v1079 = vmul.f32 %v555, %v1048
        %v1080 = vmul.f32 %v556, %v1052
        %v1081 = vmul.f32 %v557, %v1048
        %v1082 = vmul.f32 %v558, %v1052
        %v1083 = vmul.f32 %v559, %v1048
        %v1084 = vmul.f32 %v560, %v1052
        %v1085 = vmul.f32 %v561, %v1048
        %v1086 = vmul.f32 %v562, %v1052
        %v1087 = vmul.f32 %v563, %v1048
        %v1088 = vmul.f32 %v564, %v1052
        %v1089 = vmul.f32 %v565, %v1048
        %v1090 = vmul.f32 %v566, %v1052
        %v1091 = vmul.f32 %v567, %v1048
        %v1092 = vmul.f32 %v568, %v1052
        %v1093 = vmul.f32 %v569, %v1048
        %v1094 = vmul.f32 %v570, %v1052
        %v1095 = vmul.f32 %v571, %v1048
        %v1096 = vmul.f32 %v572, %v1052
        %v1097 = vmul.f32 %v573, %v1048
        %v1098 = vmul.f32 %v574, %v1052
        %v1099 = vmul.f32 %v575, %v1048
        %v1100 = vmul.f32 %v576, %v1052
        %v1101 = vmul.f32 %v577, %v1048
        %v1102 = vmul.f32 %v578, %v1052
        %v1103 = vmul.f32 %v579, %v1048
        %v1104 = vmul.f32 %v580, %v1052
        %v1105 = vmul.f32 %v581, %v1048
        %v1106 = vmul.f32 %v582, %v1052
        %v1107 = vmul.f32 %v583, %v1048
        %v1108 = vmul.f32 %v584, %v1052
        %v1109 = vmul.f32 %v585, %v1048
        %v1110 = vmul.f32 %v586, %v1052
        %v1111 = vmul.f32 %v587, %v1048
        %v1112 = vmul.f32 %v588, %v1052
        %v1113 = vmul.f32 %v589, %v1048
        %v1114 = vmul.f32 %v590, %v1052
        %v1115 = vmul.f32 %v591, %v1048
        %v1116 = vmul.f32 %v592, %v1052
        %v1117 = vmul.f32 %v593, %v1048
        %v1118 = vmul.f32 %v594, %v1052
        %v1119 = vmul.f32 %v595, %v1048
        %v1120 = vmul.f32 %v596, %v1052
        %v1121 = vmul.f32 %v597, %v1048
        %v1122 = vmul.f32 %v598, %v1052
        %v1123 = vmul.f32 %v599, %v1048
        %v1124 = vmul.f32 %v600, %v1052
        %v1125 = vmul.f32 %v601, %v1048
        %v1126 = vmul.f32 %v602, %v1052
        %v1127 = vmul.f32 %v603, %v1048
        %v1128 = vmul.f32 %v604, %v1052
        %v1129 = vmul.f32 %v605, %v1048
        %v1130 = vmul.f32 %v606, %v1052
        %v1131 = vmul.f32 %v607, %v1048
        %v1132 = vmul.f32 %v608, %v1052
        %v1133 = vmul.f32 %v609, %v1048
        %v1134 = vmul.f32 %v610, %v1052
        %v1135 = vmul.f32 %v611, %v1048
        %v1136 = vmul.f32 %v612, %v1052
        %v1137 = vmul.f32 %v613, %v1048
        %v1138 = vmul.f32 %v614, %v1052
        %v1139 = vmul.f32 %v615, %v1048
        %v1140 = vmul.f32 %v616, %v1052
        %v1141 = vmul.f32 %v617, %v1048
        %v1142 = vmul.f32 %v618, %v1052
        %v1143 = vmul.f32 %v619, %v1048
        %v1144 = vmul.f32 %v620, %v1052
        %v1145 = vmul.f32 %v621, %v1048
        %v1146 = vmul.f32 %v622, %v1052
        %v1147 = vmul.f32 %v623, %v1048
        %v1148 = vmul.f32 %v624, %v1052
        %v1149 = vmul.f32 %v625, %v1048
        %v1150 = vmul.f32 %v626, %v1052
        %v1151 = vmul.f32 %v627, %v1048
        %v1152 = vmul.f32 %v628, %v1052
        %v1153 = vmul.f32 %v629, %v1048
        %v1154 = vmul.f32 %v630, %v1052
        %v1155 = vmul.f32 %v631, %v1048
        %v1156 = vmul.f32 %v632, %v1052
        %v1157 = vmul.f32 %v633, %v1048
        %v1158 = vmul.f32 %v634, %v1052
        %v1159 = vmul.f32 %v635, %v1048
        %v1160 = vmul.f32 %v636, %v1052
        %v1161 = vmul.f32 %v637, %v1048
        %v1162 = vmul.f32 %v638, %v1052
        %v1163 = vmul.f32 %v639, %v1048
        %v1164 = vmul.f32 %v640, %v1052
        %v1165 = vmul.f32 %v641, %v1048
        %v1166 = vmul.f32 %v642, %v1052
        %v1167 = vmul.f32 %v643, %v1048
        %v1168 = vmul.f32 %v644, %v1052
        %v1169 = vmul.f32 %v645, %v1048
        %v1170 = vmul.f32 %v646, %v1052
        %v1171 = vmul.f32 %v647, %v1048
        %v1172 = vmul.f32 %v648, %v1052
        %v1173 = vmul.f32 %v649, %v1048
        %v1174 = vmul.f32 %v650, %v1052
        %v1175 = vmul.f32 %v651, %v1048
        %v1176 = vmul.f32 %v652, %v1052
        %v1177 = vmul.f32 %v653, %v1048
        %v1178 = vmul.f32 %v654, %v1052
        %v1179 = vmul.f32 %v655, %v1048
        %v1180 = vmul.f32 %v656, %v1052
        %v1181 = vmul.f32 %v657, %v1048
        %v1182 = vmul.f32 %v658, %v1052
        %v1183 = vmul.f32 %v659, %v1048
        %v1184 = vmul.f32 %v660, %v1052
        %v1185 = vmul.f32 %v661, %v1048
        %v1186 = vmul.f32 %v662, %v1052
        %v1187 = vmul.f32 %v663, %v1048
        %v1188 = vmul.f32 %v664, %v1052
        %v1189 = vmul.f32 %v665, %v1048
        %v1190 = vmul.f32 %v666, %v1052
        %v1191 = vmul.f32 %v667, %v1048
        %v1192 = vmul.f32 %v668, %v1052
        %v1193 = vmul.f32 %v669, %v1048
        %v1194 = vmul.f32 %v670, %v1052
        %v1195 = vmul.f32 %v671, %v1048
        %v1196 = vmul.f32 %v672, %v1052
        %v1197 = vmul.f32 %v673, %v1048
        %v1198 = vmul.f32 %v674, %v1052
        %v1199 = vmul.f32 %v675, %v1048
        %v1200 = vmul.f32 %v676, %v1052
        %v1201 = vmul.f32 %v677, %v1048
        %v1202 = vmul.f32 %v678, %v1052
        %v1203 = vmul.f32 %v679, %v1048
        %v1204 = vmul.f32 %v680, %v1052
        %v1205 = vmul.f32 %v681, %v1048
        %v1206 = vmul.f32 %v682, %v1052
        %v1207 = vmul.f32 %v683, %v1048
        %v1208 = vmul.f32 %v684, %v1052
        %v1209 = vmul.f32 %v685, %v1048
        %v1210 = vmul.f32 %v686, %v1052
        %v1211 = vmul.f32 %v687, %v1048
        %v1212 = vmul.f32 %v688, %v1052
        %v1213 = vmul.f32 %v689, %v1048
        %v1214 = vmul.f32 %v690, %v1052
        %v1215 = vmul.f32 %v691, %v1048
        %v1216 = vmul.f32 %v692, %v1052
        %v1217 = vmul.f32 %v693, %v1048
        %v1218 = vmul.f32 %v694, %v1052
        %v1219 = vmul.f32 %v695, %v1048
        %v1220 = vmul.f32 %v696, %v1052
        %v1221 = vmul.f32 %v697, %v1048
        %v1222 = vmul.f32 %v698, %v1052
        %v1223 = vmul.f32 %v699, %v1048
        %v1224 = vmul.f32 %v700, %v1052
        %v1225 = vmul.f32 %v701, %v1048
        %v1226 = vmul.f32 %v702, %v1052
        %v1227 = vmul.f32 %v703, %v1048
        %v1228 = vmul.f32 %v704, %v1052
        %v1229 = vmul.f32 %v705, %v1048
        %v1230 = vmul.f32 %v706, %v1052
        %v1231 = vmul.f32 %v707, %v1048
        %v1232 = vmul.f32 %v708, %v1052
        %v1233 = vmul.f32 %v709, %v1048
        %v1234 = vmul.f32 %v710, %v1052
        %v1235 = vmul.f32 %v711, %v1048
        %v1236 = vmul.f32 %v712, %v1052
        %v1237 = vmul.f32 %v713, %v1048
        %v1238 = vmul.f32 %v714, %v1052
        %v1239 = vmul.f32 %v715, %v1048
        %v1240 = vmul.f32 %v716, %v1052
        %v1241 = vmul.f32 %v717, %v1048
        %v1242 = vmul.f32 %v718, %v1052
        %v1243 = vmul.f32 %v719, %v1048
        %v1244 = vmul.f32 %v720, %v1052
        %v1245 = vmul.f32 %v721, %v1048
        %v1246 = vmul.f32 %v722, %v1052
        %v1247 = vmul.f32 %v723, %v1048
        %v1248 = vmul.f32 %v724, %v1052
        %v1249 = vmul.f32 %v725, %v1048
        %v1250 = vmul.f32 %v726, %v1052
        %v1251 = vmul.f32 %v727, %v1048
        %v1252 = vmul.f32 %v728, %v1052
        %v1253 = vmul.f32 %v729, %v1048
        %v1254 = vmul.f32 %v730, %v1052
        %v1255 = vmul.f32 %v731, %v1048
        %v1256 = vmul.f32 %v732, %v1052
        %v1257 = vmul.f32 %v733, %v1048
        %v1258 = vmul.f32 %v734, %v1052
        %v1259 = vmul.f32 %v735, %v1048
        %v1260 = vmul.f32 %v736, %v1052
        %v1261 = vmul.f32 %v737, %v1048
        %v1262 = vmul.f32 %v738, %v1052
        %v1263 = vmul.f32 %v739, %v1048
        %v1264 = vmul.f32 %v740, %v1052
        %v1265 = vmul.f32 %v741, %v1048
        %v1266 = vmul.f32 %v742, %v1052
        %v1267 = vmul.f32 %v743, %v1048
        %v1268 = vmul.f32 %v744, %v1052
        %v1269 = vmul.f32 %v745, %v1048
        %v1270 = vmul.f32 %v746, %v1052
        %v1271 = vmul.f32 %v747, %v1048
        %v1272 = vmul.f32 %v748, %v1052
        %v1273 = vmul.f32 %v749, %v1048
        %v1274 = vmul.f32 %v750, %v1052
        %v1275 = vmul.f32 %v751, %v1048
        %v1276 = vmul.f32 %v752, %v1052
        %v1277 = vmul.f32 %v753, %v1048
        %v1278 = vmul.f32 %v754, %v1052
        %v1279 = vmul.f32 %v755, %v1048
        %v1280 = vmul.f32 %v756, %v1052
        %v1281 = vmul.f32 %v757, %v1048
        %v1282 = vmul.f32 %v758, %v1052
        %v1283 = vmul.f32 %v759, %v1048
        %v1284 = vmul.f32 %v760, %v1052
        %v1285 = vmul.f32 %v761, %v1048
        %v1286 = vmul.f32 %v762, %v1052
        %v1287 = vmul.f32 %v763, %v1048
        %v1288 = vmul.f32 %v764, %v1052
        %v1289 = vmul.f32 %v765, %v1048
        %v1290 = vmul.f32 %v766, %v1052
        %v1291 = vmul.f32 %v767, %v1048
        %v1292 = vmul.f32 %v768, %v1052
        %v1293 = vmul.f32 %v769, %v1048
        %v1294 = vmul.f32 %v770, %v1052
        %v1295 = vmul.f32 %v771, %v1048
        %v1296 = vmul.f32 %v772, %v1052
        %v1297 = vmul.f32 %v773, %v1048
        %v1298 = vmul.f32 %v774, %v1052
        %v1299 = vmul.f32 %v775, %v1048
        %v1300 = vmul.f32 %v776, %v1052
        %v1301 = vmul.f32 %v777, %v1048
        %v1302 = vmul.f32 %v778, %v1052
        %v1303 = vmul.f32 %v779, %v1048
        %v1304 = vmul.f32 %v780, %v1052
        %v1305 = vmul.f32 %v781, %v1048
        %v1306 = vmul.f32 %v782, %v1052
        %v1307 = vmul.f32 %v783, %v1048
        %v1308 = vmul.f32 %v784, %v1052
        %v1309 = vmul.f32 %v785, %v1048
        %v1310 = vmul.f32 %v786, %v1052
        %v1311 = vmul.f32 %v787, %v1048
        %v1312 = vmul.f32 %v788, %v1052
        %v1313 = vmul.f32 %v789, %v1048
        %v1314 = vmul.f32 %v790, %v1052
        %v1315 = vmul.f32 %v791, %v1048
        %v1316 = vmul.f32 %v792, %v1052
        %v1317 = vmul.f32 %v793, %v1048
        %v1318 = vmul.f32 %v794, %v1052
        %v1319 = vmul.f32 %v795, %v1048
        %v1320 = vmul.f32 %v796, %v1052
        %v1321 = vmul.f32 %v797, %v1048
        %v1322 = vmul.f32 %v798, %v1052
        %v1323 = vmul.f32 %v799, %v1048
        %v1324 = vmul.f32 %v800, %v1052
        %v1325 = vmul.f32 %v801, %v1048
        %v1326 = vmul.f32 %v802, %v1052
        %v1327 = vmul.f32 %v803, %v1048
        %v1328 = vmul.f32 %v804, %v1052
        %v1329 = vmul.f32 %v805, %v1048
        %v1330 = vmul.f32 %v806, %v1052
        %v1331 = vmul.f32 %v807, %v1048
        %v1332 = vmul.f32 %v808, %v1052
        %v1333 = vmul.f32 %v809, %v1048
        %v1334 = vmul.f32 %v810, %v1052
        %v1335 = vmul.f32 %v811, %v1048
        %v1336 = vmul.f32 %v812, %v1052
        %v1337 = vmul.f32 %v813, %v1048
        %v1338 = vmul.f32 %v814, %v1052
        %v1339 = vmul.f32 %v815, %v1048
        %v1340 = vmul.f32 %v816, %v1052
        %v1341 = vmul.f32 %v817, %v1048
        %v1342 = vmul.f32 %v818, %v1052
        %v1343 = vmul.f32 %v819, %v1048
        %v1344 = vmul.f32 %v820, %v1052
        %v1345 = vmul.f32 %v821, %v1048
        %v1346 = vmul.f32 %v822, %v1052
        %v1347 = vmul.f32 %v823, %v1048
        %v1348 = vmul.f32 %v824, %v1052
        %v1349 = vmul.f32 %v825, %v1048
        %v1350 = vmul.f32 %v826, %v1052
        %v1351 = vmul.f32 %v827, %v1048
        %v1352 = vmul.f32 %v828, %v1052
        %v1353 = vmul.f32 %v829, %v1048
        %v1354 = vmul.f32 %v830, %v1052
        %v1355 = vmul.f32 %v831, %v1048
        %v1356 = vmul.f32 %v832, %v1052
        %v1357 = vmul.f32 %v833, %v1048
        %v1358 = vmul.f32 %v834, %v1052
        %v1359 = vmul.f32 %v835, %v1048
        %v1360 = vmul.f32 %v836, %v1052
        %v1361 = vmul.f32 %v837, %v1048
        %v1362 = vmul.f32 %v838, %v1052
        %v1363 = vmul.f32 %v839, %v1048
        %v1364 = vmul.f32 %v840, %v1052
        %v1365 = vmul.f32 %v841, %v1048
        %v1366 = vmul.f32 %v842, %v1052
        %v1367 = vmul.f32 %v843, %v1048
        %v1368 = vmul.f32 %v844, %v1052
        %v1369 = vmul.f32 %v845, %v1048
        %v1370 = vmul.f32 %v846, %v1052
        %v1371 = vmul.f32 %v847, %v1048
        %v1372 = vmul.f32 %v848, %v1052
        %v1373 = vmul.f32 %v849, %v1048
        %v1374 = vmul.f32 %v850, %v1052
        %v1375 = vmul.f32 %v851, %v1048
        %v1376 = vmul.f32 %v852, %v1052
        %v1377 = vmul.f32 %v853, %v1048
        %v1378 = vmul.f32 %v854, %v1052
        %v1379 = vmul.f32 %v855, %v1048
        %v1380 = vmul.f32 %v856, %v1052
        %v1381 = vmul.f32 %v857, %v1048
        %v1382 = vmul.f32 %v858, %v1052
        %v1383 = vmul.f32 %v859, %v1048
        %v1384 = vmul.f32 %v860, %v1052
        %v1385 = vmul.f32 %v861, %v1048
        %v1386 = vmul.f32 %v862, %v1052
        %v1387 = vmul.f32 %v863, %v1048
        %v1388 = vmul.f32 %v864, %v1052
        %v1389 = vmul.f32 %v865, %v1048
        %v1390 = vmul.f32 %v866, %v1052
        %v1391 = vmul.f32 %v867, %v1048
        %v1392 = vmul.f32 %v868, %v1052
        %v1393 = vmul.f32 %v869, %v1048
        %v1394 = vmul.f32 %v870, %v1052
        %v1395 = vmul.f32 %v871, %v1048
        %v1396 = vmul.f32 %v872, %v1052
        %v1397 = vmul.f32 %v873, %v1048
        %v1398 = vmul.f32 %v874, %v1052
        %v1399 = vmul.f32 %v875, %v1048
        %v1400 = vmul.f32 %v876, %v1052
        %v1401 = vmul.f32 %v877, %v1048
        %v1402 = vmul.f32 %v878, %v1052
        %v1403 = vmul.f32 %v879, %v1048
        %v1404 = vmul.f32 %v880, %v1052
        %v1405 = vmul.f32 %v881, %v1048
        %v1406 = vmul.f32 %v882, %v1052
        %v1407 = vmul.f32 %v883, %v1048
        %v1408 = vmul.f32 %v884, %v1052
        %v1409 = vmul.f32 %v885, %v1048
        %v1410 = vmul.f32 %v886, %v1052
        %v1411 = vmul.f32 %v887, %v1048
        %v1412 = vmul.f32 %v888, %v1052
        %v1413 = vmul.f32 %v889, %v1048
        %v1414 = vmul.f32 %v890, %v1052
        %v1415 = vmul.f32 %v891, %v1048
        %v1416 = vmul.f32 %v892, %v1052
        %v1417 = vmul.f32 %v893, %v1048
        %v1418 = vmul.f32 %v894, %v1052
        %v1419 = vmul.f32 %v895, %v1048
        %v1420 = vmul.f32 %v896, %v1052
        %v1421 = vmul.f32 %v897, %v1048
        %v1422 = vmul.f32 %v898, %v1052
        %v1423 = vmul.f32 %v899, %v1048
        %v1424 = vmul.f32 %v900, %v1052
        %v1425 = vmul.f32 %v901, %v1048
        %v1426 = vmul.f32 %v902, %v1052
        %v1427 = vmul.f32 %v903, %v1048
        %v1428 = vmul.f32 %v904, %v1052
        %v1429 = vmul.f32 %v905, %v1048
        %v1430 = vmul.f32 %v906, %v1052
        %v1431 = vmul.f32 %v907, %v1048
        %v1432 = vmul.f32 %v908, %v1052
        %v1433 = vmul.f32 %v909, %v1048
        %v1434 = vmul.f32 %v910, %v1052
        %v1435 = vmul.f32 %v911, %v1048
        %v1436 = vmul.f32 %v912, %v1052
        %v1437 = vmul.f32 %v913, %v1048
        %v1438 = vmul.f32 %v914, %v1052
        %v1439 = vmul.f32 %v915, %v1048
        %v1440 = vmul.f32 %v916, %v1052
        %v1441 = vmul.f32 %v917, %v1048
        %v1442 = vmul.f32 %v918, %v1052
        %v1443 = vmul.f32 %v919, %v1048
        %v1444 = vmul.f32 %v920, %v1052
        %v1445 = vmul.f32 %v921, %v1048
        %v1446 = vmul.f32 %v922, %v1052
        %v1447 = vmul.f32 %v923, %v1048
        %v1448 = vmul.f32 %v924, %v1052
        %v1449 = vmul.f32 %v925, %v1048
        %v1450 = vmul.f32 %v926, %v1052
        %v1451 = vmul.f32 %v927, %v1048
        %v1452 = vmul.f32 %v928, %v1052
        %v1453 = vmul.f32 %v929, %v1048
        %v1454 = vmul.f32 %v930, %v1052
        %v1455 = vmul.f32 %v931, %v1048
        %v1456 = vmul.f32 %v932, %v1052
        %v1457 = vmul.f32 %v933, %v1048
        %v1458 = vmul.f32 %v934, %v1052
        %v1459 = vmul.f32 %v935, %v1048
        %v1460 = vmul.f32 %v936, %v1052
        %v1461 = vmul.f32 %v937, %v1048
        %v1462 = vmul.f32 %v938, %v1052
        %v1463 = vmul.f32 %v939, %v1048
        %v1464 = vmul.f32 %v940, %v1052
        %v1465 = vmul.f32 %v941, %v1048
        %v1466 = vmul.f32 %v942, %v1052
        %v1467 = vmul.f32 %v943, %v1048
        %v1468 = vmul.f32 %v944, %v1052
        %v1469 = vmul.f32 %v945, %v1048
        %v1470 = vmul.f32 %v946, %v1052
        %v1471 = vmul.f32 %v947, %v1048
        %v1472 = vmul.f32 %v948, %v1052
        %v1473 = vmul.f32 %v949, %v1048
        %v1474 = vmul.f32 %v950, %v1052
        %v1475 = vmul.f32 %v951, %v1048
        %v1476 = vmul.f32 %v952, %v1052
        %v1477 = vmul.f32 %v953, %v1048
        %v1478 = vmul.f32 %v954, %v1052
        %v1479 = vmul.f32 %v955, %v1048
        %v1480 = vmul.f32 %v956, %v1052
        %v1481 = vmul.f32 %v957, %v1048
        %v1482 = vmul.f32 %v958, %v1052
        %v1483 = vmul.f32 %v959, %v1048
        %v1484 = vmul.f32 %v960, %v1052
        %v1485 = vmul.f32 %v961, %v1048
        %v1486 = vmul.f32 %v962, %v1052
        %v1487 = vmul.f32 %v963, %v1048
        %v1488 = vmul.f32 %v964, %v1052
        %v1489 = vmul.f32 %v965, %v1048
        %v1490 = vmul.f32 %v966, %v1052
        %v1491 = vmul.f32 %v967, %v1048
        %v1492 = vmul.f32 %v968, %v1052
        %v1493 = vmul.f32 %v969, %v1048
        %v1494 = vmul.f32 %v970, %v1052
        %v1495 = vmul.f32 %v971, %v1048
        %v1496 = vmul.f32 %v972, %v1052
        %v1497 = vmul.f32 %v973, %v1048
        %v1498 = vmul.f32 %v974, %v1052
        %v1499 = vmul.f32 %v975, %v1048
        %v1500 = vmul.f32 %v976, %v1052
        %v1501 = vmul.f32 %v977, %v1048
        %v1502 = vmul.f32 %v978, %v1052
        %v1503 = vmul.f32 %v979, %v1048
        %v1504 = vmul.f32 %v980, %v1052
        %v1505 = vmul.f32 %v981, %v1048
        %v1506 = vmul.f32 %v982, %v1052
        %v1507 = vmul.f32 %v983, %v1048
        %v1508 = vmul.f32 %v984, %v1052
        %v1509 = vmul.f32 %v985, %v1048
        %v1510 = vmul.f32 %v986, %v1052
        %v1511 = vmul.f32 %v987, %v1048
        %v1512 = vmul.f32 %v988, %v1052
        %v1513 = vmul.f32 %v989, %v1048
        %v1514 = vmul.f32 %v990, %v1052
        %v1515 = vmul.f32 %v991, %v1048
        %v1516 = vmul.f32 %v992, %v1052
        %v1517 = vmul.f32 %v993, %v1048
        %v1518 = vmul.f32 %v994, %v1052
        %v1519 = vmul.f32 %v995, %v1048
        %v1520 = vmul.f32 %v996, %v1052
        %v1521 = vmul.f32 %v997, %v1048
        %v1522 = vmul.f32 %v998, %v1052
        %v1523 = vmul.f32 %v999, %v1048
        %v1524 = vmul.f32 %v1000, %v1052
        %v1525 = vmul.f32 %v1001, %v1048
        %v1526 = vmul.f32 %v1002, %v1052
        %v1527 = vmul.f32 %v1003, %v1048
        %v1528 = vmul.f32 %v1004, %v1052
        %v1529 = vmul.f32 %v1005, %v1048
        %v1530 = vmul.f32 %v1006, %v1052
        %v1531 = vmul.f32 %v1007, %v1048
        %v1532 = vmul.f32 %v1008, %v1052
        %v1533 = vmul.f32 %v1009, %v1048
        %v1534 = vmul.f32 %v1010, %v1052
        %v1535 = vmul.f32 %v1011, %v1048
        %v1536 = vmul.f32 %v1012, %v1052
        %v1537 = vmul.f32 %v1013, %v1048
        %v1538 = vmul.f32 %v1014, %v1052
        %v1539 = vmul.f32 %v1015, %v1048
        %v1540 = vmul.f32 %v1016, %v1052
        %v1541 = vmul.f32 %v1017, %v1048
        %v1542 = vmul.f32 %v1018, %v1052
        %v1543 = vmul.f32 %v1019, %v1048
        %v1544 = vmul.f32 %v1020, %v1052
        %v1545 = vmul.f32 %v1021, %v1048
        %v1546 = vmul.f32 %v1022, %v1052
        %v1547 = vmul.f32 %v1023, %v1048
        %v1548 = vmul.f32 %v1024, %v1052
        %v1549 = vmul.f32 %v1025, %v1048
        %v1550 = vmul.f32 %v1026, %v1052
        %v1551 = vmul.f32 %v1027, %v1048
        %v1552 = vmul.f32 %v1028, %v1052
        %v1553 = vmul.f32 %v1029, %v1048
        %v1554 = vmul.f32 %v1030, %v1052
        %v1555 = vmul.f32 %v1031, %v1048
        %v1556 = vmul.f32 %v1032, %v1052
        %v1557 = vmul.f32 %v1033, %v1048
        %v1558 = vmul.f32 %v1034, %v1052
        %v1559 = vmul.f32 %v1035, %v1048
        %v1560 = vmul.f32 %v1036, %v1052
        %v1561 = vmul.f32 %v1037, %v1048
        %v1562 = vmul.f32 %v1038, %v1052
        %v1563 = vmul.f32 %v1039, %v1048
        %v1564 = vmul.f32 %v1040, %v1052
        %v1565 = vmul.f32 %v1041, %v1048
        %v1566 = vmul.f32 %v1042, %v1052
        %vm1567 = vcmask 588800
        %v1568 = vsel %vm1567, %v1056, 0.0
        %v1569 = vadd.f32 %v1055, %v1568
        %1570 = vadd.xlane.f32.xlu0 %v1569
        %v1571 = vpop.xlane.xlu0 %1570
        %v1572 = vsel %vm1567, %v1058, 0.0
        %v1573 = vadd.f32 %v1057, %v1572
        %1574 = vadd.xlane.f32.xlu0 %v1573
        %v1575 = vpop.xlane.xlu0 %1574
        %v1576 = vsel %vm1567, %v1060, 0.0
        %v1577 = vadd.f32 %v1059, %v1576
        %1578 = vadd.xlane.f32.xlu0 %v1577
        %v1579 = vpop.xlane.xlu0 %1578
        %v1580 = vsel %vm1567, %v1062, 0.0
        %v1581 = vadd.f32 %v1061, %v1580
        %1582 = vadd.xlane.f32.xlu0 %v1581
        %v1583 = vpop.xlane.xlu0 %1582
        %v1584 = vsel %vm1567, %v1064, 0.0
        %v1585 = vadd.f32 %v1063, %v1584
        %1586 = vadd.xlane.f32.xlu0 %v1585
        %v1587 = vpop.xlane.xlu0 %1586
        %v1588 = vsel %vm1567, %v1066, 0.0
        %v1589 = vadd.f32 %v1065, %v1588
        %1590 = vadd.xlane.f32.xlu0 %v1589
        %v1591 = vpop.xlane.xlu0 %1590
        %v1592 = vsel %vm1567, %v1068, 0.0
        %v1593 = vadd.f32 %v1067, %v1592
        %1594 = vadd.xlane.f32.xlu0 %v1593
        %v1595 = vpop.xlane.xlu0 %1594
        %v1596 = vsel %vm1567, %v1070, 0.0
        %v1597 = vadd.f32 %v1069, %v1596
        %1598 = vadd.xlane.f32.xlu0 %v1597
        %v1599 = vpop.xlane.xlu0 %1598
        %v1600 = vsel %vm1567, %v1072, 0.0
        %v1601 = vadd.f32 %v1071, %v1600
        %1602 = vadd.xlane.f32.xlu0 %v1601
        %v1603 = vpop.xlane.xlu0 %1602
        %v1604 = vsel %vm1567, %v1074, 0.0
        %v1605 = vadd.f32 %v1073, %v1604
        %1606 = vadd.xlane.f32.xlu0 %v1605
        %v1607 = vpop.xlane.xlu0 %1606
        %v1608 = vsel %vm1567, %v1076, 0.0
        %v1609 = vadd.f32 %v1075, %v1608
        %1610 = vadd.xlane.f32.xlu0 %v1609
        %v1611 = vpop.xlane.xlu0 %1610
        %v1612 = vsel %vm1567, %v1078, 0.0
        %v1613 = vadd.f32 %v1077, %v1612
        %1614 = vadd.xlane.f32.xlu0 %v1613
        %v1615 = vpop.xlane.xlu0 %1614
        %v1616 = vsel %vm1567, %v1080, 0.0
        %v1617 = vadd.f32 %v1079, %v1616
        %1618 = vadd.xlane.f32.xlu0 %v1617
        %v1619 = vpop.xlane.xlu0 %1618
        %v1620 = vsel %vm1567, %v1082, 0.0
        %v1621 = vadd.f32 %v1081, %v1620
        %1622 = vadd.xlane.f32.xlu0 %v1621
        %v1623 = vpop.xlane.xlu0 %1622
        %v1624 = vsel %vm1567, %v1084, 0.0
        %v1625 = vadd.f32 %v1083, %v1624
        %1626 = vadd.xlane.f32.xlu0 %v1625
        %v1627 = vpop.xlane.xlu0 %1626
        %v1628 = vsel %vm1567, %v1086, 0.0
        %v1629 = vadd.f32 %v1085, %v1628
        %1630 = vadd.xlane.f32.xlu0 %v1629
        %v1631 = vpop.xlane.xlu0 %1630
        %v1632 = vsel %vm1567, %v1088, 0.0
        %v1633 = vadd.f32 %v1087, %v1632
        %1634 = vadd.xlane.f32.xlu0 %v1633
        %v1635 = vpop.xlane.xlu0 %1634
        %v1636 = vsel %vm1567, %v1090, 0.0
        %v1637 = vadd.f32 %v1089, %v1636
        %1638 = vadd.xlane.f32.xlu0 %v1637
        %v1639 = vpop.xlane.xlu0 %1638
        %v1640 = vsel %vm1567, %v1092, 0.0
        %v1641 = vadd.f32 %v1091, %v1640
        %1642 = vadd.xlane.f32.xlu0 %v1641
        %v1643 = vpop.xlane.xlu0 %1642
        %v1644 = vsel %vm1567, %v1094, 0.0
        %v1645 = vadd.f32 %v1093, %v1644
        %1646 = vadd.xlane.f32.xlu0 %v1645
        %v1647 = vpop.xlane.xlu0 %1646
        %v1648 = vsel %vm1567, %v1096, 0.0
        %v1649 = vadd.f32 %v1095, %v1648
        %1650 = vadd.xlane.f32.xlu0 %v1649
        %v1651 = vpop.xlane.xlu0 %1650
        %v1652 = vsel %vm1567, %v1098, 0.0
        %v1653 = vadd.f32 %v1097, %v1652
        %1654 = vadd.xlane.f32.xlu0 %v1653
        %v1655 = vpop.xlane.xlu0 %1654
        %v1656 = vsel %vm1567, %v1100, 0.0
        %v1657 = vadd.f32 %v1099, %v1656
        %1658 = vadd.xlane.f32.xlu0 %v1657
        %v1659 = vpop.xlane.xlu0 %1658
        %v1660 = vsel %vm1567, %v1102, 0.0
        %v1661 = vadd.f32 %v1101, %v1660
        %1662 = vadd.xlane.f32.xlu0 %v1661
        %v1663 = vpop.xlane.xlu0 %1662
        %v1664 = vsel %vm1567, %v1104, 0.0
        %v1665 = vadd.f32 %v1103, %v1664
        %1666 = vadd.xlane.f32.xlu0 %v1665
        %v1667 = vpop.xlane.xlu0 %1666
        %v1668 = vsel %vm1567, %v1106, 0.0
        %v1669 = vadd.f32 %v1105, %v1668
        %1670 = vadd.xlane.f32.xlu0 %v1669
        %v1671 = vpop.xlane.xlu0 %1670
        %v1672 = vsel %vm1567, %v1108, 0.0
        %v1673 = vadd.f32 %v1107, %v1672
        %1674 = vadd.xlane.f32.xlu0 %v1673
        %v1675 = vpop.xlane.xlu0 %1674
        %v1676 = vsel %vm1567, %v1110, 0.0
        %v1677 = vadd.f32 %v1109, %v1676
        %1678 = vadd.xlane.f32.xlu0 %v1677
        %v1679 = vpop.xlane.xlu0 %1678
        %v1680 = vsel %vm1567, %v1112, 0.0
        %v1681 = vadd.f32 %v1111, %v1680
        %1682 = vadd.xlane.f32.xlu0 %v1681
        %v1683 = vpop.xlane.xlu0 %1682
        %v1684 = vsel %vm1567, %v1114, 0.0
        %v1685 = vadd.f32 %v1113, %v1684
        %1686 = vadd.xlane.f32.xlu0 %v1685
        %v1687 = vpop.xlane.xlu0 %1686
        %v1688 = vsel %vm1567, %v1116, 0.0
        %v1689 = vadd.f32 %v1115, %v1688
        %1690 = vadd.xlane.f32.xlu0 %v1689
        %v1691 = vpop.xlane.xlu0 %1690
        %v1692 = vsel %vm1567, %v1118, 0.0
        %v1693 = vadd.f32 %v1117, %v1692
        %1694 = vadd.xlane.f32.xlu0 %v1693
        %v1695 = vpop.xlane.xlu0 %1694
        %v1696 = vsel %vm1567, %v1120, 0.0
        %v1697 = vadd.f32 %v1119, %v1696
        %1698 = vadd.xlane.f32.xlu0 %v1697
        %v1699 = vpop.xlane.xlu0 %1698
        %v1700 = vsel %vm1567, %v1122, 0.0
        %v1701 = vadd.f32 %v1121, %v1700
        %1702 = vadd.xlane.f32.xlu0 %v1701
        %v1703 = vpop.xlane.xlu0 %1702
        %v1704 = vsel %vm1567, %v1124, 0.0
        %v1705 = vadd.f32 %v1123, %v1704
        %1706 = vadd.xlane.f32.xlu0 %v1705
        %v1707 = vpop.xlane.xlu0 %1706
        %v1708 = vsel %vm1567, %v1126, 0.0
        %v1709 = vadd.f32 %v1125, %v1708
        %1710 = vadd.xlane.f32.xlu0 %v1709
        %v1711 = vpop.xlane.xlu0 %1710
        %v1712 = vsel %vm1567, %v1128, 0.0
        %v1713 = vadd.f32 %v1127, %v1712
        %1714 = vadd.xlane.f32.xlu0 %v1713
        %v1715 = vpop.xlane.xlu0 %1714
        %v1716 = vsel %vm1567, %v1130, 0.0
        %v1717 = vadd.f32 %v1129, %v1716
        %1718 = vadd.xlane.f32.xlu0 %v1717
        %v1719 = vpop.xlane.xlu0 %1718
        %v1720 = vsel %vm1567, %v1132, 0.0
        %v1721 = vadd.f32 %v1131, %v1720
        %1722 = vadd.xlane.f32.xlu0 %v1721
        %v1723 = vpop.xlane.xlu0 %1722
        %v1724 = vsel %vm1567, %v1134, 0.0
        %v1725 = vadd.f32 %v1133, %v1724
        %1726 = vadd.xlane.f32.xlu0 %v1725
        %v1727 = vpop.xlane.xlu0 %1726
        %v1728 = vsel %vm1567, %v1136, 0.0
        %v1729 = vadd.f32 %v1135, %v1728
        %1730 = vadd.xlane.f32.xlu0 %v1729
        %v1731 = vpop.xlane.xlu0 %1730
        %v1732 = vsel %vm1567, %v1138, 0.0
        %v1733 = vadd.f32 %v1137, %v1732
        %1734 = vadd.xlane.f32.xlu0 %v1733
        %v1735 = vpop.xlane.xlu0 %1734
        %v1736 = vsel %vm1567, %v1140, 0.0
        %v1737 = vadd.f32 %v1139, %v1736
        %1738 = vadd.xlane.f32.xlu0 %v1737
        %v1739 = vpop.xlane.xlu0 %1738
        %v1740 = vsel %vm1567, %v1142, 0.0
        %v1741 = vadd.f32 %v1141, %v1740
        %1742 = vadd.xlane.f32.xlu0 %v1741
        %v1743 = vpop.xlane.xlu0 %1742
        %v1744 = vsel %vm1567, %v1144, 0.0
        %v1745 = vadd.f32 %v1143, %v1744
        %1746 = vadd.xlane.f32.xlu0 %v1745
        %v1747 = vpop.xlane.xlu0 %1746
        %v1748 = vsel %vm1567, %v1146, 0.0
        %v1749 = vadd.f32 %v1145, %v1748
        %1750 = vadd.xlane.f32.xlu0 %v1749
        %v1751 = vpop.xlane.xlu0 %1750
        %v1752 = vsel %vm1567, %v1148, 0.0
        %v1753 = vadd.f32 %v1147, %v1752
        %1754 = vadd.xlane.f32.xlu0 %v1753
        %v1755 = vpop.xlane.xlu0 %1754
        %v1756 = vsel %vm1567, %v1150, 0.0
        %v1757 = vadd.f32 %v1149, %v1756
        %1758 = vadd.xlane.f32.xlu0 %v1757
        %v1759 = vpop.xlane.xlu0 %1758
        %v1760 = vsel %vm1567, %v1152, 0.0
        %v1761 = vadd.f32 %v1151, %v1760
        %1762 = vadd.xlane.f32.xlu0 %v1761
        %v1763 = vpop.xlane.xlu0 %1762
        %v1764 = vsel %vm1567, %v1154, 0.0
        %v1765 = vadd.f32 %v1153, %v1764
        %1766 = vadd.xlane.f32.xlu0 %v1765
        %v1767 = vpop.xlane.xlu0 %1766
        %v1768 = vsel %vm1567, %v1156, 0.0
        %v1769 = vadd.f32 %v1155, %v1768
        %1770 = vadd.xlane.f32.xlu0 %v1769
        %v1771 = vpop.xlane.xlu0 %1770
        %v1772 = vsel %vm1567, %v1158, 0.0
        %v1773 = vadd.f32 %v1157, %v1772
        %1774 = vadd.xlane.f32.xlu0 %v1773
        %v1775 = vpop.xlane.xlu0 %1774
        %v1776 = vsel %vm1567, %v1160, 0.0
        %v1777 = vadd.f32 %v1159, %v1776
        %1778 = vadd.xlane.f32.xlu0 %v1777
        %v1779 = vpop.xlane.xlu0 %1778
        %v1780 = vsel %vm1567, %v1162, 0.0
        %v1781 = vadd.f32 %v1161, %v1780
        %1782 = vadd.xlane.f32.xlu0 %v1781
        %v1783 = vpop.xlane.xlu0 %1782
        %v1784 = vsel %vm1567, %v1164, 0.0
        %v1785 = vadd.f32 %v1163, %v1784
        %1786 = vadd.xlane.f32.xlu0 %v1785
        %v1787 = vpop.xlane.xlu0 %1786
        %v1788 = vsel %vm1567, %v1166, 0.0
        %v1789 = vadd.f32 %v1165, %v1788
        %1790 = vadd.xlane.f32.xlu0 %v1789
        %v1791 = vpop.xlane.xlu0 %1790
        %v1792 = vsel %vm1567, %v1168, 0.0
        %v1793 = vadd.f32 %v1167, %v1792
        %1794 = vadd.xlane.f32.xlu0 %v1793
        %v1795 = vpop.xlane.xlu0 %1794
        %v1796 = vsel %vm1567, %v1170, 0.0
        %v1797 = vadd.f32 %v1169, %v1796
        %1798 = vadd.xlane.f32.xlu0 %v1797
        %v1799 = vpop.xlane.xlu0 %1798
        %v1800 = vsel %vm1567, %v1172, 0.0
        %v1801 = vadd.f32 %v1171, %v1800
        %1802 = vadd.xlane.f32.xlu0 %v1801
        %v1803 = vpop.xlane.xlu0 %1802
        %v1804 = vsel %vm1567, %v1174, 0.0
        %v1805 = vadd.f32 %v1173, %v1804
        %1806 = vadd.xlane.f32.xlu0 %v1805
        %v1807 = vpop.xlane.xlu0 %1806
        %v1808 = vsel %vm1567, %v1176, 0.0
        %v1809 = vadd.f32 %v1175, %v1808
        %1810 = vadd.xlane.f32.xlu0 %v1809
        %v1811 = vpop.xlane.xlu0 %1810
        %v1812 = vsel %vm1567, %v1178, 0.0
        %v1813 = vadd.f32 %v1177, %v1812
        %1814 = vadd.xlane.f32.xlu0 %v1813
        %v1815 = vpop.xlane.xlu0 %1814
        %v1816 = vsel %vm1567, %v1180, 0.0
        %v1817 = vadd.f32 %v1179, %v1816
        %1818 = vadd.xlane.f32.xlu0 %v1817
        %v1819 = vpop.xlane.xlu0 %1818
        %v1820 = vsel %vm1567, %v1182, 0.0
        %v1821 = vadd.f32 %v1181, %v1820
        %1822 = vadd.xlane.f32.xlu0 %v1821
        %v1823 = vpop.xlane.xlu0 %1822
        %v1824 = vsel %vm1567, %v1184, 0.0
        %v1825 = vadd.f32 %v1183, %v1824
        %1826 = vadd.xlane.f32.xlu0 %v1825
        %v1827 = vpop.xlane.xlu0 %1826
        %v1828 = vsel %vm1567, %v1186, 0.0
        %v1829 = vadd.f32 %v1185, %v1828
        %1830 = vadd.xlane.f32.xlu0 %v1829
        %v1831 = vpop.xlane.xlu0 %1830
        %v1832 = vsel %vm1567, %v1188, 0.0
        %v1833 = vadd.f32 %v1187, %v1832
        %1834 = vadd.xlane.f32.xlu0 %v1833
        %v1835 = vpop.xlane.xlu0 %1834
        %v1836 = vsel %vm1567, %v1190, 0.0
        %v1837 = vadd.f32 %v1189, %v1836
        %1838 = vadd.xlane.f32.xlu0 %v1837
        %v1839 = vpop.xlane.xlu0 %1838
        %v1840 = vsel %vm1567, %v1192, 0.0
        %v1841 = vadd.f32 %v1191, %v1840
        %1842 = vadd.xlane.f32.xlu0 %v1841
        %v1843 = vpop.xlane.xlu0 %1842
        %v1844 = vsel %vm1567, %v1194, 0.0
        %v1845 = vadd.f32 %v1193, %v1844
        %1846 = vadd.xlane.f32.xlu0 %v1845
        %v1847 = vpop.xlane.xlu0 %1846
        %v1848 = vsel %vm1567, %v1196, 0.0
        %v1849 = vadd.f32 %v1195, %v1848
        %1850 = vadd.xlane.f32.xlu0 %v1849
        %v1851 = vpop.xlane.xlu0 %1850
        %v1852 = vsel %vm1567, %v1198, 0.0
        %v1853 = vadd.f32 %v1197, %v1852
        %1854 = vadd.xlane.f32.xlu0 %v1853
        %v1855 = vpop.xlane.xlu0 %1854
        %v1856 = vsel %vm1567, %v1200, 0.0
        %v1857 = vadd.f32 %v1199, %v1856
        %1858 = vadd.xlane.f32.xlu0 %v1857
        %v1859 = vpop.xlane.xlu0 %1858
        %v1860 = vsel %vm1567, %v1202, 0.0
        %v1861 = vadd.f32 %v1201, %v1860
        %1862 = vadd.xlane.f32.xlu0 %v1861
        %v1863 = vpop.xlane.xlu0 %1862
        %v1864 = vsel %vm1567, %v1204, 0.0
        %v1865 = vadd.f32 %v1203, %v1864
        %1866 = vadd.xlane.f32.xlu0 %v1865
        %v1867 = vpop.xlane.xlu0 %1866
        %v1868 = vsel %vm1567, %v1206, 0.0
        %v1869 = vadd.f32 %v1205, %v1868
        %1870 = vadd.xlane.f32.xlu0 %v1869
        %v1871 = vpop.xlane.xlu0 %1870
        %v1872 = vsel %vm1567, %v1208, 0.0
        %v1873 = vadd.f32 %v1207, %v1872
        %1874 = vadd.xlane.f32.xlu0 %v1873
        %v1875 = vpop.xlane.xlu0 %1874
        %v1876 = vsel %vm1567, %v1210, 0.0
        %v1877 = vadd.f32 %v1209, %v1876
        %1878 = vadd.xlane.f32.xlu0 %v1877
        %v1879 = vpop.xlane.xlu0 %1878
        %v1880 = vsel %vm1567, %v1212, 0.0
        %v1881 = vadd.f32 %v1211, %v1880
        %1882 = vadd.xlane.f32.xlu0 %v1881
        %v1883 = vpop.xlane.xlu0 %1882
        %v1884 = vsel %vm1567, %v1214, 0.0
        %v1885 = vadd.f32 %v1213, %v1884
        %1886 = vadd.xlane.f32.xlu0 %v1885
        %v1887 = vpop.xlane.xlu0 %1886
        %v1888 = vsel %vm1567, %v1216, 0.0
        %v1889 = vadd.f32 %v1215, %v1888
        %1890 = vadd.xlane.f32.xlu0 %v1889
        %v1891 = vpop.xlane.xlu0 %1890
        %v1892 = vsel %vm1567, %v1218, 0.0
        %v1893 = vadd.f32 %v1217, %v1892
        %1894 = vadd.xlane.f32.xlu0 %v1893
        %v1895 = vpop.xlane.xlu0 %1894
        %v1896 = vsel %vm1567, %v1220, 0.0
        %v1897 = vadd.f32 %v1219, %v1896
        %1898 = vadd.xlane.f32.xlu0 %v1897
        %v1899 = vpop.xlane.xlu0 %1898
        %v1900 = vsel %vm1567, %v1222, 0.0
        %v1901 = vadd.f32 %v1221, %v1900
        %1902 = vadd.xlane.f32.xlu0 %v1901
        %v1903 = vpop.xlane.xlu0 %1902
        %v1904 = vsel %vm1567, %v1224, 0.0
        %v1905 = vadd.f32 %v1223, %v1904
        %1906 = vadd.xlane.f32.xlu0 %v1905
        %v1907 = vpop.xlane.xlu0 %1906
        %v1908 = vsel %vm1567, %v1226, 0.0
        %v1909 = vadd.f32 %v1225, %v1908
        %1910 = vadd.xlane.f32.xlu0 %v1909
        %v1911 = vpop.xlane.xlu0 %1910
        %v1912 = vsel %vm1567, %v1228, 0.0
        %v1913 = vadd.f32 %v1227, %v1912
        %1914 = vadd.xlane.f32.xlu0 %v1913
        %v1915 = vpop.xlane.xlu0 %1914
        %v1916 = vsel %vm1567, %v1230, 0.0
        %v1917 = vadd.f32 %v1229, %v1916
        %1918 = vadd.xlane.f32.xlu0 %v1917
        %v1919 = vpop.xlane.xlu0 %1918
        %v1920 = vsel %vm1567, %v1232, 0.0
        %v1921 = vadd.f32 %v1231, %v1920
        %1922 = vadd.xlane.f32.xlu0 %v1921
        %v1923 = vpop.xlane.xlu0 %1922
        %v1924 = vsel %vm1567, %v1234, 0.0
        %v1925 = vadd.f32 %v1233, %v1924
        %1926 = vadd.xlane.f32.xlu0 %v1925
        %v1927 = vpop.xlane.xlu0 %1926
        %v1928 = vsel %vm1567, %v1236, 0.0
        %v1929 = vadd.f32 %v1235, %v1928
        %1930 = vadd.xlane.f32.xlu0 %v1929
        %v1931 = vpop.xlane.xlu0 %1930
        %v1932 = vsel %vm1567, %v1238, 0.0
        %v1933 = vadd.f32 %v1237, %v1932
        %1934 = vadd.xlane.f32.xlu0 %v1933
        %v1935 = vpop.xlane.xlu0 %1934
        %v1936 = vsel %vm1567, %v1240, 0.0
        %v1937 = vadd.f32 %v1239, %v1936
        %1938 = vadd.xlane.f32.xlu0 %v1937
        %v1939 = vpop.xlane.xlu0 %1938
        %v1940 = vsel %vm1567, %v1242, 0.0
        %v1941 = vadd.f32 %v1241, %v1940
        %1942 = vadd.xlane.f32.xlu0 %v1941
        %v1943 = vpop.xlane.xlu0 %1942
        %v1944 = vsel %vm1567, %v1244, 0.0
        %v1945 = vadd.f32 %v1243, %v1944
        %1946 = vadd.xlane.f32.xlu0 %v1945
        %v1947 = vpop.xlane.xlu0 %1946
        %v1948 = vsel %vm1567, %v1246, 0.0
        %v1949 = vadd.f32 %v1245, %v1948
        %1950 = vadd.xlane.f32.xlu0 %v1949
        %v1951 = vpop.xlane.xlu0 %1950
        %v1952 = vsel %vm1567, %v1248, 0.0
        %v1953 = vadd.f32 %v1247, %v1952
        %1954 = vadd.xlane.f32.xlu0 %v1953
        %v1955 = vpop.xlane.xlu0 %1954
        %v1956 = vsel %vm1567, %v1250, 0.0
        %v1957 = vadd.f32 %v1249, %v1956
        %1958 = vadd.xlane.f32.xlu0 %v1957
        %v1959 = vpop.xlane.xlu0 %1958
        %v1960 = vsel %vm1567, %v1252, 0.0
        %v1961 = vadd.f32 %v1251, %v1960
        %1962 = vadd.xlane.f32.xlu0 %v1961
        %v1963 = vpop.xlane.xlu0 %1962
        %v1964 = vsel %vm1567, %v1254, 0.0
        %v1965 = vadd.f32 %v1253, %v1964
        %1966 = vadd.xlane.f32.xlu0 %v1965
        %v1967 = vpop.xlane.xlu0 %1966
        %v1968 = vsel %vm1567, %v1256, 0.0
        %v1969 = vadd.f32 %v1255, %v1968
        %1970 = vadd.xlane.f32.xlu0 %v1969
        %v1971 = vpop.xlane.xlu0 %1970
        %v1972 = vsel %vm1567, %v1258, 0.0
        %v1973 = vadd.f32 %v1257, %v1972
        %1974 = vadd.xlane.f32.xlu0 %v1973
        %v1975 = vpop.xlane.xlu0 %1974
        %v1976 = vsel %vm1567, %v1260, 0.0
        %v1977 = vadd.f32 %v1259, %v1976
        %1978 = vadd.xlane.f32.xlu0 %v1977
        %v1979 = vpop.xlane.xlu0 %1978
        %v1980 = vsel %vm1567, %v1262, 0.0
        %v1981 = vadd.f32 %v1261, %v1980
        %1982 = vadd.xlane.f32.xlu0 %v1981
        %v1983 = vpop.xlane.xlu0 %1982
        %v1984 = vsel %vm1567, %v1264, 0.0
        %v1985 = vadd.f32 %v1263, %v1984
        %1986 = vadd.xlane.f32.xlu0 %v1985
        %v1987 = vpop.xlane.xlu0 %1986
        %v1988 = vsel %vm1567, %v1266, 0.0
        %v1989 = vadd.f32 %v1265, %v1988
        %1990 = vadd.xlane.f32.xlu0 %v1989
        %v1991 = vpop.xlane.xlu0 %1990
        %v1992 = vsel %vm1567, %v1268, 0.0
        %v1993 = vadd.f32 %v1267, %v1992
        %1994 = vadd.xlane.f32.xlu0 %v1993
        %v1995 = vpop.xlane.xlu0 %1994
        %v1996 = vsel %vm1567, %v1270, 0.0
        %v1997 = vadd.f32 %v1269, %v1996
        %1998 = vadd.xlane.f32.xlu0 %v1997
        %v1999 = vpop.xlane.xlu0 %1998
        %v2000 = vsel %vm1567, %v1272, 0.0
        %v2001 = vadd.f32 %v1271, %v2000
        %2002 = vadd.xlane.f32.xlu0 %v2001
        %v2003 = vpop.xlane.xlu0 %2002
        %v2004 = vsel %vm1567, %v1274, 0.0
        %v2005 = vadd.f32 %v1273, %v2004
        %2006 = vadd.xlane.f32.xlu0 %v2005
        %v2007 = vpop.xlane.xlu0 %2006
        %v2008 = vsel %vm1567, %v1276, 0.0
        %v2009 = vadd.f32 %v1275, %v2008
        %2010 = vadd.xlane.f32.xlu0 %v2009
        %v2011 = vpop.xlane.xlu0 %2010
        %v2012 = vsel %vm1567, %v1278, 0.0
        %v2013 = vadd.f32 %v1277, %v2012
        %2014 = vadd.xlane.f32.xlu0 %v2013
        %v2015 = vpop.xlane.xlu0 %2014
        %v2016 = vsel %vm1567, %v1280, 0.0
        %v2017 = vadd.f32 %v1279, %v2016
        %2018 = vadd.xlane.f32.xlu0 %v2017
        %v2019 = vpop.xlane.xlu0 %2018
        %v2020 = vsel %vm1567, %v1282, 0.0
        %v2021 = vadd.f32 %v1281, %v2020
        %2022 = vadd.xlane.f32.xlu0 %v2021
        %v2023 = vpop.xlane.xlu0 %2022
        %v2024 = vsel %vm1567, %v1284, 0.0
        %v2025 = vadd.f32 %v1283, %v2024
        %2026 = vadd.xlane.f32.xlu0 %v2025
        %v2027 = vpop.xlane.xlu0 %2026
        %v2028 = vsel %vm1567, %v1286, 0.0
        %v2029 = vadd.f32 %v1285, %v2028
        %2030 = vadd.xlane.f32.xlu0 %v2029
        %v2031 = vpop.xlane.xlu0 %2030
        %v2032 = vsel %vm1567, %v1288, 0.0
        %v2033 = vadd.f32 %v1287, %v2032
        %2034 = vadd.xlane.f32.xlu0 %v2033
        %v2035 = vpop.xlane.xlu0 %2034
        %v2036 = vsel %vm1567, %v1290, 0.0
        %v2037 = vadd.f32 %v1289, %v2036
        %2038 = vadd.xlane.f32.xlu0 %v2037
        %v2039 = vpop.xlane.xlu0 %2038
        %v2040 = vsel %vm1567, %v1292, 0.0
        %v2041 = vadd.f32 %v1291, %v2040
        %2042 = vadd.xlane.f32.xlu0 %v2041
        %v2043 = vpop.xlane.xlu0 %2042
        %v2044 = vsel %vm1567, %v1294, 0.0
        %v2045 = vadd.f32 %v1293, %v2044
        %2046 = vadd.xlane.f32.xlu0 %v2045
        %v2047 = vpop.xlane.xlu0 %2046
        %v2048 = vsel %vm1567, %v1296, 0.0
        %v2049 = vadd.f32 %v1295, %v2048
        %2050 = vadd.xlane.f32.xlu0 %v2049
        %v2051 = vpop.xlane.xlu0 %2050
        %v2052 = vsel %vm1567, %v1298, 0.0
        %v2053 = vadd.f32 %v1297, %v2052
        %2054 = vadd.xlane.f32.xlu0 %v2053
        %v2055 = vpop.xlane.xlu0 %2054
        %v2056 = vsel %vm1567, %v1300, 0.0
        %v2057 = vadd.f32 %v1299, %v2056
        %2058 = vadd.xlane.f32.xlu0 %v2057
        %v2059 = vpop.xlane.xlu0 %2058
        %v2060 = vsel %vm1567, %v1302, 0.0
        %v2061 = vadd.f32 %v1301, %v2060
        %2062 = vadd.xlane.f32.xlu0 %v2061
        %v2063 = vpop.xlane.xlu0 %2062
        %v2064 = vsel %vm1567, %v1304, 0.0
        %v2065 = vadd.f32 %v1303, %v2064
        %2066 = vadd.xlane.f32.xlu0 %v2065
        %v2067 = vpop.xlane.xlu0 %2066
        %v2068 = vsel %vm1567, %v1306, 0.0
        %v2069 = vadd.f32 %v1305, %v2068
        %2070 = vadd.xlane.f32.xlu0 %v2069
        %v2071 = vpop.xlane.xlu0 %2070
        %v2072 = vsel %vm1567, %v1308, 0.0
        %v2073 = vadd.f32 %v1307, %v2072
        %2074 = vadd.xlane.f32.xlu0 %v2073
        %v2075 = vpop.xlane.xlu0 %2074
        %v2076 = vsel %vm1567, %v1310, 0.0
        %v2077 = vadd.f32 %v1309, %v2076
        %2078 = vadd.xlane.f32.xlu0 %v2077
        %v2079 = vpop.xlane.xlu0 %2078
        %v2080 = vsel %vm1567, %v1312, 0.0
        %v2081 = vadd.f32 %v1311, %v2080
        %2082 = vadd.xlane.f32.xlu0 %v2081
        %v2083 = vpop.xlane.xlu0 %2082
        %v2084 = vsel %vm1567, %v1314, 0.0
        %v2085 = vadd.f32 %v1313, %v2084
        %2086 = vadd.xlane.f32.xlu0 %v2085
        %v2087 = vpop.xlane.xlu0 %2086
        %v2088 = vsel %vm1567, %v1316, 0.0
        %v2089 = vadd.f32 %v1315, %v2088
        %2090 = vadd.xlane.f32.xlu0 %v2089
        %v2091 = vpop.xlane.xlu0 %2090
        %v2092 = vsel %vm1567, %v1318, 0.0
        %v2093 = vadd.f32 %v1317, %v2092
        %2094 = vadd.xlane.f32.xlu0 %v2093
        %v2095 = vpop.xlane.xlu0 %2094
        %v2096 = vsel %vm1567, %v1320, 0.0
        %v2097 = vadd.f32 %v1319, %v2096
        %2098 = vadd.xlane.f32.xlu0 %v2097
        %v2099 = vpop.xlane.xlu0 %2098
        %v2100 = vsel %vm1567, %v1322, 0.0
        %v2101 = vadd.f32 %v1321, %v2100
        %2102 = vadd.xlane.f32.xlu0 %v2101
        %v2103 = vpop.xlane.xlu0 %2102
        %v2104 = vsel %vm1567, %v1324, 0.0
        %v2105 = vadd.f32 %v1323, %v2104
        %2106 = vadd.xlane.f32.xlu0 %v2105
        %v2107 = vpop.xlane.xlu0 %2106
        %v2108 = vsel %vm1567, %v1326, 0.0
        %v2109 = vadd.f32 %v1325, %v2108
        %2110 = vadd.xlane.f32.xlu0 %v2109
        %v2111 = vpop.xlane.xlu0 %2110
        %v2112 = vsel %vm1567, %v1328, 0.0
        %v2113 = vadd.f32 %v1327, %v2112
        %2114 = vadd.xlane.f32.xlu0 %v2113
        %v2115 = vpop.xlane.xlu0 %2114
        %v2116 = vsel %vm1567, %v1330, 0.0
        %v2117 = vadd.f32 %v1329, %v2116
        %2118 = vadd.xlane.f32.xlu0 %v2117
        %v2119 = vpop.xlane.xlu0 %2118
        %v2120 = vsel %vm1567, %v1332, 0.0
        %v2121 = vadd.f32 %v1331, %v2120
        %2122 = vadd.xlane.f32.xlu0 %v2121
        %v2123 = vpop.xlane.xlu0 %2122
        %v2124 = vsel %vm1567, %v1334, 0.0
        %v2125 = vadd.f32 %v1333, %v2124
        %2126 = vadd.xlane.f32.xlu0 %v2125
        %v2127 = vpop.xlane.xlu0 %2126
        %v2128 = vsel %vm1567, %v1336, 0.0
        %v2129 = vadd.f32 %v1335, %v2128
        %2130 = vadd.xlane.f32.xlu0 %v2129
        %v2131 = vpop.xlane.xlu0 %2130
        %v2132 = vsel %vm1567, %v1338, 0.0
        %v2133 = vadd.f32 %v1337, %v2132
        %2134 = vadd.xlane.f32.xlu0 %v2133
        %v2135 = vpop.xlane.xlu0 %2134
        %v2136 = vsel %vm1567, %v1340, 0.0
        %v2137 = vadd.f32 %v1339, %v2136
        %2138 = vadd.xlane.f32.xlu0 %v2137
        %v2139 = vpop.xlane.xlu0 %2138
        %v2140 = vsel %vm1567, %v1342, 0.0
        %v2141 = vadd.f32 %v1341, %v2140
        %2142 = vadd.xlane.f32.xlu0 %v2141
        %v2143 = vpop.xlane.xlu0 %2142
        %v2144 = vsel %vm1567, %v1344, 0.0
        %v2145 = vadd.f32 %v1343, %v2144
        %2146 = vadd.xlane.f32.xlu0 %v2145
        %v2147 = vpop.xlane.xlu0 %2146
        %v2148 = vsel %vm1567, %v1346, 0.0
        %v2149 = vadd.f32 %v1345, %v2148
        %2150 = vadd.xlane.f32.xlu0 %v2149
        %v2151 = vpop.xlane.xlu0 %2150
        %v2152 = vsel %vm1567, %v1348, 0.0
        %v2153 = vadd.f32 %v1347, %v2152
        %2154 = vadd.xlane.f32.xlu0 %v2153
        %v2155 = vpop.xlane.xlu0 %2154
        %v2156 = vsel %vm1567, %v1350, 0.0
        %v2157 = vadd.f32 %v1349, %v2156
        %2158 = vadd.xlane.f32.xlu0 %v2157
        %v2159 = vpop.xlane.xlu0 %2158
        %v2160 = vsel %vm1567, %v1352, 0.0
        %v2161 = vadd.f32 %v1351, %v2160
        %2162 = vadd.xlane.f32.xlu0 %v2161
        %v2163 = vpop.xlane.xlu0 %2162
        %v2164 = vsel %vm1567, %v1354, 0.0
        %v2165 = vadd.f32 %v1353, %v2164
        %2166 = vadd.xlane.f32.xlu0 %v2165
        %v2167 = vpop.xlane.xlu0 %2166
        %v2168 = vsel %vm1567, %v1356, 0.0
        %v2169 = vadd.f32 %v1355, %v2168
        %2170 = vadd.xlane.f32.xlu0 %v2169
        %v2171 = vpop.xlane.xlu0 %2170
        %v2172 = vsel %vm1567, %v1358, 0.0
        %v2173 = vadd.f32 %v1357, %v2172
        %2174 = vadd.xlane.f32.xlu0 %v2173
        %v2175 = vpop.xlane.xlu0 %2174
        %v2176 = vsel %vm1567, %v1360, 0.0
        %v2177 = vadd.f32 %v1359, %v2176
        %2178 = vadd.xlane.f32.xlu0 %v2177
        %v2179 = vpop.xlane.xlu0 %2178
        %v2180 = vsel %vm1567, %v1362, 0.0
        %v2181 = vadd.f32 %v1361, %v2180
        %2182 = vadd.xlane.f32.xlu0 %v2181
        %v2183 = vpop.xlane.xlu0 %2182
        %v2184 = vsel %vm1567, %v1364, 0.0
        %v2185 = vadd.f32 %v1363, %v2184
        %2186 = vadd.xlane.f32.xlu0 %v2185
        %v2187 = vpop.xlane.xlu0 %2186
        %v2188 = vsel %vm1567, %v1366, 0.0
        %v2189 = vadd.f32 %v1365, %v2188
        %2190 = vadd.xlane.f32.xlu0 %v2189
        %v2191 = vpop.xlane.xlu0 %2190
        %v2192 = vsel %vm1567, %v1368, 0.0
        %v2193 = vadd.f32 %v1367, %v2192
        %2194 = vadd.xlane.f32.xlu0 %v2193
        %v2195 = vpop.xlane.xlu0 %2194
        %v2196 = vsel %vm1567, %v1370, 0.0
        %v2197 = vadd.f32 %v1369, %v2196
        %2198 = vadd.xlane.f32.xlu0 %v2197
        %v2199 = vpop.xlane.xlu0 %2198
        %v2200 = vsel %vm1567, %v1372, 0.0
        %v2201 = vadd.f32 %v1371, %v2200
        %2202 = vadd.xlane.f32.xlu0 %v2201
        %v2203 = vpop.xlane.xlu0 %2202
        %v2204 = vsel %vm1567, %v1374, 0.0
        %v2205 = vadd.f32 %v1373, %v2204
        %2206 = vadd.xlane.f32.xlu0 %v2205
        %v2207 = vpop.xlane.xlu0 %2206
        %v2208 = vsel %vm1567, %v1376, 0.0
        %v2209 = vadd.f32 %v1375, %v2208
        %2210 = vadd.xlane.f32.xlu0 %v2209
        %v2211 = vpop.xlane.xlu0 %2210
        %v2212 = vsel %vm1567, %v1378, 0.0
        %v2213 = vadd.f32 %v1377, %v2212
        %2214 = vadd.xlane.f32.xlu0 %v2213
        %v2215 = vpop.xlane.xlu0 %2214
        %v2216 = vsel %vm1567, %v1380, 0.0
        %v2217 = vadd.f32 %v1379, %v2216
        %2218 = vadd.xlane.f32.xlu0 %v2217
        %v2219 = vpop.xlane.xlu0 %2218
        %v2220 = vsel %vm1567, %v1382, 0.0
        %v2221 = vadd.f32 %v1381, %v2220
        %2222 = vadd.xlane.f32.xlu0 %v2221
        %v2223 = vpop.xlane.xlu0 %2222
        %v2224 = vsel %vm1567, %v1384, 0.0
        %v2225 = vadd.f32 %v1383, %v2224
        %2226 = vadd.xlane.f32.xlu0 %v2225
        %v2227 = vpop.xlane.xlu0 %2226
        %v2228 = vsel %vm1567, %v1386, 0.0
        %v2229 = vadd.f32 %v1385, %v2228
        %2230 = vadd.xlane.f32.xlu0 %v2229
        %v2231 = vpop.xlane.xlu0 %2230
        %v2232 = vsel %vm1567, %v1388, 0.0
        %v2233 = vadd.f32 %v1387, %v2232
        %2234 = vadd.xlane.f32.xlu0 %v2233
        %v2235 = vpop.xlane.xlu0 %2234
        %v2236 = vsel %vm1567, %v1390, 0.0
        %v2237 = vadd.f32 %v1389, %v2236
        %2238 = vadd.xlane.f32.xlu0 %v2237
        %v2239 = vpop.xlane.xlu0 %2238
        %v2240 = vsel %vm1567, %v1392, 0.0
        %v2241 = vadd.f32 %v1391, %v2240
        %2242 = vadd.xlane.f32.xlu0 %v2241
        %v2243 = vpop.xlane.xlu0 %2242
        %v2244 = vsel %vm1567, %v1394, 0.0
        %v2245 = vadd.f32 %v1393, %v2244
        %2246 = vadd.xlane.f32.xlu0 %v2245
        %v2247 = vpop.xlane.xlu0 %2246
        %v2248 = vsel %vm1567, %v1396, 0.0
        %v2249 = vadd.f32 %v1395, %v2248
        %2250 = vadd.xlane.f32.xlu0 %v2249
        %v2251 = vpop.xlane.xlu0 %2250
        %v2252 = vsel %vm1567, %v1398, 0.0
        %v2253 = vadd.f32 %v1397, %v2252
        %2254 = vadd.xlane.f32.xlu0 %v2253
        %v2255 = vpop.xlane.xlu0 %2254
        %v2256 = vsel %vm1567, %v1400, 0.0
        %v2257 = vadd.f32 %v1399, %v2256
        %2258 = vadd.xlane.f32.xlu0 %v2257
        %v2259 = vpop.xlane.xlu0 %2258
        %v2260 = vsel %vm1567, %v1402, 0.0
        %v2261 = vadd.f32 %v1401, %v2260
        %2262 = vadd.xlane.f32.xlu0 %v2261
        %v2263 = vpop.xlane.xlu0 %2262
        %v2264 = vsel %vm1567, %v1404, 0.0
        %v2265 = vadd.f32 %v1403, %v2264
        %2266 = vadd.xlane.f32.xlu0 %v2265
        %v2267 = vpop.xlane.xlu0 %2266
        %v2268 = vsel %vm1567, %v1406, 0.0
        %v2269 = vadd.f32 %v1405, %v2268
        %2270 = vadd.xlane.f32.xlu0 %v2269
        %v2271 = vpop.xlane.xlu0 %2270
        %v2272 = vsel %vm1567, %v1408, 0.0
        %v2273 = vadd.f32 %v1407, %v2272
        %2274 = vadd.xlane.f32.xlu0 %v2273
        %v2275 = vpop.xlane.xlu0 %2274
        %v2276 = vsel %vm1567, %v1410, 0.0
        %v2277 = vadd.f32 %v1409, %v2276
        %2278 = vadd.xlane.f32.xlu0 %v2277
        %v2279 = vpop.xlane.xlu0 %2278
        %v2280 = vsel %vm1567, %v1412, 0.0
        %v2281 = vadd.f32 %v1411, %v2280
        %2282 = vadd.xlane.f32.xlu0 %v2281
        %v2283 = vpop.xlane.xlu0 %2282
        %v2284 = vsel %vm1567, %v1414, 0.0
        %v2285 = vadd.f32 %v1413, %v2284
        %2286 = vadd.xlane.f32.xlu0 %v2285
        %v2287 = vpop.xlane.xlu0 %2286
        %v2288 = vsel %vm1567, %v1416, 0.0
        %v2289 = vadd.f32 %v1415, %v2288
        %2290 = vadd.xlane.f32.xlu0 %v2289
        %v2291 = vpop.xlane.xlu0 %2290
        %v2292 = vsel %vm1567, %v1418, 0.0
        %v2293 = vadd.f32 %v1417, %v2292
        %2294 = vadd.xlane.f32.xlu0 %v2293
        %v2295 = vpop.xlane.xlu0 %2294
        %v2296 = vsel %vm1567, %v1420, 0.0
        %v2297 = vadd.f32 %v1419, %v2296
        %2298 = vadd.xlane.f32.xlu0 %v2297
        %v2299 = vpop.xlane.xlu0 %2298
        %v2300 = vsel %vm1567, %v1422, 0.0
        %v2301 = vadd.f32 %v1421, %v2300
        %2302 = vadd.xlane.f32.xlu0 %v2301
        %v2303 = vpop.xlane.xlu0 %2302
        %v2304 = vsel %vm1567, %v1424, 0.0
        %v2305 = vadd.f32 %v1423, %v2304
        %2306 = vadd.xlane.f32.xlu0 %v2305
        %v2307 = vpop.xlane.xlu0 %2306
        %v2308 = vsel %vm1567, %v1426, 0.0
        %v2309 = vadd.f32 %v1425, %v2308
        %2310 = vadd.xlane.f32.xlu0 %v2309
        %v2311 = vpop.xlane.xlu0 %2310
        %v2312 = vsel %vm1567, %v1428, 0.0
        %v2313 = vadd.f32 %v1427, %v2312
        %2314 = vadd.xlane.f32.xlu0 %v2313
        %v2315 = vpop.xlane.xlu0 %2314
        %v2316 = vsel %vm1567, %v1430, 0.0
        %v2317 = vadd.f32 %v1429, %v2316
        %2318 = vadd.xlane.f32.xlu0 %v2317
        %v2319 = vpop.xlane.xlu0 %2318
        %v2320 = vsel %vm1567, %v1432, 0.0
        %v2321 = vadd.f32 %v1431, %v2320
        %2322 = vadd.xlane.f32.xlu0 %v2321
        %v2323 = vpop.xlane.xlu0 %2322
        %v2324 = vsel %vm1567, %v1434, 0.0
        %v2325 = vadd.f32 %v1433, %v2324
        %2326 = vadd.xlane.f32.xlu0 %v2325
        %v2327 = vpop.xlane.xlu0 %2326
        %v2328 = vsel %vm1567, %v1436, 0.0
        %v2329 = vadd.f32 %v1435, %v2328
        %2330 = vadd.xlane.f32.xlu0 %v2329
        %v2331 = vpop.xlane.xlu0 %2330
        %v2332 = vsel %vm1567, %v1438, 0.0
        %v2333 = vadd.f32 %v1437, %v2332
        %2334 = vadd.xlane.f32.xlu0 %v2333
        %v2335 = vpop.xlane.xlu0 %2334
        %v2336 = vsel %vm1567, %v1440, 0.0
        %v2337 = vadd.f32 %v1439, %v2336
        %2338 = vadd.xlane.f32.xlu0 %v2337
        %v2339 = vpop.xlane.xlu0 %2338
        %v2340 = vsel %vm1567, %v1442, 0.0
        %v2341 = vadd.f32 %v1441, %v2340
        %2342 = vadd.xlane.f32.xlu0 %v2341
        %v2343 = vpop.xlane.xlu0 %2342
        %v2344 = vsel %vm1567, %v1444, 0.0
        %v2345 = vadd.f32 %v1443, %v2344
        %2346 = vadd.xlane.f32.xlu0 %v2345
        %v2347 = vpop.xlane.xlu0 %2346
        %v2348 = vsel %vm1567, %v1446, 0.0
        %v2349 = vadd.f32 %v1445, %v2348
        %2350 = vadd.xlane.f32.xlu0 %v2349
        %v2351 = vpop.xlane.xlu0 %2350
        %v2352 = vsel %vm1567, %v1448, 0.0
        %v2353 = vadd.f32 %v1447, %v2352
        %2354 = vadd.xlane.f32.xlu0 %v2353
        %v2355 = vpop.xlane.xlu0 %2354
        %v2356 = vsel %vm1567, %v1450, 0.0
        %v2357 = vadd.f32 %v1449, %v2356
        %2358 = vadd.xlane.f32.xlu0 %v2357
        %v2359 = vpop.xlane.xlu0 %2358
        %v2360 = vsel %vm1567, %v1452, 0.0
        %v2361 = vadd.f32 %v1451, %v2360
        %2362 = vadd.xlane.f32.xlu0 %v2361
        %v2363 = vpop.xlane.xlu0 %2362
        %v2364 = vsel %vm1567, %v1454, 0.0
        %v2365 = vadd.f32 %v1453, %v2364
        %2366 = vadd.xlane.f32.xlu0 %v2365
        %v2367 = vpop.xlane.xlu0 %2366
        %v2368 = vsel %vm1567, %v1456, 0.0
        %v2369 = vadd.f32 %v1455, %v2368
        %2370 = vadd.xlane.f32.xlu0 %v2369
        %v2371 = vpop.xlane.xlu0 %2370
        %v2372 = vsel %vm1567, %v1458, 0.0
        %v2373 = vadd.f32 %v1457, %v2372
        %2374 = vadd.xlane.f32.xlu0 %v2373
        %v2375 = vpop.xlane.xlu0 %2374
        %v2376 = vsel %vm1567, %v1460, 0.0
        %v2377 = vadd.f32 %v1459, %v2376
        %2378 = vadd.xlane.f32.xlu0 %v2377
        %v2379 = vpop.xlane.xlu0 %2378
        %v2380 = vsel %vm1567, %v1462, 0.0
        %v2381 = vadd.f32 %v1461, %v2380
        %2382 = vadd.xlane.f32.xlu0 %v2381
        %v2383 = vpop.xlane.xlu0 %2382
        %v2384 = vsel %vm1567, %v1464, 0.0
        %v2385 = vadd.f32 %v1463, %v2384
        %2386 = vadd.xlane.f32.xlu0 %v2385
        %v2387 = vpop.xlane.xlu0 %2386
        %v2388 = vsel %vm1567, %v1466, 0.0
        %v2389 = vadd.f32 %v1465, %v2388
        %2390 = vadd.xlane.f32.xlu0 %v2389
        %v2391 = vpop.xlane.xlu0 %2390
        %v2392 = vsel %vm1567, %v1468, 0.0
        %v2393 = vadd.f32 %v1467, %v2392
        %2394 = vadd.xlane.f32.xlu0 %v2393
        %v2395 = vpop.xlane.xlu0 %2394
        %v2396 = vsel %vm1567, %v1470, 0.0
        %v2397 = vadd.f32 %v1469, %v2396
        %2398 = vadd.xlane.f32.xlu0 %v2397
        %v2399 = vpop.xlane.xlu0 %2398
        %v2400 = vsel %vm1567, %v1472, 0.0
        %v2401 = vadd.f32 %v1471, %v2400
        %2402 = vadd.xlane.f32.xlu0 %v2401
        %v2403 = vpop.xlane.xlu0 %2402
        %v2404 = vsel %vm1567, %v1474, 0.0
        %v2405 = vadd.f32 %v1473, %v2404
        %2406 = vadd.xlane.f32.xlu0 %v2405
        %v2407 = vpop.xlane.xlu0 %2406
        %v2408 = vsel %vm1567, %v1476, 0.0
        %v2409 = vadd.f32 %v1475, %v2408
        %2410 = vadd.xlane.f32.xlu0 %v2409
        %v2411 = vpop.xlane.xlu0 %2410
        %v2412 = vsel %vm1567, %v1478, 0.0
        %v2413 = vadd.f32 %v1477, %v2412
        %2414 = vadd.xlane.f32.xlu0 %v2413
        %v2415 = vpop.xlane.xlu0 %2414
        %v2416 = vsel %vm1567, %v1480, 0.0
        %v2417 = vadd.f32 %v1479, %v2416
        %2418 = vadd.xlane.f32.xlu0 %v2417
        %v2419 = vpop.xlane.xlu0 %2418
        %v2420 = vsel %vm1567, %v1482, 0.0
        %v2421 = vadd.f32 %v1481, %v2420
        %2422 = vadd.xlane.f32.xlu0 %v2421
        %v2423 = vpop.xlane.xlu0 %2422
        %v2424 = vsel %vm1567, %v1484, 0.0
        %v2425 = vadd.f32 %v1483, %v2424
        %2426 = vadd.xlane.f32.xlu0 %v2425
        %v2427 = vpop.xlane.xlu0 %2426
        %v2428 = vsel %vm1567, %v1486, 0.0
        %v2429 = vadd.f32 %v1485, %v2428
        %2430 = vadd.xlane.f32.xlu0 %v2429
        %v2431 = vpop.xlane.xlu0 %2430
        %v2432 = vsel %vm1567, %v1488, 0.0
        %v2433 = vadd.f32 %v1487, %v2432
        %2434 = vadd.xlane.f32.xlu0 %v2433
        %v2435 = vpop.xlane.xlu0 %2434
        %v2436 = vsel %vm1567, %v1490, 0.0
        %v2437 = vadd.f32 %v1489, %v2436
        %2438 = vadd.xlane.f32.xlu0 %v2437
        %v2439 = vpop.xlane.xlu0 %2438
        %v2440 = vsel %vm1567, %v1492, 0.0
        %v2441 = vadd.f32 %v1491, %v2440
        %2442 = vadd.xlane.f32.xlu0 %v2441
        %v2443 = vpop.xlane.xlu0 %2442
        %v2444 = vsel %vm1567, %v1494, 0.0
        %v2445 = vadd.f32 %v1493, %v2444
        %2446 = vadd.xlane.f32.xlu0 %v2445
        %v2447 = vpop.xlane.xlu0 %2446
        %v2448 = vsel %vm1567, %v1496, 0.0
        %v2449 = vadd.f32 %v1495, %v2448
        %2450 = vadd.xlane.f32.xlu0 %v2449
        %v2451 = vpop.xlane.xlu0 %2450
        %v2452 = vsel %vm1567, %v1498, 0.0
        %v2453 = vadd.f32 %v1497, %v2452
        %2454 = vadd.xlane.f32.xlu0 %v2453
        %v2455 = vpop.xlane.xlu0 %2454
        %v2456 = vsel %vm1567, %v1500, 0.0
        %v2457 = vadd.f32 %v1499, %v2456
        %2458 = vadd.xlane.f32.xlu0 %v2457
        %v2459 = vpop.xlane.xlu0 %2458
        %v2460 = vsel %vm1567, %v1502, 0.0
        %v2461 = vadd.f32 %v1501, %v2460
        %2462 = vadd.xlane.f32.xlu0 %v2461
        %v2463 = vpop.xlane.xlu0 %2462
        %v2464 = vsel %vm1567, %v1504, 0.0
        %v2465 = vadd.f32 %v1503, %v2464
        %2466 = vadd.xlane.f32.xlu0 %v2465
        %v2467 = vpop.xlane.xlu0 %2466
        %v2468 = vsel %vm1567, %v1506, 0.0
        %v2469 = vadd.f32 %v1505, %v2468
        %2470 = vadd.xlane.f32.xlu0 %v2469
        %v2471 = vpop.xlane.xlu0 %2470
        %v2472 = vsel %vm1567, %v1508, 0.0
        %v2473 = vadd.f32 %v1507, %v2472
        %2474 = vadd.xlane.f32.xlu0 %v2473
        %v2475 = vpop.xlane.xlu0 %2474
        %v2476 = vsel %vm1567, %v1510, 0.0
        %v2477 = vadd.f32 %v1509, %v2476
        %2478 = vadd.xlane.f32.xlu0 %v2477
        %v2479 = vpop.xlane.xlu0 %2478
        %v2480 = vsel %vm1567, %v1512, 0.0
        %v2481 = vadd.f32 %v1511, %v2480
        %2482 = vadd.xlane.f32.xlu0 %v2481
        %v2483 = vpop.xlane.xlu0 %2482
        %v2484 = vsel %vm1567, %v1514, 0.0
        %v2485 = vadd.f32 %v1513, %v2484
        %2486 = vadd.xlane.f32.xlu0 %v2485
        %v2487 = vpop.xlane.xlu0 %2486
        %v2488 = vsel %vm1567, %v1516, 0.0
        %v2489 = vadd.f32 %v1515, %v2488
        %2490 = vadd.xlane.f32.xlu0 %v2489
        %v2491 = vpop.xlane.xlu0 %2490
        %v2492 = vsel %vm1567, %v1518, 0.0
        %v2493 = vadd.f32 %v1517, %v2492
        %2494 = vadd.xlane.f32.xlu0 %v2493
        %v2495 = vpop.xlane.xlu0 %2494
        %v2496 = vsel %vm1567, %v1520, 0.0
        %v2497 = vadd.f32 %v1519, %v2496
        %2498 = vadd.xlane.f32.xlu0 %v2497
        %v2499 = vpop.xlane.xlu0 %2498
        %v2500 = vsel %vm1567, %v1522, 0.0
        %v2501 = vadd.f32 %v1521, %v2500
        %2502 = vadd.xlane.f32.xlu0 %v2501
        %v2503 = vpop.xlane.xlu0 %2502
        %v2504 = vsel %vm1567, %v1524, 0.0
        %v2505 = vadd.f32 %v1523, %v2504
        %2506 = vadd.xlane.f32.xlu0 %v2505
        %v2507 = vpop.xlane.xlu0 %2506
        %v2508 = vsel %vm1567, %v1526, 0.0
        %v2509 = vadd.f32 %v1525, %v2508
        %2510 = vadd.xlane.f32.xlu0 %v2509
        %v2511 = vpop.xlane.xlu0 %2510
        %v2512 = vsel %vm1567, %v1528, 0.0
        %v2513 = vadd.f32 %v1527, %v2512
        %2514 = vadd.xlane.f32.xlu0 %v2513
        %v2515 = vpop.xlane.xlu0 %2514
        %v2516 = vsel %vm1567, %v1530, 0.0
        %v2517 = vadd.f32 %v1529, %v2516
        %2518 = vadd.xlane.f32.xlu0 %v2517
        %v2519 = vpop.xlane.xlu0 %2518
        %v2520 = vsel %vm1567, %v1532, 0.0
        %v2521 = vadd.f32 %v1531, %v2520
        %2522 = vadd.xlane.f32.xlu0 %v2521
        %v2523 = vpop.xlane.xlu0 %2522
        %v2524 = vsel %vm1567, %v1534, 0.0
        %v2525 = vadd.f32 %v1533, %v2524
        %2526 = vadd.xlane.f32.xlu0 %v2525
        %v2527 = vpop.xlane.xlu0 %2526
        %v2528 = vsel %vm1567, %v1536, 0.0
        %v2529 = vadd.f32 %v1535, %v2528
        %2530 = vadd.xlane.f32.xlu0 %v2529
        %v2531 = vpop.xlane.xlu0 %2530
        %v2532 = vsel %vm1567, %v1538, 0.0
        %v2533 = vadd.f32 %v1537, %v2532
        %2534 = vadd.xlane.f32.xlu0 %v2533
        %v2535 = vpop.xlane.xlu0 %2534
        %v2536 = vsel %vm1567, %v1540, 0.0
        %v2537 = vadd.f32 %v1539, %v2536
        %2538 = vadd.xlane.f32.xlu0 %v2537
        %v2539 = vpop.xlane.xlu0 %2538
        %v2540 = vsel %vm1567, %v1542, 0.0
        %v2541 = vadd.f32 %v1541, %v2540
        %2542 = vadd.xlane.f32.xlu0 %v2541
        %v2543 = vpop.xlane.xlu0 %2542
        %v2544 = vsel %vm1567, %v1544, 0.0
        %v2545 = vadd.f32 %v1543, %v2544
        %2546 = vadd.xlane.f32.xlu0 %v2545
        %v2547 = vpop.xlane.xlu0 %2546
        %v2548 = vsel %vm1567, %v1546, 0.0
        %v2549 = vadd.f32 %v1545, %v2548
        %2550 = vadd.xlane.f32.xlu0 %v2549
        %v2551 = vpop.xlane.xlu0 %2550
        %v2552 = vsel %vm1567, %v1548, 0.0
        %v2553 = vadd.f32 %v1547, %v2552
        %2554 = vadd.xlane.f32.xlu0 %v2553
        %v2555 = vpop.xlane.xlu0 %2554
        %v2556 = vsel %vm1567, %v1550, 0.0
        %v2557 = vadd.f32 %v1549, %v2556
        %2558 = vadd.xlane.f32.xlu0 %v2557
        %v2559 = vpop.xlane.xlu0 %2558
        %v2560 = vsel %vm1567, %v1552, 0.0
        %v2561 = vadd.f32 %v1551, %v2560
        %2562 = vadd.xlane.f32.xlu0 %v2561
        %v2563 = vpop.xlane.xlu0 %2562
        %v2564 = vsel %vm1567, %v1554, 0.0
        %v2565 = vadd.f32 %v1553, %v2564
        %2566 = vadd.xlane.f32.xlu0 %v2565
        %v2567 = vpop.xlane.xlu0 %2566
        %v2568 = vsel %vm1567, %v1556, 0.0
        %v2569 = vadd.f32 %v1555, %v2568
        %2570 = vadd.xlane.f32.xlu0 %v2569
        %v2571 = vpop.xlane.xlu0 %2570
        %v2572 = vsel %vm1567, %v1558, 0.0
        %v2573 = vadd.f32 %v1557, %v2572
        %2574 = vadd.xlane.f32.xlu0 %v2573
        %v2575 = vpop.xlane.xlu0 %2574
        %v2576 = vsel %vm1567, %v1560, 0.0
        %v2577 = vadd.f32 %v1559, %v2576
        %2578 = vadd.xlane.f32.xlu0 %v2577
        %v2579 = vpop.xlane.xlu0 %2578
        %v2580 = vsel %vm1567, %v1562, 0.0
        %v2581 = vadd.f32 %v1561, %v2580
        %2582 = vadd.xlane.f32.xlu0 %v2581
        %v2583 = vpop.xlane.xlu0 %2582
        %v2584 = vsel %vm1567, %v1564, 0.0
        %v2585 = vadd.f32 %v1563, %v2584
        %2586 = vadd.xlane.f32.xlu0 %v2585
        %v2587 = vpop.xlane.xlu0 %2586
        %v2588 = vsel %vm1567, %v1566, 0.0
        %v2589 = vadd.f32 %v1565, %v2588
        %2590 = vadd.xlane.f32.xlu0 %v2589
        %v2591 = vpop.xlane.xlu0 %2590
        %v2593 = vrot.slane %v528, 7
        %s2594 = vtos %v2593
        %v2595 = vstv %s2594
        %v2597 = vadd.f32 %v1571, %v2595
        %v2598 = vadd.f32 %v1575, %v2595
        %v2599 = vadd.f32 %v1579, %v2595
        %v2600 = vadd.f32 %v1583, %v2595
        %v2601 = vadd.f32 %v1587, %v2595
        %v2602 = vadd.f32 %v1591, %v2595
        %v2603 = vadd.f32 %v1595, %v2595
        %v2604 = vadd.f32 %v1599, %v2595
        %v2605 = vadd.f32 %v1603, %v2595
        %v2606 = vadd.f32 %v1607, %v2595
        %v2607 = vadd.f32 %v1611, %v2595
        %v2608 = vadd.f32 %v1615, %v2595
        %v2609 = vadd.f32 %v1619, %v2595
        %v2610 = vadd.f32 %v1623, %v2595
        %v2611 = vadd.f32 %v1627, %v2595
        %v2612 = vadd.f32 %v1631, %v2595
        %v2613 = vadd.f32 %v1635, %v2595
        %v2614 = vadd.f32 %v1639, %v2595
        %v2615 = vadd.f32 %v1643, %v2595
        %v2616 = vadd.f32 %v1647, %v2595
        %v2617 = vadd.f32 %v1651, %v2595
        %v2618 = vadd.f32 %v1655, %v2595
        %v2619 = vadd.f32 %v1659, %v2595
        %v2620 = vadd.f32 %v1663, %v2595
        %v2621 = vadd.f32 %v1667, %v2595
        %v2622 = vadd.f32 %v1671, %v2595
        %v2623 = vadd.f32 %v1675, %v2595
        %v2624 = vadd.f32 %v1679, %v2595
        %v2625 = vadd.f32 %v1683, %v2595
        %v2626 = vadd.f32 %v1687, %v2595
        %v2627 = vadd.f32 %v1691, %v2595
        %v2628 = vadd.f32 %v1695, %v2595
        %v2629 = vadd.f32 %v1699, %v2595
        %v2630 = vadd.f32 %v1703, %v2595
        %v2631 = vadd.f32 %v1707, %v2595
        %v2632 = vadd.f32 %v1711, %v2595
        %v2633 = vadd.f32 %v1715, %v2595
        %v2634 = vadd.f32 %v1719, %v2595
        %v2635 = vadd.f32 %v1723, %v2595
        %v2636 = vadd.f32 %v1727, %v2595
        %v2637 = vadd.f32 %v1731, %v2595
        %v2638 = vadd.f32 %v1735, %v2595
        %v2639 = vadd.f32 %v1739, %v2595
        %v2640 = vadd.f32 %v1743, %v2595
        %v2641 = vadd.f32 %v1747, %v2595
        %v2642 = vadd.f32 %v1751, %v2595
        %v2643 = vadd.f32 %v1755, %v2595
        %v2644 = vadd.f32 %v1759, %v2595
        %v2645 = vadd.f32 %v1763, %v2595
        %v2646 = vadd.f32 %v1767, %v2595
        %v2647 = vadd.f32 %v1771, %v2595
        %v2648 = vadd.f32 %v1775, %v2595
        %v2649 = vadd.f32 %v1779, %v2595
        %v2650 = vadd.f32 %v1783, %v2595
        %v2651 = vadd.f32 %v1787, %v2595
        %v2652 = vadd.f32 %v1791, %v2595
        %v2653 = vadd.f32 %v1795, %v2595
        %v2654 = vadd.f32 %v1799, %v2595
        %v2655 = vadd.f32 %v1803, %v2595
        %v2656 = vadd.f32 %v1807, %v2595
        %v2657 = vadd.f32 %v1811, %v2595
        %v2658 = vadd.f32 %v1815, %v2595
        %v2659 = vadd.f32 %v1819, %v2595
        %v2660 = vadd.f32 %v1823, %v2595
        %v2661 = vadd.f32 %v1827, %v2595
        %v2662 = vadd.f32 %v1831, %v2595
        %v2663 = vadd.f32 %v1835, %v2595
        %v2664 = vadd.f32 %v1839, %v2595
        %v2665 = vadd.f32 %v1843, %v2595
        %v2666 = vadd.f32 %v1847, %v2595
        %v2667 = vadd.f32 %v1851, %v2595
        %v2668 = vadd.f32 %v1855, %v2595
        %v2669 = vadd.f32 %v1859, %v2595
        %v2670 = vadd.f32 %v1863, %v2595
        %v2671 = vadd.f32 %v1867, %v2595
        %v2672 = vadd.f32 %v1871, %v2595
        %v2673 = vadd.f32 %v1875, %v2595
        %v2674 = vadd.f32 %v1879, %v2595
        %v2675 = vadd.f32 %v1883, %v2595
        %v2676 = vadd.f32 %v1887, %v2595
        %v2677 = vadd.f32 %v1891, %v2595
        %v2678 = vadd.f32 %v1895, %v2595
        %v2679 = vadd.f32 %v1899, %v2595
        %v2680 = vadd.f32 %v1903, %v2595
        %v2681 = vadd.f32 %v1907, %v2595
        %v2682 = vadd.f32 %v1911, %v2595
        %v2683 = vadd.f32 %v1915, %v2595
        %v2684 = vadd.f32 %v1919, %v2595
        %v2685 = vadd.f32 %v1923, %v2595
        %v2686 = vadd.f32 %v1927, %v2595
        %v2687 = vadd.f32 %v1931, %v2595
        %v2688 = vadd.f32 %v1935, %v2595
        %v2689 = vadd.f32 %v1939, %v2595
        %v2690 = vadd.f32 %v1943, %v2595
        %v2691 = vadd.f32 %v1947, %v2595
        %v2692 = vadd.f32 %v1951, %v2595
        %v2693 = vadd.f32 %v1955, %v2595
        %v2694 = vadd.f32 %v1959, %v2595
        %v2695 = vadd.f32 %v1963, %v2595
        %v2696 = vadd.f32 %v1967, %v2595
        %v2697 = vadd.f32 %v1971, %v2595
        %v2698 = vadd.f32 %v1975, %v2595
        %v2699 = vadd.f32 %v1979, %v2595
        %v2700 = vadd.f32 %v1983, %v2595
        %v2701 = vadd.f32 %v1987, %v2595
        %v2702 = vadd.f32 %v1991, %v2595
        %v2703 = vadd.f32 %v1995, %v2595
        %v2704 = vadd.f32 %v1999, %v2595
        %v2705 = vadd.f32 %v2003, %v2595
        %v2706 = vadd.f32 %v2007, %v2595
        %v2707 = vadd.f32 %v2011, %v2595
        %v2708 = vadd.f32 %v2015, %v2595
        %v2709 = vadd.f32 %v2019, %v2595
        %v2710 = vadd.f32 %v2023, %v2595
        %v2711 = vadd.f32 %v2027, %v2595
        %v2712 = vadd.f32 %v2031, %v2595
        %v2713 = vadd.f32 %v2035, %v2595
        %v2714 = vadd.f32 %v2039, %v2595
        %v2715 = vadd.f32 %v2043, %v2595
        %v2716 = vadd.f32 %v2047, %v2595
        %v2717 = vadd.f32 %v2051, %v2595
        %v2718 = vadd.f32 %v2055, %v2595
        %v2719 = vadd.f32 %v2059, %v2595
        %v2720 = vadd.f32 %v2063, %v2595
        %v2721 = vadd.f32 %v2067, %v2595
        %v2722 = vadd.f32 %v2071, %v2595
        %v2723 = vadd.f32 %v2075, %v2595
        %v2724 = vadd.f32 %v2079, %v2595
        %v2725 = vadd.f32 %v2083, %v2595
        %v2726 = vadd.f32 %v2087, %v2595
        %v2727 = vadd.f32 %v2091, %v2595
        %v2728 = vadd.f32 %v2095, %v2595
        %v2729 = vadd.f32 %v2099, %v2595
        %v2730 = vadd.f32 %v2103, %v2595
        %v2731 = vadd.f32 %v2107, %v2595
        %v2732 = vadd.f32 %v2111, %v2595
        %v2733 = vadd.f32 %v2115, %v2595
        %v2734 = vadd.f32 %v2119, %v2595
        %v2735 = vadd.f32 %v2123, %v2595
        %v2736 = vadd.f32 %v2127, %v2595
        %v2737 = vadd.f32 %v2131, %v2595
        %v2738 = vadd.f32 %v2135, %v2595
        %v2739 = vadd.f32 %v2139, %v2595
        %v2740 = vadd.f32 %v2143, %v2595
        %v2741 = vadd.f32 %v2147, %v2595
        %v2742 = vadd.f32 %v2151, %v2595
        %v2743 = vadd.f32 %v2155, %v2595
        %v2744 = vadd.f32 %v2159, %v2595
        %v2745 = vadd.f32 %v2163, %v2595
        %v2746 = vadd.f32 %v2167, %v2595
        %v2747 = vadd.f32 %v2171, %v2595
        %v2748 = vadd.f32 %v2175, %v2595
        %v2749 = vadd.f32 %v2179, %v2595
        %v2750 = vadd.f32 %v2183, %v2595
        %v2751 = vadd.f32 %v2187, %v2595
        %v2752 = vadd.f32 %v2191, %v2595
        %v2753 = vadd.f32 %v2195, %v2595
        %v2754 = vadd.f32 %v2199, %v2595
        %v2755 = vadd.f32 %v2203, %v2595
        %v2756 = vadd.f32 %v2207, %v2595
        %v2757 = vadd.f32 %v2211, %v2595
        %v2758 = vadd.f32 %v2215, %v2595
        %v2759 = vadd.f32 %v2219, %v2595
        %v2760 = vadd.f32 %v2223, %v2595
        %v2761 = vadd.f32 %v2227, %v2595
        %v2762 = vadd.f32 %v2231, %v2595
        %v2763 = vadd.f32 %v2235, %v2595
        %v2764 = vadd.f32 %v2239, %v2595
        %v2765 = vadd.f32 %v2243, %v2595
        %v2766 = vadd.f32 %v2247, %v2595
        %v2767 = vadd.f32 %v2251, %v2595
        %v2768 = vadd.f32 %v2255, %v2595
        %v2769 = vadd.f32 %v2259, %v2595
        %v2770 = vadd.f32 %v2263, %v2595
        %v2771 = vadd.f32 %v2267, %v2595
        %v2772 = vadd.f32 %v2271, %v2595
        %v2773 = vadd.f32 %v2275, %v2595
        %v2774 = vadd.f32 %v2279, %v2595
        %v2775 = vadd.f32 %v2283, %v2595
        %v2776 = vadd.f32 %v2287, %v2595
        %v2777 = vadd.f32 %v2291, %v2595
        %v2778 = vadd.f32 %v2295, %v2595
        %v2779 = vadd.f32 %v2299, %v2595
        %v2780 = vadd.f32 %v2303, %v2595
        %v2781 = vadd.f32 %v2307, %v2595
        %v2782 = vadd.f32 %v2311, %v2595
        %v2783 = vadd.f32 %v2315, %v2595
        %v2784 = vadd.f32 %v2319, %v2595
        %v2785 = vadd.f32 %v2323, %v2595
        %v2786 = vadd.f32 %v2327, %v2595
        %v2787 = vadd.f32 %v2331, %v2595
        %v2788 = vadd.f32 %v2335, %v2595
        %v2789 = vadd.f32 %v2339, %v2595
        %v2790 = vadd.f32 %v2343, %v2595
        %v2791 = vadd.f32 %v2347, %v2595
        %v2792 = vadd.f32 %v2351, %v2595
        %v2793 = vadd.f32 %v2355, %v2595
        %v2794 = vadd.f32 %v2359, %v2595
        %v2795 = vadd.f32 %v2363, %v2595
        %v2796 = vadd.f32 %v2367, %v2595
        %v2797 = vadd.f32 %v2371, %v2595
        %v2798 = vadd.f32 %v2375, %v2595
        %v2799 = vadd.f32 %v2379, %v2595
        %v2800 = vadd.f32 %v2383, %v2595
        %v2801 = vadd.f32 %v2387, %v2595
        %v2802 = vadd.f32 %v2391, %v2595
        %v2803 = vadd.f32 %v2395, %v2595
        %v2804 = vadd.f32 %v2399, %v2595
        %v2805 = vadd.f32 %v2403, %v2595
        %v2806 = vadd.f32 %v2407, %v2595
        %v2807 = vadd.f32 %v2411, %v2595
        %v2808 = vadd.f32 %v2415, %v2595
        %v2809 = vadd.f32 %v2419, %v2595
        %v2810 = vadd.f32 %v2423, %v2595
        %v2811 = vadd.f32 %v2427, %v2595
        %v2812 = vadd.f32 %v2431, %v2595
        %v2813 = vadd.f32 %v2435, %v2595
        %v2814 = vadd.f32 %v2439, %v2595
        %v2815 = vadd.f32 %v2443, %v2595
        %v2816 = vadd.f32 %v2447, %v2595
        %v2817 = vadd.f32 %v2451, %v2595
        %v2818 = vadd.f32 %v2455, %v2595
        %v2819 = vadd.f32 %v2459, %v2595
        %v2820 = vadd.f32 %v2463, %v2595
        %v2821 = vadd.f32 %v2467, %v2595
        %v2822 = vadd.f32 %v2471, %v2595
        %v2823 = vadd.f32 %v2475, %v2595
        %v2824 = vadd.f32 %v2479, %v2595
        %v2825 = vadd.f32 %v2483, %v2595
        %v2826 = vadd.f32 %v2487, %v2595
        %v2827 = vadd.f32 %v2491, %v2595
        %v2828 = vadd.f32 %v2495, %v2595
        %v2829 = vadd.f32 %v2499, %v2595
        %v2830 = vadd.f32 %v2503, %v2595
        %v2831 = vadd.f32 %v2507, %v2595
        %v2832 = vadd.f32 %v2511, %v2595
        %v2833 = vadd.f32 %v2515, %v2595
        %v2834 = vadd.f32 %v2519, %v2595
        %v2835 = vadd.f32 %v2523, %v2595
        %v2836 = vadd.f32 %v2527, %v2595
        %v2837 = vadd.f32 %v2531, %v2595
        %v2838 = vadd.f32 %v2535, %v2595
        %v2839 = vadd.f32 %v2539, %v2595
        %v2840 = vadd.f32 %v2543, %v2595
        %v2841 = vadd.f32 %v2547, %v2595
        %v2842 = vadd.f32 %v2551, %v2595
        %v2843 = vadd.f32 %v2555, %v2595
        %v2844 = vadd.f32 %v2559, %v2595
        %v2845 = vadd.f32 %v2563, %v2595
        %v2846 = vadd.f32 %v2567, %v2595
        %v2847 = vadd.f32 %v2571, %v2595
        %v2848 = vadd.f32 %v2575, %v2595
        %v2849 = vadd.f32 %v2579, %v2595
        %v2850 = vadd.f32 %v2583, %v2595
        %v2851 = vadd.f32 %v2587, %v2595
        %v2852 = vadd.f32 %v2591, %v2595
        %v2853 = vld [vmem:[%s518] sm:$0xff]
        %v2854 = vld [vmem:[%s518 + $0x8] sm:$0xff]
        %vm2855 = vcmp.gt.f32.partialorder %v2853, 0.5
        %vm2856 = vcmp.gt.f32.partialorder %v2854, 0.5
        %v3113 = vlaneseq
        %v3114 = vand.u32 %v3113, 127
        %v3115 = vlaneseq
        %v3116 = vshrl.u32 %v3115, 7
        %v3117 = vsub.s32 %v3114, %v3116
        %v3118 = vrot.slane %v2597, %v3117
        %v3119 = vadd.s32 %v3114, 4294967288
        %v3120 = vlaneseq
        %v3121 = vshrl.u32 %v3120, 7
        %v3122 = vsub.s32 %v3119, %v3121
        %v3123 = vrot.slane %v2598, %v3122
        %vm3124 = vcmask 130112
        %v3125 = vsel %vm3124, %v3123, %v3118
        %v3126 = vadd.s32 %v3114, 4294967280
        %v3127 = vlaneseq
        %v3128 = vshrl.u32 %v3127, 7
        %v3129 = vsub.s32 %v3126, %v3128
        %v3130 = vrot.slane %v2599, %v3129
        %vm3131 = vcmask 195712
        %v3132 = vsel %vm3131, %v3130, %v3125
        %v3133 = vadd.s32 %v3114, 4294967272
        %v3134 = vlaneseq
        %v3135 = vshrl.u32 %v3134, 7
        %v3136 = vsub.s32 %v3133, %v3135
        %v3137 = vrot.slane %v2600, %v3136
        %vm3138 = vcmask 261312
        %v3139 = vsel %vm3138, %v3137, %v3132
        %v3140 = vadd.s32 %v3114, 4294967264
        %v3141 = vlaneseq
        %v3142 = vshrl.u32 %v3141, 7
        %v3143 = vsub.s32 %v3140, %v3142
        %v3144 = vrot.slane %v2601, %v3143
        %vm3145 = vcmask 326912
        %v3146 = vsel %vm3145, %v3144, %v3139
        %v3147 = vadd.s32 %v3114, 4294967256
        %v3148 = vlaneseq
        %v3149 = vshrl.u32 %v3148, 7
        %v3150 = vsub.s32 %v3147, %v3149
        %v3151 = vrot.slane %v2602, %v3150
        %vm3152 = vcmask 392512
        %v3153 = vsel %vm3152, %v3151, %v3146
        %v3154 = vadd.s32 %v3114, 4294967248
        %v3155 = vlaneseq
        %v3156 = vshrl.u32 %v3155, 7
        %v3157 = vsub.s32 %v3154, %v3156
        %v3158 = vrot.slane %v2603, %v3157
        %vm3159 = vcmask 458112
        %v3160 = vsel %vm3159, %v3158, %v3153
        %v3161 = vadd.s32 %v3114, 4294967240
        %v3162 = vlaneseq
        %v3163 = vshrl.u32 %v3162, 7
        %v3164 = vsub.s32 %v3161, %v3163
        %v3165 = vrot.slane %v2604, %v3164
        %vm3166 = vcmask 523712
        %v3167 = vsel %vm3166, %v3165, %v3160
        %v3168 = vadd.s32 %v3114, 4294967232
        %v3169 = vlaneseq
        %v3170 = vshrl.u32 %v3169, 7
        %v3171 = vsub.s32 %v3168, %v3170
        %v3172 = vrot.slane %v2605, %v3171
        %vm3173 = vcmask 589312
        %v3174 = vsel %vm3173, %v3172, %v3167
        %v3175 = vadd.s32 %v3114, 4294967224
        %v3176 = vlaneseq
        %v3177 = vshrl.u32 %v3176, 7
        %v3178 = vsub.s32 %v3175, %v3177
        %v3179 = vrot.slane %v2606, %v3178
        %vm3180 = vcmask 654912
        %v3181 = vsel %vm3180, %v3179, %v3174
        %v3182 = vadd.s32 %v3114, 4294967216
        %v3183 = vlaneseq
        %v3184 = vshrl.u32 %v3183, 7
        %v3185 = vsub.s32 %v3182, %v3184
        %v3186 = vrot.slane %v2607, %v3185
        %vm3187 = vcmask 720512
        %v3188 = vsel %vm3187, %v3186, %v3181
        %v3189 = vadd.s32 %v3114, 4294967208
        %v3190 = vlaneseq
        %v3191 = vshrl.u32 %v3190, 7
        %v3192 = vsub.s32 %v3189, %v3191
        %v3193 = vrot.slane %v2608, %v3192
        %vm3194 = vcmask 786112
        %v3195 = vsel %vm3194, %v3193, %v3188
        %v3196 = vadd.s32 %v3114, 4294967200
        %v3197 = vlaneseq
        %v3198 = vshrl.u32 %v3197, 7
        %v3199 = vsub.s32 %v3196, %v3198
        %v3200 = vrot.slane %v2609, %v3199
        %vm3201 = vcmask 851712
        %v3202 = vsel %vm3201, %v3200, %v3195
        %v3203 = vadd.s32 %v3114, 4294967192
        %v3204 = vlaneseq
        %v3205 = vshrl.u32 %v3204, 7
        %v3206 = vsub.s32 %v3203, %v3205
        %v3207 = vrot.slane %v2610, %v3206
        %vm3208 = vcmask 917312
        %v3209 = vsel %vm3208, %v3207, %v3202
        %v3210 = vadd.s32 %v3114, 4294967184
        %v3211 = vlaneseq
        %v3212 = vshrl.u32 %v3211, 7
        %v3213 = vsub.s32 %v3210, %v3212
        %v3214 = vrot.slane %v2611, %v3213
        %vm3215 = vcmask 982912
        %v3216 = vsel %vm3215, %v3214, %v3209
        %v3217 = vadd.s32 %v3114, 4294967176
        %v3218 = vlaneseq
        %v3219 = vshrl.u32 %v3218, 7
        %v3220 = vsub.s32 %v3217, %v3219
        %v3221 = vrot.slane %v2612, %v3220
        %vm3222 = vcmask 1048512
        %v3223 = vsel %vm3222, %v3221, %v3216
        %v3224 = vlaneseq
        %v3225 = vshrl.u32 %v3224, 7
        %v3226 = vsub.s32 %v3114, %v3225
        %v3227 = vrot.slane %v2613, %v3226
        %v3228 = vlaneseq
        %v3229 = vshrl.u32 %v3228, 7
        %v3230 = vsub.s32 %v3119, %v3229
        %v3231 = vrot.slane %v2614, %v3230
        %v3232 = vsel %vm3124, %v3231, %v3227
        %v3233 = vlaneseq
        %v3234 = vshrl.u32 %v3233, 7
        %v3235 = vsub.s32 %v3126, %v3234
        %v3236 = vrot.slane %v2615, %v3235
        %v3237 = vsel %vm3131, %v3236, %v3232
        %v3238 = vlaneseq
        %v3239 = vshrl.u32 %v3238, 7
        %v3240 = vsub.s32 %v3133, %v3239
        %v3241 = vrot.slane %v2616, %v3240
        %v3242 = vsel %vm3138, %v3241, %v3237
        %v3243 = vlaneseq
        %v3244 = vshrl.u32 %v3243, 7
        %v3245 = vsub.s32 %v3140, %v3244
        %v3246 = vrot.slane %v2617, %v3245
        %v3247 = vsel %vm3145, %v3246, %v3242
        %v3248 = vlaneseq
        %v3249 = vshrl.u32 %v3248, 7
        %v3250 = vsub.s32 %v3147, %v3249
        %v3251 = vrot.slane %v2618, %v3250
        %v3252 = vsel %vm3152, %v3251, %v3247
        %v3253 = vlaneseq
        %v3254 = vshrl.u32 %v3253, 7
        %v3255 = vsub.s32 %v3154, %v3254
        %v3256 = vrot.slane %v2619, %v3255
        %v3257 = vsel %vm3159, %v3256, %v3252
        %v3258 = vlaneseq
        %v3259 = vshrl.u32 %v3258, 7
        %v3260 = vsub.s32 %v3161, %v3259
        %v3261 = vrot.slane %v2620, %v3260
        %v3262 = vsel %vm3166, %v3261, %v3257
        %v3263 = vlaneseq
        %v3264 = vshrl.u32 %v3263, 7
        %v3265 = vsub.s32 %v3168, %v3264
        %v3266 = vrot.slane %v2621, %v3265
        %v3267 = vsel %vm3173, %v3266, %v3262
        %v3268 = vlaneseq
        %v3269 = vshrl.u32 %v3268, 7
        %v3270 = vsub.s32 %v3175, %v3269
        %v3271 = vrot.slane %v2622, %v3270
        %v3272 = vsel %vm3180, %v3271, %v3267
        %v3273 = vlaneseq
        %v3274 = vshrl.u32 %v3273, 7
        %v3275 = vsub.s32 %v3182, %v3274
        %v3276 = vrot.slane %v2623, %v3275
        %v3277 = vsel %vm3187, %v3276, %v3272
        %v3278 = vlaneseq
        %v3279 = vshrl.u32 %v3278, 7
        %v3280 = vsub.s32 %v3189, %v3279
        %v3281 = vrot.slane %v2624, %v3280
        %v3282 = vsel %vm3194, %v3281, %v3277
        %v3283 = vlaneseq
        %v3284 = vshrl.u32 %v3283, 7
        %v3285 = vsub.s32 %v3196, %v3284
        %v3286 = vrot.slane %v2625, %v3285
        %v3287 = vsel %vm3201, %v3286, %v3282
        %v3288 = vlaneseq
        %v3289 = vshrl.u32 %v3288, 7
        %v3290 = vsub.s32 %v3203, %v3289
        %v3291 = vrot.slane %v2626, %v3290
        %v3292 = vsel %vm3208, %v3291, %v3287
        %v3293 = vlaneseq
        %v3294 = vshrl.u32 %v3293, 7
        %v3295 = vsub.s32 %v3210, %v3294
        %v3296 = vrot.slane %v2627, %v3295
        %v3297 = vsel %vm3215, %v3296, %v3292
        %v3298 = vlaneseq
        %v3299 = vshrl.u32 %v3298, 7
        %v3300 = vsub.s32 %v3217, %v3299
        %v3301 = vrot.slane %v2628, %v3300
        %v3302 = vsel %vm3222, %v3301, %v3297
        %v3303 = vlaneseq
        %v3304 = vshrl.u32 %v3303, 7
        %v3305 = vsub.s32 %v3114, %v3304
        %v3306 = vrot.slane %v2629, %v3305
        %v3307 = vlaneseq
        %v3308 = vshrl.u32 %v3307, 7
        %v3309 = vsub.s32 %v3119, %v3308
        %v3310 = vrot.slane %v2630, %v3309
        %v3311 = vsel %vm3124, %v3310, %v3306
        %v3312 = vlaneseq
        %v3313 = vshrl.u32 %v3312, 7
        %v3314 = vsub.s32 %v3126, %v3313
        %v3315 = vrot.slane %v2631, %v3314
        %v3316 = vsel %vm3131, %v3315, %v3311
        %v3317 = vlaneseq
        %v3318 = vshrl.u32 %v3317, 7
        %v3319 = vsub.s32 %v3133, %v3318
        %v3320 = vrot.slane %v2632, %v3319
        %v3321 = vsel %vm3138, %v3320, %v3316
        %v3322 = vlaneseq
        %v3323 = vshrl.u32 %v3322, 7
        %v3324 = vsub.s32 %v3140, %v3323
        %v3325 = vrot.slane %v2633, %v3324
        %v3326 = vsel %vm3145, %v3325, %v3321
        %v3327 = vlaneseq
        %v3328 = vshrl.u32 %v3327, 7
        %v3329 = vsub.s32 %v3147, %v3328
        %v3330 = vrot.slane %v2634, %v3329
        %v3331 = vsel %vm3152, %v3330, %v3326
        %v3332 = vlaneseq
        %v3333 = vshrl.u32 %v3332, 7
        %v3334 = vsub.s32 %v3154, %v3333
        %v3335 = vrot.slane %v2635, %v3334
        %v3336 = vsel %vm3159, %v3335, %v3331
        %v3337 = vlaneseq
        %v3338 = vshrl.u32 %v3337, 7
        %v3339 = vsub.s32 %v3161, %v3338
        %v3340 = vrot.slane %v2636, %v3339
        %v3341 = vsel %vm3166, %v3340, %v3336
        %v3342 = vlaneseq
        %v3343 = vshrl.u32 %v3342, 7
        %v3344 = vsub.s32 %v3168, %v3343
        %v3345 = vrot.slane %v2637, %v3344
        %v3346 = vsel %vm3173, %v3345, %v3341
        %v3347 = vlaneseq
        %v3348 = vshrl.u32 %v3347, 7
        %v3349 = vsub.s32 %v3175, %v3348
        %v3350 = vrot.slane %v2638, %v3349
        %v3351 = vsel %vm3180, %v3350, %v3346
        %v3352 = vlaneseq
        %v3353 = vshrl.u32 %v3352, 7
        %v3354 = vsub.s32 %v3182, %v3353
        %v3355 = vrot.slane %v2639, %v3354
        %v3356 = vsel %vm3187, %v3355, %v3351
        %v3357 = vlaneseq
        %v3358 = vshrl.u32 %v3357, 7
        %v3359 = vsub.s32 %v3189, %v3358
        %v3360 = vrot.slane %v2640, %v3359
        %v3361 = vsel %vm3194, %v3360, %v3356
        %v3362 = vlaneseq
        %v3363 = vshrl.u32 %v3362, 7
        %v3364 = vsub.s32 %v3196, %v3363
        %v3365 = vrot.slane %v2641, %v3364
        %v3366 = vsel %vm3201, %v3365, %v3361
        %v3367 = vlaneseq
        %v3368 = vshrl.u32 %v3367, 7
        %v3369 = vsub.s32 %v3203, %v3368
        %v3370 = vrot.slane %v2642, %v3369
        %v3371 = vsel %vm3208, %v3370, %v3366
        %v3372 = vlaneseq
        %v3373 = vshrl.u32 %v3372, 7
        %v3374 = vsub.s32 %v3210, %v3373
        %v3375 = vrot.slane %v2643, %v3374
        %v3376 = vsel %vm3215, %v3375, %v3371
        %v3377 = vlaneseq
        %v3378 = vshrl.u32 %v3377, 7
        %v3379 = vsub.s32 %v3217, %v3378
        %v3380 = vrot.slane %v2644, %v3379
        %v3381 = vsel %vm3222, %v3380, %v3376
        %v3382 = vlaneseq
        %v3383 = vshrl.u32 %v3382, 7
        %v3384 = vsub.s32 %v3114, %v3383
        %v3385 = vrot.slane %v2645, %v3384
        %v3386 = vlaneseq
        %v3387 = vshrl.u32 %v3386, 7
        %v3388 = vsub.s32 %v3119, %v3387
        %v3389 = vrot.slane %v2646, %v3388
        %v3390 = vsel %vm3124, %v3389, %v3385
        %v3391 = vlaneseq
        %v3392 = vshrl.u32 %v3391, 7
        %v3393 = vsub.s32 %v3126, %v3392
        %v3394 = vrot.slane %v2647, %v3393
        %v3395 = vsel %vm3131, %v3394, %v3390
        %v3396 = vlaneseq
        %v3397 = vshrl.u32 %v3396, 7
        %v3398 = vsub.s32 %v3133, %v3397
        %v3399 = vrot.slane %v2648, %v3398
        %v3400 = vsel %vm3138, %v3399, %v3395
        %v3401 = vlaneseq
        %v3402 = vshrl.u32 %v3401, 7
        %v3403 = vsub.s32 %v3140, %v3402
        %v3404 = vrot.slane %v2649, %v3403
        %v3405 = vsel %vm3145, %v3404, %v3400
        %v3406 = vlaneseq
        %v3407 = vshrl.u32 %v3406, 7
        %v3408 = vsub.s32 %v3147, %v3407
        %v3409 = vrot.slane %v2650, %v3408
        %v3410 = vsel %vm3152, %v3409, %v3405
        %v3411 = vlaneseq
        %v3412 = vshrl.u32 %v3411, 7
        %v3413 = vsub.s32 %v3154, %v3412
        %v3414 = vrot.slane %v2651, %v3413
        %v3415 = vsel %vm3159, %v3414, %v3410
        %v3416 = vlaneseq
        %v3417 = vshrl.u32 %v3416, 7
        %v3418 = vsub.s32 %v3161, %v3417
        %v3419 = vrot.slane %v2652, %v3418
        %v3420 = vsel %vm3166, %v3419, %v3415
        %v3421 = vlaneseq
        %v3422 = vshrl.u32 %v3421, 7
        %v3423 = vsub.s32 %v3168, %v3422
        %v3424 = vrot.slane %v2653, %v3423
        %v3425 = vsel %vm3173, %v3424, %v3420
        %v3426 = vlaneseq
        %v3427 = vshrl.u32 %v3426, 7
        %v3428 = vsub.s32 %v3175, %v3427
        %v3429 = vrot.slane %v2654, %v3428
        %v3430 = vsel %vm3180, %v3429, %v3425
        %v3431 = vlaneseq
        %v3432 = vshrl.u32 %v3431, 7
        %v3433 = vsub.s32 %v3182, %v3432
        %v3434 = vrot.slane %v2655, %v3433
        %v3435 = vsel %vm3187, %v3434, %v3430
        %v3436 = vlaneseq
        %v3437 = vshrl.u32 %v3436, 7
        %v3438 = vsub.s32 %v3189, %v3437
        %v3439 = vrot.slane %v2656, %v3438
        %v3440 = vsel %vm3194, %v3439, %v3435
        %v3441 = vlaneseq
        %v3442 = vshrl.u32 %v3441, 7
        %v3443 = vsub.s32 %v3196, %v3442
        %v3444 = vrot.slane %v2657, %v3443
        %v3445 = vsel %vm3201, %v3444, %v3440
        %v3446 = vlaneseq
        %v3447 = vshrl.u32 %v3446, 7
        %v3448 = vsub.s32 %v3203, %v3447
        %v3449 = vrot.slane %v2658, %v3448
        %v3450 = vsel %vm3208, %v3449, %v3445
        %v3451 = vlaneseq
        %v3452 = vshrl.u32 %v3451, 7
        %v3453 = vsub.s32 %v3210, %v3452
        %v3454 = vrot.slane %v2659, %v3453
        %v3455 = vsel %vm3215, %v3454, %v3450
        %v3456 = vlaneseq
        %v3457 = vshrl.u32 %v3456, 7
        %v3458 = vsub.s32 %v3217, %v3457
        %v3459 = vrot.slane %v2660, %v3458
        %v3460 = vsel %vm3222, %v3459, %v3455
        %v3461 = vlaneseq
        %v3462 = vshrl.u32 %v3461, 7
        %v3463 = vsub.s32 %v3114, %v3462
        %v3464 = vrot.slane %v2661, %v3463
        %v3465 = vlaneseq
        %v3466 = vshrl.u32 %v3465, 7
        %v3467 = vsub.s32 %v3119, %v3466
        %v3468 = vrot.slane %v2662, %v3467
        %v3469 = vsel %vm3124, %v3468, %v3464
        %v3470 = vlaneseq
        %v3471 = vshrl.u32 %v3470, 7
        %v3472 = vsub.s32 %v3126, %v3471
        %v3473 = vrot.slane %v2663, %v3472
        %v3474 = vsel %vm3131, %v3473, %v3469
        %v3475 = vlaneseq
        %v3476 = vshrl.u32 %v3475, 7
        %v3477 = vsub.s32 %v3133, %v3476
        %v3478 = vrot.slane %v2664, %v3477
        %v3479 = vsel %vm3138, %v3478, %v3474
        %v3480 = vlaneseq
        %v3481 = vshrl.u32 %v3480, 7
        %v3482 = vsub.s32 %v3140, %v3481
        %v3483 = vrot.slane %v2665, %v3482
        %v3484 = vsel %vm3145, %v3483, %v3479
        %v3485 = vlaneseq
        %v3486 = vshrl.u32 %v3485, 7
        %v3487 = vsub.s32 %v3147, %v3486
        %v3488 = vrot.slane %v2666, %v3487
        %v3489 = vsel %vm3152, %v3488, %v3484
        %v3490 = vlaneseq
        %v3491 = vshrl.u32 %v3490, 7
        %v3492 = vsub.s32 %v3154, %v3491
        %v3493 = vrot.slane %v2667, %v3492
        %v3494 = vsel %vm3159, %v3493, %v3489
        %v3495 = vlaneseq
        %v3496 = vshrl.u32 %v3495, 7
        %v3497 = vsub.s32 %v3161, %v3496
        %v3498 = vrot.slane %v2668, %v3497
        %v3499 = vsel %vm3166, %v3498, %v3494
        %v3500 = vlaneseq
        %v3501 = vshrl.u32 %v3500, 7
        %v3502 = vsub.s32 %v3168, %v3501
        %v3503 = vrot.slane %v2669, %v3502
        %v3504 = vsel %vm3173, %v3503, %v3499
        %v3505 = vlaneseq
        %v3506 = vshrl.u32 %v3505, 7
        %v3507 = vsub.s32 %v3175, %v3506
        %v3508 = vrot.slane %v2670, %v3507
        %v3509 = vsel %vm3180, %v3508, %v3504
        %v3510 = vlaneseq
        %v3511 = vshrl.u32 %v3510, 7
        %v3512 = vsub.s32 %v3182, %v3511
        %v3513 = vrot.slane %v2671, %v3512
        %v3514 = vsel %vm3187, %v3513, %v3509
        %v3515 = vlaneseq
        %v3516 = vshrl.u32 %v3515, 7
        %v3517 = vsub.s32 %v3189, %v3516
        %v3518 = vrot.slane %v2672, %v3517
        %v3519 = vsel %vm3194, %v3518, %v3514
        %v3520 = vlaneseq
        %v3521 = vshrl.u32 %v3520, 7
        %v3522 = vsub.s32 %v3196, %v3521
        %v3523 = vrot.slane %v2673, %v3522
        %v3524 = vsel %vm3201, %v3523, %v3519
        %v3525 = vlaneseq
        %v3526 = vshrl.u32 %v3525, 7
        %v3527 = vsub.s32 %v3203, %v3526
        %v3528 = vrot.slane %v2674, %v3527
        %v3529 = vsel %vm3208, %v3528, %v3524
        %v3530 = vlaneseq
        %v3531 = vshrl.u32 %v3530, 7
        %v3532 = vsub.s32 %v3210, %v3531
        %v3533 = vrot.slane %v2675, %v3532
        %v3534 = vsel %vm3215, %v3533, %v3529
        %v3535 = vlaneseq
        %v3536 = vshrl.u32 %v3535, 7
        %v3537 = vsub.s32 %v3217, %v3536
        %v3538 = vrot.slane %v2676, %v3537
        %v3539 = vsel %vm3222, %v3538, %v3534
        %v3540 = vlaneseq
        %v3541 = vshrl.u32 %v3540, 7
        %v3542 = vsub.s32 %v3114, %v3541
        %v3543 = vrot.slane %v2677, %v3542
        %v3544 = vlaneseq
        %v3545 = vshrl.u32 %v3544, 7
        %v3546 = vsub.s32 %v3119, %v3545
        %v3547 = vrot.slane %v2678, %v3546
        %v3548 = vsel %vm3124, %v3547, %v3543
        %v3549 = vlaneseq
        %v3550 = vshrl.u32 %v3549, 7
        %v3551 = vsub.s32 %v3126, %v3550
        %v3552 = vrot.slane %v2679, %v3551
        %v3553 = vsel %vm3131, %v3552, %v3548
        %v3554 = vlaneseq
        %v3555 = vshrl.u32 %v3554, 7
        %v3556 = vsub.s32 %v3133, %v3555
        %v3557 = vrot.slane %v2680, %v3556
        %v3558 = vsel %vm3138, %v3557, %v3553
        %v3559 = vlaneseq
        %v3560 = vshrl.u32 %v3559, 7
        %v3561 = vsub.s32 %v3140, %v3560
        %v3562 = vrot.slane %v2681, %v3561
        %v3563 = vsel %vm3145, %v3562, %v3558
        %v3564 = vlaneseq
        %v3565 = vshrl.u32 %v3564, 7
        %v3566 = vsub.s32 %v3147, %v3565
        %v3567 = vrot.slane %v2682, %v3566
        %v3568 = vsel %vm3152, %v3567, %v3563
        %v3569 = vlaneseq
        %v3570 = vshrl.u32 %v3569, 7
        %v3571 = vsub.s32 %v3154, %v3570
        %v3572 = vrot.slane %v2683, %v3571
        %v3573 = vsel %vm3159, %v3572, %v3568
        %v3574 = vlaneseq
        %v3575 = vshrl.u32 %v3574, 7
        %v3576 = vsub.s32 %v3161, %v3575
        %v3577 = vrot.slane %v2684, %v3576
        %v3578 = vsel %vm3166, %v3577, %v3573
        %v3579 = vlaneseq
        %v3580 = vshrl.u32 %v3579, 7
        %v3581 = vsub.s32 %v3168, %v3580
        %v3582 = vrot.slane %v2685, %v3581
        %v3583 = vsel %vm3173, %v3582, %v3578
        %v3584 = vlaneseq
        %v3585 = vshrl.u32 %v3584, 7
        %v3586 = vsub.s32 %v3175, %v3585
        %v3587 = vrot.slane %v2686, %v3586
        %v3588 = vsel %vm3180, %v3587, %v3583
        %v3589 = vlaneseq
        %v3590 = vshrl.u32 %v3589, 7
        %v3591 = vsub.s32 %v3182, %v3590
        %v3592 = vrot.slane %v2687, %v3591
        %v3593 = vsel %vm3187, %v3592, %v3588
        %v3594 = vlaneseq
        %v3595 = vshrl.u32 %v3594, 7
        %v3596 = vsub.s32 %v3189, %v3595
        %v3597 = vrot.slane %v2688, %v3596
        %v3598 = vsel %vm3194, %v3597, %v3593
        %v3599 = vlaneseq
        %v3600 = vshrl.u32 %v3599, 7
        %v3601 = vsub.s32 %v3196, %v3600
        %v3602 = vrot.slane %v2689, %v3601
        %v3603 = vsel %vm3201, %v3602, %v3598
        %v3604 = vlaneseq
        %v3605 = vshrl.u32 %v3604, 7
        %v3606 = vsub.s32 %v3203, %v3605
        %v3607 = vrot.slane %v2690, %v3606
        %v3608 = vsel %vm3208, %v3607, %v3603
        %v3609 = vlaneseq
        %v3610 = vshrl.u32 %v3609, 7
        %v3611 = vsub.s32 %v3210, %v3610
        %v3612 = vrot.slane %v2691, %v3611
        %v3613 = vsel %vm3215, %v3612, %v3608
        %v3614 = vlaneseq
        %v3615 = vshrl.u32 %v3614, 7
        %v3616 = vsub.s32 %v3217, %v3615
        %v3617 = vrot.slane %v2692, %v3616
        %v3618 = vsel %vm3222, %v3617, %v3613
        %v3619 = vlaneseq
        %v3620 = vshrl.u32 %v3619, 7
        %v3621 = vsub.s32 %v3114, %v3620
        %v3622 = vrot.slane %v2693, %v3621
        %v3623 = vlaneseq
        %v3624 = vshrl.u32 %v3623, 7
        %v3625 = vsub.s32 %v3119, %v3624
        %v3626 = vrot.slane %v2694, %v3625
        %v3627 = vsel %vm3124, %v3626, %v3622
        %v3628 = vlaneseq
        %v3629 = vshrl.u32 %v3628, 7
        %v3630 = vsub.s32 %v3126, %v3629
        %v3631 = vrot.slane %v2695, %v3630
        %v3632 = vsel %vm3131, %v3631, %v3627
        %v3633 = vlaneseq
        %v3634 = vshrl.u32 %v3633, 7
        %v3635 = vsub.s32 %v3133, %v3634
        %v3636 = vrot.slane %v2696, %v3635
        %v3637 = vsel %vm3138, %v3636, %v3632
        %v3638 = vlaneseq
        %v3639 = vshrl.u32 %v3638, 7
        %v3640 = vsub.s32 %v3140, %v3639
        %v3641 = vrot.slane %v2697, %v3640
        %v3642 = vsel %vm3145, %v3641, %v3637
        %v3643 = vlaneseq
        %v3644 = vshrl.u32 %v3643, 7
        %v3645 = vsub.s32 %v3147, %v3644
        %v3646 = vrot.slane %v2698, %v3645
        %v3647 = vsel %vm3152, %v3646, %v3642
        %v3648 = vlaneseq
        %v3649 = vshrl.u32 %v3648, 7
        %v3650 = vsub.s32 %v3154, %v3649
        %v3651 = vrot.slane %v2699, %v3650
        %v3652 = vsel %vm3159, %v3651, %v3647
        %v3653 = vlaneseq
        %v3654 = vshrl.u32 %v3653, 7
        %v3655 = vsub.s32 %v3161, %v3654
        %v3656 = vrot.slane %v2700, %v3655
        %v3657 = vsel %vm3166, %v3656, %v3652
        %v3658 = vlaneseq
        %v3659 = vshrl.u32 %v3658, 7
        %v3660 = vsub.s32 %v3168, %v3659
        %v3661 = vrot.slane %v2701, %v3660
        %v3662 = vsel %vm3173, %v3661, %v3657
        %v3663 = vlaneseq
        %v3664 = vshrl.u32 %v3663, 7
        %v3665 = vsub.s32 %v3175, %v3664
        %v3666 = vrot.slane %v2702, %v3665
        %v3667 = vsel %vm3180, %v3666, %v3662
        %v3668 = vlaneseq
        %v3669 = vshrl.u32 %v3668, 7
        %v3670 = vsub.s32 %v3182, %v3669
        %v3671 = vrot.slane %v2703, %v3670
        %v3672 = vsel %vm3187, %v3671, %v3667
        %v3673 = vlaneseq
        %v3674 = vshrl.u32 %v3673, 7
        %v3675 = vsub.s32 %v3189, %v3674
        %v3676 = vrot.slane %v2704, %v3675
        %v3677 = vsel %vm3194, %v3676, %v3672
        %v3678 = vlaneseq
        %v3679 = vshrl.u32 %v3678, 7
        %v3680 = vsub.s32 %v3196, %v3679
        %v3681 = vrot.slane %v2705, %v3680
        %v3682 = vsel %vm3201, %v3681, %v3677
        %v3683 = vlaneseq
        %v3684 = vshrl.u32 %v3683, 7
        %v3685 = vsub.s32 %v3203, %v3684
        %v3686 = vrot.slane %v2706, %v3685
        %v3687 = vsel %vm3208, %v3686, %v3682
        %v3688 = vlaneseq
        %v3689 = vshrl.u32 %v3688, 7
        %v3690 = vsub.s32 %v3210, %v3689
        %v3691 = vrot.slane %v2707, %v3690
        %v3692 = vsel %vm3215, %v3691, %v3687
        %v3693 = vlaneseq
        %v3694 = vshrl.u32 %v3693, 7
        %v3695 = vsub.s32 %v3217, %v3694
        %v3696 = vrot.slane %v2708, %v3695
        %v3697 = vsel %vm3222, %v3696, %v3692
        %v3698 = vlaneseq
        %v3699 = vshrl.u32 %v3698, 7
        %v3700 = vsub.s32 %v3114, %v3699
        %v3701 = vrot.slane %v2709, %v3700
        %v3702 = vlaneseq
        %v3703 = vshrl.u32 %v3702, 7
        %v3704 = vsub.s32 %v3119, %v3703
        %v3705 = vrot.slane %v2710, %v3704
        %v3706 = vsel %vm3124, %v3705, %v3701
        %v3707 = vlaneseq
        %v3708 = vshrl.u32 %v3707, 7
        %v3709 = vsub.s32 %v3126, %v3708
        %v3710 = vrot.slane %v2711, %v3709
        %v3711 = vsel %vm3131, %v3710, %v3706
        %v3712 = vlaneseq
        %v3713 = vshrl.u32 %v3712, 7
        %v3714 = vsub.s32 %v3133, %v3713
        %v3715 = vrot.slane %v2712, %v3714
        %v3716 = vsel %vm3138, %v3715, %v3711
        %v3717 = vlaneseq
        %v3718 = vshrl.u32 %v3717, 7
        %v3719 = vsub.s32 %v3140, %v3718
        %v3720 = vrot.slane %v2713, %v3719
        %v3721 = vsel %vm3145, %v3720, %v3716
        %v3722 = vlaneseq
        %v3723 = vshrl.u32 %v3722, 7
        %v3724 = vsub.s32 %v3147, %v3723
        %v3725 = vrot.slane %v2714, %v3724
        %v3726 = vsel %vm3152, %v3725, %v3721
        %v3727 = vlaneseq
        %v3728 = vshrl.u32 %v3727, 7
        %v3729 = vsub.s32 %v3154, %v3728
        %v3730 = vrot.slane %v2715, %v3729
        %v3731 = vsel %vm3159, %v3730, %v3726
        %v3732 = vlaneseq
        %v3733 = vshrl.u32 %v3732, 7
        %v3734 = vsub.s32 %v3161, %v3733
        %v3735 = vrot.slane %v2716, %v3734
        %v3736 = vsel %vm3166, %v3735, %v3731
        %v3737 = vlaneseq
        %v3738 = vshrl.u32 %v3737, 7
        %v3739 = vsub.s32 %v3168, %v3738
        %v3740 = vrot.slane %v2717, %v3739
        %v3741 = vsel %vm3173, %v3740, %v3736
        %v3742 = vlaneseq
        %v3743 = vshrl.u32 %v3742, 7
        %v3744 = vsub.s32 %v3175, %v3743
        %v3745 = vrot.slane %v2718, %v3744
        %v3746 = vsel %vm3180, %v3745, %v3741
        %v3747 = vlaneseq
        %v3748 = vshrl.u32 %v3747, 7
        %v3749 = vsub.s32 %v3182, %v3748
        %v3750 = vrot.slane %v2719, %v3749
        %v3751 = vsel %vm3187, %v3750, %v3746
        %v3752 = vlaneseq
        %v3753 = vshrl.u32 %v3752, 7
        %v3754 = vsub.s32 %v3189, %v3753
        %v3755 = vrot.slane %v2720, %v3754
        %v3756 = vsel %vm3194, %v3755, %v3751
        %v3757 = vlaneseq
        %v3758 = vshrl.u32 %v3757, 7
        %v3759 = vsub.s32 %v3196, %v3758
        %v3760 = vrot.slane %v2721, %v3759
        %v3761 = vsel %vm3201, %v3760, %v3756
        %v3762 = vlaneseq
        %v3763 = vshrl.u32 %v3762, 7
        %v3764 = vsub.s32 %v3203, %v3763
        %v3765 = vrot.slane %v2722, %v3764
        %v3766 = vsel %vm3208, %v3765, %v3761
        %v3767 = vlaneseq
        %v3768 = vshrl.u32 %v3767, 7
        %v3769 = vsub.s32 %v3210, %v3768
        %v3770 = vrot.slane %v2723, %v3769
        %v3771 = vsel %vm3215, %v3770, %v3766
        %v3772 = vlaneseq
        %v3773 = vshrl.u32 %v3772, 7
        %v3774 = vsub.s32 %v3217, %v3773
        %v3775 = vrot.slane %v2724, %v3774
        %v3776 = vsel %vm3222, %v3775, %v3771
        %v3777 = vlaneseq
        %v3778 = vshrl.u32 %v3777, 7
        %v3779 = vsub.s32 %v3114, %v3778
        %v3780 = vrot.slane %v2725, %v3779
        %v3781 = vlaneseq
        %v3782 = vshrl.u32 %v3781, 7
        %v3783 = vsub.s32 %v3119, %v3782
        %v3784 = vrot.slane %v2726, %v3783
        %v3785 = vsel %vm3124, %v3784, %v3780
        %v3786 = vlaneseq
        %v3787 = vshrl.u32 %v3786, 7
        %v3788 = vsub.s32 %v3126, %v3787
        %v3789 = vrot.slane %v2727, %v3788
        %v3790 = vsel %vm3131, %v3789, %v3785
        %v3791 = vlaneseq
        %v3792 = vshrl.u32 %v3791, 7
        %v3793 = vsub.s32 %v3133, %v3792
        %v3794 = vrot.slane %v2728, %v3793
        %v3795 = vsel %vm3138, %v3794, %v3790
        %v3796 = vlaneseq
        %v3797 = vshrl.u32 %v3796, 7
        %v3798 = vsub.s32 %v3140, %v3797
        %v3799 = vrot.slane %v2729, %v3798
        %v3800 = vsel %vm3145, %v3799, %v3795
        %v3801 = vlaneseq
        %v3802 = vshrl.u32 %v3801, 7
        %v3803 = vsub.s32 %v3147, %v3802
        %v3804 = vrot.slane %v2730, %v3803
        %v3805 = vsel %vm3152, %v3804, %v3800
        %v3806 = vlaneseq
        %v3807 = vshrl.u32 %v3806, 7
        %v3808 = vsub.s32 %v3154, %v3807
        %v3809 = vrot.slane %v2731, %v3808
        %v3810 = vsel %vm3159, %v3809, %v3805
        %v3811 = vlaneseq
        %v3812 = vshrl.u32 %v3811, 7
        %v3813 = vsub.s32 %v3161, %v3812
        %v3814 = vrot.slane %v2732, %v3813
        %v3815 = vsel %vm3166, %v3814, %v3810
        %v3816 = vlaneseq
        %v3817 = vshrl.u32 %v3816, 7
        %v3818 = vsub.s32 %v3168, %v3817
        %v3819 = vrot.slane %v2733, %v3818
        %v3820 = vsel %vm3173, %v3819, %v3815
        %v3821 = vlaneseq
        %v3822 = vshrl.u32 %v3821, 7
        %v3823 = vsub.s32 %v3175, %v3822
        %v3824 = vrot.slane %v2734, %v3823
        %v3825 = vsel %vm3180, %v3824, %v3820
        %v3826 = vlaneseq
        %v3827 = vshrl.u32 %v3826, 7
        %v3828 = vsub.s32 %v3182, %v3827
        %v3829 = vrot.slane %v2735, %v3828
        %v3830 = vsel %vm3187, %v3829, %v3825
        %v3831 = vlaneseq
        %v3832 = vshrl.u32 %v3831, 7
        %v3833 = vsub.s32 %v3189, %v3832
        %v3834 = vrot.slane %v2736, %v3833
        %v3835 = vsel %vm3194, %v3834, %v3830
        %v3836 = vlaneseq
        %v3837 = vshrl.u32 %v3836, 7
        %v3838 = vsub.s32 %v3196, %v3837
        %v3839 = vrot.slane %v2737, %v3838
        %v3840 = vsel %vm3201, %v3839, %v3835
        %v3841 = vlaneseq
        %v3842 = vshrl.u32 %v3841, 7
        %v3843 = vsub.s32 %v3203, %v3842
        %v3844 = vrot.slane %v2738, %v3843
        %v3845 = vsel %vm3208, %v3844, %v3840
        %v3846 = vlaneseq
        %v3847 = vshrl.u32 %v3846, 7
        %v3848 = vsub.s32 %v3210, %v3847
        %v3849 = vrot.slane %v2739, %v3848
        %v3850 = vsel %vm3215, %v3849, %v3845
        %v3851 = vlaneseq
        %v3852 = vshrl.u32 %v3851, 7
        %v3853 = vsub.s32 %v3217, %v3852
        %v3854 = vrot.slane %v2740, %v3853
        %v3855 = vsel %vm3222, %v3854, %v3850
        %v3856 = vlaneseq
        %v3857 = vshrl.u32 %v3856, 7
        %v3858 = vsub.s32 %v3114, %v3857
        %v3859 = vrot.slane %v2741, %v3858
        %v3860 = vlaneseq
        %v3861 = vshrl.u32 %v3860, 7
        %v3862 = vsub.s32 %v3119, %v3861
        %v3863 = vrot.slane %v2742, %v3862
        %v3864 = vsel %vm3124, %v3863, %v3859
        %v3865 = vlaneseq
        %v3866 = vshrl.u32 %v3865, 7
        %v3867 = vsub.s32 %v3126, %v3866
        %v3868 = vrot.slane %v2743, %v3867
        %v3869 = vsel %vm3131, %v3868, %v3864
        %v3870 = vlaneseq
        %v3871 = vshrl.u32 %v3870, 7
        %v3872 = vsub.s32 %v3133, %v3871
        %v3873 = vrot.slane %v2744, %v3872
        %v3874 = vsel %vm3138, %v3873, %v3869
        %v3875 = vlaneseq
        %v3876 = vshrl.u32 %v3875, 7
        %v3877 = vsub.s32 %v3140, %v3876
        %v3878 = vrot.slane %v2745, %v3877
        %v3879 = vsel %vm3145, %v3878, %v3874
        %v3880 = vlaneseq
        %v3881 = vshrl.u32 %v3880, 7
        %v3882 = vsub.s32 %v3147, %v3881
        %v3883 = vrot.slane %v2746, %v3882
        %v3884 = vsel %vm3152, %v3883, %v3879
        %v3885 = vlaneseq
        %v3886 = vshrl.u32 %v3885, 7
        %v3887 = vsub.s32 %v3154, %v3886
        %v3888 = vrot.slane %v2747, %v3887
        %v3889 = vsel %vm3159, %v3888, %v3884
        %v3890 = vlaneseq
        %v3891 = vshrl.u32 %v3890, 7
        %v3892 = vsub.s32 %v3161, %v3891
        %v3893 = vrot.slane %v2748, %v3892
        %v3894 = vsel %vm3166, %v3893, %v3889
        %v3895 = vlaneseq
        %v3896 = vshrl.u32 %v3895, 7
        %v3897 = vsub.s32 %v3168, %v3896
        %v3898 = vrot.slane %v2749, %v3897
        %v3899 = vsel %vm3173, %v3898, %v3894
        %v3900 = vlaneseq
        %v3901 = vshrl.u32 %v3900, 7
        %v3902 = vsub.s32 %v3175, %v3901
        %v3903 = vrot.slane %v2750, %v3902
        %v3904 = vsel %vm3180, %v3903, %v3899
        %v3905 = vlaneseq
        %v3906 = vshrl.u32 %v3905, 7
        %v3907 = vsub.s32 %v3182, %v3906
        %v3908 = vrot.slane %v2751, %v3907
        %v3909 = vsel %vm3187, %v3908, %v3904
        %v3910 = vlaneseq
        %v3911 = vshrl.u32 %v3910, 7
        %v3912 = vsub.s32 %v3189, %v3911
        %v3913 = vrot.slane %v2752, %v3912
        %v3914 = vsel %vm3194, %v3913, %v3909
        %v3915 = vlaneseq
        %v3916 = vshrl.u32 %v3915, 7
        %v3917 = vsub.s32 %v3196, %v3916
        %v3918 = vrot.slane %v2753, %v3917
        %v3919 = vsel %vm3201, %v3918, %v3914
        %v3920 = vlaneseq
        %v3921 = vshrl.u32 %v3920, 7
        %v3922 = vsub.s32 %v3203, %v3921
        %v3923 = vrot.slane %v2754, %v3922
        %v3924 = vsel %vm3208, %v3923, %v3919
        %v3925 = vlaneseq
        %v3926 = vshrl.u32 %v3925, 7
        %v3927 = vsub.s32 %v3210, %v3926
        %v3928 = vrot.slane %v2755, %v3927
        %v3929 = vsel %vm3215, %v3928, %v3924
        %v3930 = vlaneseq
        %v3931 = vshrl.u32 %v3930, 7
        %v3932 = vsub.s32 %v3217, %v3931
        %v3933 = vrot.slane %v2756, %v3932
        %v3934 = vsel %vm3222, %v3933, %v3929
        %v3935 = vlaneseq
        %v3936 = vshrl.u32 %v3935, 7
        %v3937 = vsub.s32 %v3114, %v3936
        %v3938 = vrot.slane %v2757, %v3937
        %v3939 = vlaneseq
        %v3940 = vshrl.u32 %v3939, 7
        %v3941 = vsub.s32 %v3119, %v3940
        %v3942 = vrot.slane %v2758, %v3941
        %v3943 = vsel %vm3124, %v3942, %v3938
        %v3944 = vlaneseq
        %v3945 = vshrl.u32 %v3944, 7
        %v3946 = vsub.s32 %v3126, %v3945
        %v3947 = vrot.slane %v2759, %v3946
        %v3948 = vsel %vm3131, %v3947, %v3943
        %v3949 = vlaneseq
        %v3950 = vshrl.u32 %v3949, 7
        %v3951 = vsub.s32 %v3133, %v3950
        %v3952 = vrot.slane %v2760, %v3951
        %v3953 = vsel %vm3138, %v3952, %v3948
        %v3954 = vlaneseq
        %v3955 = vshrl.u32 %v3954, 7
        %v3956 = vsub.s32 %v3140, %v3955
        %v3957 = vrot.slane %v2761, %v3956
        %v3958 = vsel %vm3145, %v3957, %v3953
        %v3959 = vlaneseq
        %v3960 = vshrl.u32 %v3959, 7
        %v3961 = vsub.s32 %v3147, %v3960
        %v3962 = vrot.slane %v2762, %v3961
        %v3963 = vsel %vm3152, %v3962, %v3958
        %v3964 = vlaneseq
        %v3965 = vshrl.u32 %v3964, 7
        %v3966 = vsub.s32 %v3154, %v3965
        %v3967 = vrot.slane %v2763, %v3966
        %v3968 = vsel %vm3159, %v3967, %v3963
        %v3969 = vlaneseq
        %v3970 = vshrl.u32 %v3969, 7
        %v3971 = vsub.s32 %v3161, %v3970
        %v3972 = vrot.slane %v2764, %v3971
        %v3973 = vsel %vm3166, %v3972, %v3968
        %v3974 = vlaneseq
        %v3975 = vshrl.u32 %v3974, 7
        %v3976 = vsub.s32 %v3168, %v3975
        %v3977 = vrot.slane %v2765, %v3976
        %v3978 = vsel %vm3173, %v3977, %v3973
        %v3979 = vlaneseq
        %v3980 = vshrl.u32 %v3979, 7
        %v3981 = vsub.s32 %v3175, %v3980
        %v3982 = vrot.slane %v2766, %v3981
        %v3983 = vsel %vm3180, %v3982, %v3978
        %v3984 = vlaneseq
        %v3985 = vshrl.u32 %v3984, 7
        %v3986 = vsub.s32 %v3182, %v3985
        %v3987 = vrot.slane %v2767, %v3986
        %v3988 = vsel %vm3187, %v3987, %v3983
        %v3989 = vlaneseq
        %v3990 = vshrl.u32 %v3989, 7
        %v3991 = vsub.s32 %v3189, %v3990
        %v3992 = vrot.slane %v2768, %v3991
        %v3993 = vsel %vm3194, %v3992, %v3988
        %v3994 = vlaneseq
        %v3995 = vshrl.u32 %v3994, 7
        %v3996 = vsub.s32 %v3196, %v3995
        %v3997 = vrot.slane %v2769, %v3996
        %v3998 = vsel %vm3201, %v3997, %v3993
        %v3999 = vlaneseq
        %v4000 = vshrl.u32 %v3999, 7
        %v4001 = vsub.s32 %v3203, %v4000
        %v4002 = vrot.slane %v2770, %v4001
        %v4003 = vsel %vm3208, %v4002, %v3998
        %v4004 = vlaneseq
        %v4005 = vshrl.u32 %v4004, 7
        %v4006 = vsub.s32 %v3210, %v4005
        %v4007 = vrot.slane %v2771, %v4006
        %v4008 = vsel %vm3215, %v4007, %v4003
        %v4009 = vlaneseq
        %v4010 = vshrl.u32 %v4009, 7
        %v4011 = vsub.s32 %v3217, %v4010
        %v4012 = vrot.slane %v2772, %v4011
        %v4013 = vsel %vm3222, %v4012, %v4008
        %v4014 = vlaneseq
        %v4015 = vshrl.u32 %v4014, 7
        %v4016 = vsub.s32 %v3114, %v4015
        %v4017 = vrot.slane %v2773, %v4016
        %v4018 = vlaneseq
        %v4019 = vshrl.u32 %v4018, 7
        %v4020 = vsub.s32 %v3119, %v4019
        %v4021 = vrot.slane %v2774, %v4020
        %v4022 = vsel %vm3124, %v4021, %v4017
        %v4023 = vlaneseq
        %v4024 = vshrl.u32 %v4023, 7
        %v4025 = vsub.s32 %v3126, %v4024
        %v4026 = vrot.slane %v2775, %v4025
        %v4027 = vsel %vm3131, %v4026, %v4022
        %v4028 = vlaneseq
        %v4029 = vshrl.u32 %v4028, 7
        %v4030 = vsub.s32 %v3133, %v4029
        %v4031 = vrot.slane %v2776, %v4030
        %v4032 = vsel %vm3138, %v4031, %v4027
        %v4033 = vlaneseq
        %v4034 = vshrl.u32 %v4033, 7
        %v4035 = vsub.s32 %v3140, %v4034
        %v4036 = vrot.slane %v2777, %v4035
        %v4037 = vsel %vm3145, %v4036, %v4032
        %v4038 = vlaneseq
        %v4039 = vshrl.u32 %v4038, 7
        %v4040 = vsub.s32 %v3147, %v4039
        %v4041 = vrot.slane %v2778, %v4040
        %v4042 = vsel %vm3152, %v4041, %v4037
        %v4043 = vlaneseq
        %v4044 = vshrl.u32 %v4043, 7
        %v4045 = vsub.s32 %v3154, %v4044
        %v4046 = vrot.slane %v2779, %v4045
        %v4047 = vsel %vm3159, %v4046, %v4042
        %v4048 = vlaneseq
        %v4049 = vshrl.u32 %v4048, 7
        %v4050 = vsub.s32 %v3161, %v4049
        %v4051 = vrot.slane %v2780, %v4050
        %v4052 = vsel %vm3166, %v4051, %v4047
        %v4053 = vlaneseq
        %v4054 = vshrl.u32 %v4053, 7
        %v4055 = vsub.s32 %v3168, %v4054
        %v4056 = vrot.slane %v2781, %v4055
        %v4057 = vsel %vm3173, %v4056, %v4052
        %v4058 = vlaneseq
        %v4059 = vshrl.u32 %v4058, 7
        %v4060 = vsub.s32 %v3175, %v4059
        %v4061 = vrot.slane %v2782, %v4060
        %v4062 = vsel %vm3180, %v4061, %v4057
        %v4063 = vlaneseq
        %v4064 = vshrl.u32 %v4063, 7
        %v4065 = vsub.s32 %v3182, %v4064
        %v4066 = vrot.slane %v2783, %v4065
        %v4067 = vsel %vm3187, %v4066, %v4062
        %v4068 = vlaneseq
        %v4069 = vshrl.u32 %v4068, 7
        %v4070 = vsub.s32 %v3189, %v4069
        %v4071 = vrot.slane %v2784, %v4070
        %v4072 = vsel %vm3194, %v4071, %v4067
        %v4073 = vlaneseq
        %v4074 = vshrl.u32 %v4073, 7
        %v4075 = vsub.s32 %v3196, %v4074
        %v4076 = vrot.slane %v2785, %v4075
        %v4077 = vsel %vm3201, %v4076, %v4072
        %v4078 = vlaneseq
        %v4079 = vshrl.u32 %v4078, 7
        %v4080 = vsub.s32 %v3203, %v4079
        %v4081 = vrot.slane %v2786, %v4080
        %v4082 = vsel %vm3208, %v4081, %v4077
        %v4083 = vlaneseq
        %v4084 = vshrl.u32 %v4083, 7
        %v4085 = vsub.s32 %v3210, %v4084
        %v4086 = vrot.slane %v2787, %v4085
        %v4087 = vsel %vm3215, %v4086, %v4082
        %v4088 = vlaneseq
        %v4089 = vshrl.u32 %v4088, 7
        %v4090 = vsub.s32 %v3217, %v4089
        %v4091 = vrot.slane %v2788, %v4090
        %v4092 = vsel %vm3222, %v4091, %v4087
        %v4093 = vlaneseq
        %v4094 = vshrl.u32 %v4093, 7
        %v4095 = vsub.s32 %v3114, %v4094
        %v4096 = vrot.slane %v2789, %v4095
        %v4097 = vlaneseq
        %v4098 = vshrl.u32 %v4097, 7
        %v4099 = vsub.s32 %v3119, %v4098
        %v4100 = vrot.slane %v2790, %v4099
        %v4101 = vsel %vm3124, %v4100, %v4096
        %v4102 = vlaneseq
        %v4103 = vshrl.u32 %v4102, 7
        %v4104 = vsub.s32 %v3126, %v4103
        %v4105 = vrot.slane %v2791, %v4104
        %v4106 = vsel %vm3131, %v4105, %v4101
        %v4107 = vlaneseq
        %v4108 = vshrl.u32 %v4107, 7
        %v4109 = vsub.s32 %v3133, %v4108
        %v4110 = vrot.slane %v2792, %v4109
        %v4111 = vsel %vm3138, %v4110, %v4106
        %v4112 = vlaneseq
        %v4113 = vshrl.u32 %v4112, 7
        %v4114 = vsub.s32 %v3140, %v4113
        %v4115 = vrot.slane %v2793, %v4114
        %v4116 = vsel %vm3145, %v4115, %v4111
        %v4117 = vlaneseq
        %v4118 = vshrl.u32 %v4117, 7
        %v4119 = vsub.s32 %v3147, %v4118
        %v4120 = vrot.slane %v2794, %v4119
        %v4121 = vsel %vm3152, %v4120, %v4116
        %v4122 = vlaneseq
        %v4123 = vshrl.u32 %v4122, 7
        %v4124 = vsub.s32 %v3154, %v4123
        %v4125 = vrot.slane %v2795, %v4124
        %v4126 = vsel %vm3159, %v4125, %v4121
        %v4127 = vlaneseq
        %v4128 = vshrl.u32 %v4127, 7
        %v4129 = vsub.s32 %v3161, %v4128
        %v4130 = vrot.slane %v2796, %v4129
        %v4131 = vsel %vm3166, %v4130, %v4126
        %v4132 = vlaneseq
        %v4133 = vshrl.u32 %v4132, 7
        %v4134 = vsub.s32 %v3168, %v4133
        %v4135 = vrot.slane %v2797, %v4134
        %v4136 = vsel %vm3173, %v4135, %v4131
        %v4137 = vlaneseq
        %v4138 = vshrl.u32 %v4137, 7
        %v4139 = vsub.s32 %v3175, %v4138
        %v4140 = vrot.slane %v2798, %v4139
        %v4141 = vsel %vm3180, %v4140, %v4136
        %v4142 = vlaneseq
        %v4143 = vshrl.u32 %v4142, 7
        %v4144 = vsub.s32 %v3182, %v4143
        %v4145 = vrot.slane %v2799, %v4144
        %v4146 = vsel %vm3187, %v4145, %v4141
        %v4147 = vlaneseq
        %v4148 = vshrl.u32 %v4147, 7
        %v4149 = vsub.s32 %v3189, %v4148
        %v4150 = vrot.slane %v2800, %v4149
        %v4151 = vsel %vm3194, %v4150, %v4146
        %v4152 = vlaneseq
        %v4153 = vshrl.u32 %v4152, 7
        %v4154 = vsub.s32 %v3196, %v4153
        %v4155 = vrot.slane %v2801, %v4154
        %v4156 = vsel %vm3201, %v4155, %v4151
        %v4157 = vlaneseq
        %v4158 = vshrl.u32 %v4157, 7
        %v4159 = vsub.s32 %v3203, %v4158
        %v4160 = vrot.slane %v2802, %v4159
        %v4161 = vsel %vm3208, %v4160, %v4156
        %v4162 = vlaneseq
        %v4163 = vshrl.u32 %v4162, 7
        %v4164 = vsub.s32 %v3210, %v4163
        %v4165 = vrot.slane %v2803, %v4164
        %v4166 = vsel %vm3215, %v4165, %v4161
        %v4167 = vlaneseq
        %v4168 = vshrl.u32 %v4167, 7
        %v4169 = vsub.s32 %v3217, %v4168
        %v4170 = vrot.slane %v2804, %v4169
        %v4171 = vsel %vm3222, %v4170, %v4166
        %v4172 = vlaneseq
        %v4173 = vshrl.u32 %v4172, 7
        %v4174 = vsub.s32 %v3114, %v4173
        %v4175 = vrot.slane %v2805, %v4174
        %v4176 = vlaneseq
        %v4177 = vshrl.u32 %v4176, 7
        %v4178 = vsub.s32 %v3119, %v4177
        %v4179 = vrot.slane %v2806, %v4178
        %v4180 = vsel %vm3124, %v4179, %v4175
        %v4181 = vlaneseq
        %v4182 = vshrl.u32 %v4181, 7
        %v4183 = vsub.s32 %v3126, %v4182
        %v4184 = vrot.slane %v2807, %v4183
        %v4185 = vsel %vm3131, %v4184, %v4180
        %v4186 = vlaneseq
        %v4187 = vshrl.u32 %v4186, 7
        %v4188 = vsub.s32 %v3133, %v4187
        %v4189 = vrot.slane %v2808, %v4188
        %v4190 = vsel %vm3138, %v4189, %v4185
        %v4191 = vlaneseq
        %v4192 = vshrl.u32 %v4191, 7
        %v4193 = vsub.s32 %v3140, %v4192
        %v4194 = vrot.slane %v2809, %v4193
        %v4195 = vsel %vm3145, %v4194, %v4190
        %v4196 = vlaneseq
        %v4197 = vshrl.u32 %v4196, 7
        %v4198 = vsub.s32 %v3147, %v4197
        %v4199 = vrot.slane %v2810, %v4198
        %v4200 = vsel %vm3152, %v4199, %v4195
        %v4201 = vlaneseq
        %v4202 = vshrl.u32 %v4201, 7
        %v4203 = vsub.s32 %v3154, %v4202
        %v4204 = vrot.slane %v2811, %v4203
        %v4205 = vsel %vm3159, %v4204, %v4200
        %v4206 = vlaneseq
        %v4207 = vshrl.u32 %v4206, 7
        %v4208 = vsub.s32 %v3161, %v4207
        %v4209 = vrot.slane %v2812, %v4208
        %v4210 = vsel %vm3166, %v4209, %v4205
        %v4211 = vlaneseq
        %v4212 = vshrl.u32 %v4211, 7
        %v4213 = vsub.s32 %v3168, %v4212
        %v4214 = vrot.slane %v2813, %v4213
        %v4215 = vsel %vm3173, %v4214, %v4210
        %v4216 = vlaneseq
        %v4217 = vshrl.u32 %v4216, 7
        %v4218 = vsub.s32 %v3175, %v4217
        %v4219 = vrot.slane %v2814, %v4218
        %v4220 = vsel %vm3180, %v4219, %v4215
        %v4221 = vlaneseq
        %v4222 = vshrl.u32 %v4221, 7
        %v4223 = vsub.s32 %v3182, %v4222
        %v4224 = vrot.slane %v2815, %v4223
        %v4225 = vsel %vm3187, %v4224, %v4220
        %v4226 = vlaneseq
        %v4227 = vshrl.u32 %v4226, 7
        %v4228 = vsub.s32 %v3189, %v4227
        %v4229 = vrot.slane %v2816, %v4228
        %v4230 = vsel %vm3194, %v4229, %v4225
        %v4231 = vlaneseq
        %v4232 = vshrl.u32 %v4231, 7
        %v4233 = vsub.s32 %v3196, %v4232
        %v4234 = vrot.slane %v2817, %v4233
        %v4235 = vsel %vm3201, %v4234, %v4230
        %v4236 = vlaneseq
        %v4237 = vshrl.u32 %v4236, 7
        %v4238 = vsub.s32 %v3203, %v4237
        %v4239 = vrot.slane %v2818, %v4238
        %v4240 = vsel %vm3208, %v4239, %v4235
        %v4241 = vlaneseq
        %v4242 = vshrl.u32 %v4241, 7
        %v4243 = vsub.s32 %v3210, %v4242
        %v4244 = vrot.slane %v2819, %v4243
        %v4245 = vsel %vm3215, %v4244, %v4240
        %v4246 = vlaneseq
        %v4247 = vshrl.u32 %v4246, 7
        %v4248 = vsub.s32 %v3217, %v4247
        %v4249 = vrot.slane %v2820, %v4248
        %v4250 = vsel %vm3222, %v4249, %v4245
        %v4251 = vlaneseq
        %v4252 = vshrl.u32 %v4251, 7
        %v4253 = vsub.s32 %v3114, %v4252
        %v4254 = vrot.slane %v2821, %v4253
        %v4255 = vlaneseq
        %v4256 = vshrl.u32 %v4255, 7
        %v4257 = vsub.s32 %v3119, %v4256
        %v4258 = vrot.slane %v2822, %v4257
        %v4259 = vsel %vm3124, %v4258, %v4254
        %v4260 = vlaneseq
        %v4261 = vshrl.u32 %v4260, 7
        %v4262 = vsub.s32 %v3126, %v4261
        %v4263 = vrot.slane %v2823, %v4262
        %v4264 = vsel %vm3131, %v4263, %v4259
        %v4265 = vlaneseq
        %v4266 = vshrl.u32 %v4265, 7
        %v4267 = vsub.s32 %v3133, %v4266
        %v4268 = vrot.slane %v2824, %v4267
        %v4269 = vsel %vm3138, %v4268, %v4264
        %v4270 = vlaneseq
        %v4271 = vshrl.u32 %v4270, 7
        %v4272 = vsub.s32 %v3140, %v4271
        %v4273 = vrot.slane %v2825, %v4272
        %v4274 = vsel %vm3145, %v4273, %v4269
        %v4275 = vlaneseq
        %v4276 = vshrl.u32 %v4275, 7
        %v4277 = vsub.s32 %v3147, %v4276
        %v4278 = vrot.slane %v2826, %v4277
        %v4279 = vsel %vm3152, %v4278, %v4274
        %v4280 = vlaneseq
        %v4281 = vshrl.u32 %v4280, 7
        %v4282 = vsub.s32 %v3154, %v4281
        %v4283 = vrot.slane %v2827, %v4282
        %v4284 = vsel %vm3159, %v4283, %v4279
        %v4285 = vlaneseq
        %v4286 = vshrl.u32 %v4285, 7
        %v4287 = vsub.s32 %v3161, %v4286
        %v4288 = vrot.slane %v2828, %v4287
        %v4289 = vsel %vm3166, %v4288, %v4284
        %v4290 = vlaneseq
        %v4291 = vshrl.u32 %v4290, 7
        %v4292 = vsub.s32 %v3168, %v4291
        %v4293 = vrot.slane %v2829, %v4292
        %v4294 = vsel %vm3173, %v4293, %v4289
        %v4295 = vlaneseq
        %v4296 = vshrl.u32 %v4295, 7
        %v4297 = vsub.s32 %v3175, %v4296
        %v4298 = vrot.slane %v2830, %v4297
        %v4299 = vsel %vm3180, %v4298, %v4294
        %v4300 = vlaneseq
        %v4301 = vshrl.u32 %v4300, 7
        %v4302 = vsub.s32 %v3182, %v4301
        %v4303 = vrot.slane %v2831, %v4302
        %v4304 = vsel %vm3187, %v4303, %v4299
        %v4305 = vlaneseq
        %v4306 = vshrl.u32 %v4305, 7
        %v4307 = vsub.s32 %v3189, %v4306
        %v4308 = vrot.slane %v2832, %v4307
        %v4309 = vsel %vm3194, %v4308, %v4304
        %v4310 = vlaneseq
        %v4311 = vshrl.u32 %v4310, 7
        %v4312 = vsub.s32 %v3196, %v4311
        %v4313 = vrot.slane %v2833, %v4312
        %v4314 = vsel %vm3201, %v4313, %v4309
        %v4315 = vlaneseq
        %v4316 = vshrl.u32 %v4315, 7
        %v4317 = vsub.s32 %v3203, %v4316
        %v4318 = vrot.slane %v2834, %v4317
        %v4319 = vsel %vm3208, %v4318, %v4314
        %v4320 = vlaneseq
        %v4321 = vshrl.u32 %v4320, 7
        %v4322 = vsub.s32 %v3210, %v4321
        %v4323 = vrot.slane %v2835, %v4322
        %v4324 = vsel %vm3215, %v4323, %v4319
        %v4325 = vlaneseq
        %v4326 = vshrl.u32 %v4325, 7
        %v4327 = vsub.s32 %v3217, %v4326
        %v4328 = vrot.slane %v2836, %v4327
        %v4329 = vsel %vm3222, %v4328, %v4324
        %v4330 = vlaneseq
        %v4331 = vshrl.u32 %v4330, 7
        %v4332 = vsub.s32 %v3114, %v4331
        %v4333 = vrot.slane %v2837, %v4332
        %v4334 = vlaneseq
        %v4335 = vshrl.u32 %v4334, 7
        %v4336 = vsub.s32 %v3119, %v4335
        %v4337 = vrot.slane %v2838, %v4336
        %v4338 = vsel %vm3124, %v4337, %v4333
        %v4339 = vlaneseq
        %v4340 = vshrl.u32 %v4339, 7
        %v4341 = vsub.s32 %v3126, %v4340
        %v4342 = vrot.slane %v2839, %v4341
        %v4343 = vsel %vm3131, %v4342, %v4338
        %v4344 = vlaneseq
        %v4345 = vshrl.u32 %v4344, 7
        %v4346 = vsub.s32 %v3133, %v4345
        %v4347 = vrot.slane %v2840, %v4346
        %v4348 = vsel %vm3138, %v4347, %v4343
        %v4349 = vlaneseq
        %v4350 = vshrl.u32 %v4349, 7
        %v4351 = vsub.s32 %v3140, %v4350
        %v4352 = vrot.slane %v2841, %v4351
        %v4353 = vsel %vm3145, %v4352, %v4348
        %v4354 = vlaneseq
        %v4355 = vshrl.u32 %v4354, 7
        %v4356 = vsub.s32 %v3147, %v4355
        %v4357 = vrot.slane %v2842, %v4356
        %v4358 = vsel %vm3152, %v4357, %v4353
        %v4359 = vlaneseq
        %v4360 = vshrl.u32 %v4359, 7
        %v4361 = vsub.s32 %v3154, %v4360
        %v4362 = vrot.slane %v2843, %v4361
        %v4363 = vsel %vm3159, %v4362, %v4358
        %v4364 = vlaneseq
        %v4365 = vshrl.u32 %v4364, 7
        %v4366 = vsub.s32 %v3161, %v4365
        %v4367 = vrot.slane %v2844, %v4366
        %v4368 = vsel %vm3166, %v4367, %v4363
        %v4369 = vlaneseq
        %v4370 = vshrl.u32 %v4369, 7
        %v4371 = vsub.s32 %v3168, %v4370
        %v4372 = vrot.slane %v2845, %v4371
        %v4373 = vsel %vm3173, %v4372, %v4368
        %v4374 = vlaneseq
        %v4375 = vshrl.u32 %v4374, 7
        %v4376 = vsub.s32 %v3175, %v4375
        %v4377 = vrot.slane %v2846, %v4376
        %v4378 = vsel %vm3180, %v4377, %v4373
        %v4379 = vlaneseq
        %v4380 = vshrl.u32 %v4379, 7
        %v4381 = vsub.s32 %v3182, %v4380
        %v4382 = vrot.slane %v2847, %v4381
        %v4383 = vsel %vm3187, %v4382, %v4378
        %v4384 = vlaneseq
        %v4385 = vshrl.u32 %v4384, 7
        %v4386 = vsub.s32 %v3189, %v4385
        %v4387 = vrot.slane %v2848, %v4386
        %v4388 = vsel %vm3194, %v4387, %v4383
        %v4389 = vlaneseq
        %v4390 = vshrl.u32 %v4389, 7
        %v4391 = vsub.s32 %v3196, %v4390
        %v4392 = vrot.slane %v2849, %v4391
        %v4393 = vsel %vm3201, %v4392, %v4388
        %v4394 = vlaneseq
        %v4395 = vshrl.u32 %v4394, 7
        %v4396 = vsub.s32 %v3203, %v4395
        %v4397 = vrot.slane %v2850, %v4396
        %v4398 = vsel %vm3208, %v4397, %v4393
        %v4399 = vlaneseq
        %v4400 = vshrl.u32 %v4399, 7
        %v4401 = vsub.s32 %v3210, %v4400
        %v4402 = vrot.slane %v2851, %v4401
        %v4403 = vsel %vm3215, %v4402, %v4398
        %v4404 = vlaneseq
        %v4405 = vshrl.u32 %v4404, 7
        %v4406 = vsub.s32 %v3217, %v4405
        %v4407 = vrot.slane %v2852, %v4406
        %v4408 = vsel %vm3222, %v4407, %v4403
        %vm4409 = vcmask 1041409
        %v4410 = vsel %vm4409, %v3381, %v3223
        %vm4411 = vcmask 1042434
        %v4412 = vsel %vm4411, %v3539, %v4410
        %vm4413 = vcmask 1043459
        %v4414 = vsel %vm4413, %v3697, %v4412
        %vm4415 = vcmask 1044484
        %v4416 = vsel %vm4415, %v3855, %v4414
        %vm4417 = vcmask 1045509
        %v4418 = vsel %vm4417, %v4013, %v4416
        %vm4419 = vcmask 1046534
        %v4420 = vsel %vm4419, %v4171, %v4418
        %vm4421 = vcmask 1047559
        %v4422 = vsel %vm4421, %v4329, %v4420
        %v4423 = vsel %vm4409, %v3460, %v3302
        %v4424 = vsel %vm4411, %v3618, %v4423
        %v4425 = vsel %vm4413, %v3776, %v4424
        %v4426 = vsel %vm4415, %v3934, %v4425
        %v4427 = vsel %vm4417, %v4092, %v4426
        %v4428 = vsel %vm4419, %v4250, %v4427
        %v4429 = vsel %vm4421, %v4408, %v4428
        %v4432 = vsel %vm2855, -1e+09, %v4422
        %v4433 = vsel %vm2856, -1e+09, %v4429
        %v4434 = vmax.f32 %v4432, %v4433
        %4435 = vmax.xlane.f32.xlu0 %v4434
        %v4436 = vpop.xlane.xlu0 %4435
        %v4437 = vsub.f32 %v4432, %v4436
        %v4438 = vsub.f32 %v4433, %v4436
        %v4439 = vmul.f32 %v4437, 1.442695
        %v4440 = vpow.pop %v4439
        %v4441 = vmul.f32 %v4438, 1.442695
        %v4442 = vpow.pop %v4441
        %v4443 = vadd.f32 %v4440, %v4442
        %4444 = vadd.xlane.f32.xlu0 %v4443
        %v4445 = vpop.xlane.xlu0 %4444
        %v4446 = vrcp.pop %v4445
        %v4447 = vmul.f32 %v4440, %v4446
        %v4448 = vmul.f32 %v4442, %v4446
        %v4449 = vld [vmem:[%s5] sm:$0xff]
        %v4450 = vld [vmem:[%s5 + $0x8] sm:$0xff]
        %v4451 = vld [vmem:[%s5 + $0x10] sm:$0xff]
        %v4452 = vld [vmem:[%s5 + $0x18] sm:$0xff]
        %v4453 = vld [vmem:[%s5 + $0x20] sm:$0xff]
        %v4454 = vld [vmem:[%s5 + $0x28] sm:$0xff]
        %v4455 = vld [vmem:[%s5 + $0x30] sm:$0xff]
        %v4456 = vld [vmem:[%s5 + $0x38] sm:$0xff]
        %v4457 = vld [vmem:[%s5 + $0x40] sm:$0xff]
        %v4458 = vld [vmem:[%s5 + $0x48] sm:$0xff]
        %v4459 = vld [vmem:[%s5 + $0x50] sm:$0xff]
        %v4460 = vld [vmem:[%s5 + $0x58] sm:$0xff]
        %v4461 = vld [vmem:[%s5 + $0x60] sm:$0xff]
        %v4462 = vld [vmem:[%s5 + $0x68] sm:$0xff]
        %v4463 = vld [vmem:[%s5 + $0x70] sm:$0xff]
        %v4464 = vld [vmem:[%s5 + $0x78] sm:$0xff]
        %v4465 = vld [vmem:[%s5 + $0x80] sm:$0xff]
        %v4466 = vld [vmem:[%s5 + $0x88] sm:$0xff]
        %v4467 = vld [vmem:[%s5 + $0x90] sm:$0xff]
        %v4468 = vld [vmem:[%s5 + $0x98] sm:$0xff]
        %v4469 = vld [vmem:[%s5 + $0xa0] sm:$0xff]
        %v4470 = vld [vmem:[%s5 + $0xa8] sm:$0xff]
        %v4471 = vld [vmem:[%s5 + $0xb0] sm:$0xff]
        %v4472 = vld [vmem:[%s5 + $0xb8] sm:$0xff]
        %v4473 = vld [vmem:[%s5 + $0xc0] sm:$0xff]
        %v4474 = vld [vmem:[%s5 + $0xc8] sm:$0xff]
        %v4475 = vld [vmem:[%s5 + $0xd0] sm:$0xff]
        %v4476 = vld [vmem:[%s5 + $0xd8] sm:$0xff]
        %v4477 = vld [vmem:[%s5 + $0xe0] sm:$0xff]
        %v4478 = vld [vmem:[%s5 + $0xe8] sm:$0xff]
        %v4479 = vld [vmem:[%s5 + $0xf0] sm:$0xff]
        %v4480 = vld [vmem:[%s5 + $0xf8] sm:$0xff]
        %v4481 = vlaneseq
        %v4482 = vshrl.u32 %v4481, 7
        %v4483 = vsub.s32 0, %v4482
        %v4484 = vrot.slane %v530, %v4483
        %4485 = vmatprep.subr.mxu0 0.0
        %4486 = vmatpush1.msra.mxu0 %v4449
        %4487 = vmatprep.subr.mxu0 0.0
        %4488 = vmatpush1.msra.mxu0 %v4450
        %4489 = vmatprep.subr.mxu0 0.0
        %4490 = vmatpush1.msra.mxu0 %v4451
        %4491 = vmatprep.subr.mxu0 0.0
        %4492 = vmatpush1.msra.mxu0 %v4452
        %4493 = vmatprep.subr.mxu0 0.0
        %4494 = vmatpush1.msra.mxu0 %v4453
        %4495 = vmatprep.subr.mxu0 0.0
        %4496 = vmatpush1.msra.mxu0 %v4454
        %4497 = vmatprep.subr.mxu0 0.0
        %4498 = vmatpush1.msra.mxu0 %v4455
        %4499 = vmatprep.subr.mxu0 0.0
        %4500 = vmatpush1.msra.mxu0 %v4456
        %4501 = vmatprep.subr.mxu0 0.0
        %4502 = vmatpush1.msra.mxu0 %v4457
        %4503 = vmatprep.subr.mxu0 0.0
        %4504 = vmatpush1.msra.mxu0 %v4458
        %4505 = vmatprep.subr.mxu0 0.0
        %4506 = vmatpush1.msra.mxu0 %v4459
        %4507 = vmatprep.subr.mxu0 0.0
        %4508 = vmatpush1.msra.mxu0 %v4460
        %4509 = vmatprep.subr.mxu0 0.0
        %4510 = vmatpush1.msra.mxu0 %v4461
        %4511 = vmatprep.subr.mxu0 0.0
        %4512 = vmatpush1.msra.mxu0 %v4462
        %4513 = vmatprep.subr.mxu0 0.0
        %4514 = vmatpush1.msra.mxu0 %v4463
        %4515 = vmatprep.subr.mxu0 0.0
        %4516 = vmatpush1.msra.mxu0 %v4464
        %4517 = vmatprep.subr.mxu0 0.0
        %4518 = vmatpush1.msra.mxu0 %v4465
        %4519 = vmatprep.subr.mxu0 0.0
        %4520 = vmatpush1.msra.mxu0 %v4466
        %4521 = vmatprep.subr.mxu0 0.0
        %4522 = vmatpush1.msra.mxu0 %v4467
        %4523 = vmatprep.subr.mxu0 0.0
        %4524 = vmatpush1.msra.mxu0 %v4468
        %4525 = vmatprep.subr.mxu0 0.0
        %4526 = vmatpush1.msra.mxu0 %v4469
        %4527 = vmatprep.subr.mxu0 0.0
        %4528 = vmatpush1.msra.mxu0 %v4470
        %4529 = vmatprep.subr.mxu0 0.0
        %4530 = vmatpush1.msra.mxu0 %v4471
        %4531 = vmatprep.subr.mxu0 0.0
        %4532 = vmatpush1.msra.mxu0 %v4472
        %4533 = vmatprep.subr.mxu0 0.0
        %4534 = vmatpush1.msra.mxu0 %v4473
        %4535 = vmatprep.subr.mxu0 0.0
        %4536 = vmatpush1.msra.mxu0 %v4474
        %4537 = vmatprep.subr.mxu0 0.0
        %4538 = vmatpush1.msra.mxu0 %v4475
        %4539 = vmatprep.subr.mxu0 0.0
        %4540 = vmatpush1.msra.mxu0 %v4476
        %4541 = vmatprep.subr.mxu0 0.0
        %4542 = vmatpush1.msra.mxu0 %v4477
        %4543 = vmatprep.subr.mxu0 0.0
        %4544 = vmatpush1.msra.mxu0 %v4478
        %4545 = vmatprep.subr.mxu0 0.0
        %4546 = vmatpush1.msra.mxu0 %v4479
        %4547 = vmatprep.subr.mxu0 0.0
        %4548 = vmatpush1.msra.mxu0 %v4480
        %4549 = vmatprep.mubr.f32.mxu0 %v4448
        %4550 = vmatmul.mubr.f32.gmra.mrb[0].mxu0 %v4447
        %v4551 = vpop.f32.mrb[0].mxu0
        %v4552 = vadd.f32 %v4484, %v4551
        %v4553 = vpop.f32.mrb[0].mxu0
        %4554 = vdwg.mxu0
        %v4555 = vmax.f32 %v4552, 0.0
        %v4556 = vld [vmem:[%s6] sm:$0xff]
        %v4557 = vld [vmem:[%s6 + $0x8] sm:$0xff]
        %v4558 = vld [vmem:[%s6 + $0x10] sm:$0xff]
        %v4559 = vld [vmem:[%s6 + $0x18] sm:$0xff]
        %v4560 = vld [vmem:[%s6 + $0x20] sm:$0xff]
        %v4561 = vld [vmem:[%s6 + $0x28] sm:$0xff]
        %v4562 = vld [vmem:[%s6 + $0x30] sm:$0xff]
        %v4563 = vld [vmem:[%s6 + $0x38] sm:$0xff]
        %v4564 = vld [vmem:[%s6 + $0x40] sm:$0xff]
        %v4565 = vld [vmem:[%s6 + $0x48] sm:$0xff]
        %v4566 = vld [vmem:[%s6 + $0x50] sm:$0xff]
        %v4567 = vld [vmem:[%s6 + $0x58] sm:$0xff]
        %v4568 = vld [vmem:[%s6 + $0x60] sm:$0xff]
        %v4569 = vld [vmem:[%s6 + $0x68] sm:$0xff]
        %v4570 = vld [vmem:[%s6 + $0x70] sm:$0xff]
        %v4571 = vld [vmem:[%s6 + $0x78] sm:$0xff]
        %v4572 = vlaneseq
        %v4573 = vshrl.u32 %v4572, 7
        %v4574 = vsub.s32 1, %v4573
        %v4575 = vrot.slane %v530, %v4574
        %4576 = vmatprep.subr.mxu0 0.0
        %4577 = vmatpush1.msra.mxu0 %v4556
        %4578 = vmatprep.subr.mxu0 0.0
        %4579 = vmatpush1.msra.mxu0 %v4557
        %4580 = vmatprep.subr.mxu0 0.0
        %4581 = vmatpush1.msra.mxu0 %v4558
        %4582 = vmatprep.subr.mxu0 0.0
        %4583 = vmatpush1.msra.mxu0 %v4559
        %4584 = vmatprep.subr.mxu0 0.0
        %4585 = vmatpush1.msra.mxu0 %v4560
        %4586 = vmatprep.subr.mxu0 0.0
        %4587 = vmatpush1.msra.mxu0 %v4561
        %4588 = vmatprep.subr.mxu0 0.0
        %4589 = vmatpush1.msra.mxu0 %v4562
        %4590 = vmatprep.subr.mxu0 0.0
        %4591 = vmatpush1.msra.mxu0 %v4563
        %4592 = vmatprep.subr.mxu0 0.0
        %4593 = vmatpush1.msra.mxu0 %v4564
        %4594 = vmatprep.subr.mxu0 0.0
        %4595 = vmatpush1.msra.mxu0 %v4565
        %4596 = vmatprep.subr.mxu0 0.0
        %4597 = vmatpush1.msra.mxu0 %v4566
        %4598 = vmatprep.subr.mxu0 0.0
        %4599 = vmatpush1.msra.mxu0 %v4567
        %4600 = vmatprep.subr.mxu0 0.0
        %4601 = vmatpush1.msra.mxu0 %v4568
        %4602 = vmatprep.subr.mxu0 0.0
        %4603 = vmatpush1.msra.mxu0 %v4569
        %4604 = vmatprep.subr.mxu0 0.0
        %4605 = vmatpush1.msra.mxu0 %v4570
        %4606 = vmatprep.subr.mxu0 0.0
        %4607 = vmatpush1.msra.mxu0 %v4571
        %4608 = vmatprep.subr.mxu0 0.0
        %4609 = vmatpush1.msra.mxu0 0.0
        %4610 = vmatprep.subr.mxu0 0.0
        %4611 = vmatpush1.msra.mxu0 0.0
        %4612 = vmatprep.subr.mxu0 0.0
        %4613 = vmatpush1.msra.mxu0 0.0
        %4614 = vmatprep.subr.mxu0 0.0
        %4615 = vmatpush1.msra.mxu0 0.0
        %4616 = vmatprep.subr.mxu0 0.0
        %4617 = vmatpush1.msra.mxu0 0.0
        %4618 = vmatprep.subr.mxu0 0.0
        %4619 = vmatpush1.msra.mxu0 0.0
        %4620 = vmatprep.subr.mxu0 0.0
        %4621 = vmatpush1.msra.mxu0 0.0
        %4622 = vmatprep.subr.mxu0 0.0
        %4623 = vmatpush1.msra.mxu0 0.0
        %4624 = vmatprep.subr.mxu0 0.0
        %4625 = vmatpush1.msra.mxu0 0.0
        %4626 = vmatprep.subr.mxu0 0.0
        %4627 = vmatpush1.msra.mxu0 0.0
        %4628 = vmatprep.subr.mxu0 0.0
        %4629 = vmatpush1.msra.mxu0 0.0
        %4630 = vmatprep.subr.mxu0 0.0
        %4631 = vmatpush1.msra.mxu0 0.0
        %4632 = vmatprep.subr.mxu0 0.0
        %4633 = vmatpush1.msra.mxu0 0.0
        %4634 = vmatprep.subr.mxu0 0.0
        %4635 = vmatpush1.msra.mxu0 0.0
        %4636 = vmatprep.subr.mxu0 0.0
        %4637 = vmatpush1.msra.mxu0 0.0
        %4638 = vmatprep.subr.mxu0 0.0
        %4639 = vmatpush1.msra.mxu0 0.0
        %4640 = vmatprep.mubr.f32.mxu0 0.0
        %4641 = vmatmul.mubr.f32.gmra.mrb[0].mxu0 %v4555
        %v4642 = vpop.f32.mrb[0].mxu0
        %v4643 = vadd.f32 %v4575, %v4642
        %v4644 = vpop.f32.mrb[0].mxu0
        %4645 = vdwg.mxu0
        %v4646 = vmax.f32 %v4643, 0.0
        %v4647 = vld [vmem:[%s7] sm:$0xff]
        %v4648 = vld [vmem:[%s7 + $0x8] sm:$0xff]
        %v4649 = vld [vmem:[%s7 + $0x10] sm:$0xff]
        %v4650 = vld [vmem:[%s7 + $0x18] sm:$0xff]
        %v4651 = vld [vmem:[%s7 + $0x20] sm:$0xff]
        %v4652 = vld [vmem:[%s7 + $0x28] sm:$0xff]
        %v4653 = vld [vmem:[%s7 + $0x30] sm:$0xff]
        %v4654 = vld [vmem:[%s7 + $0x38] sm:$0xff]
        %v4655 = vlaneseq
        %v4656 = vshrl.u32 %v4655, 7
        %v4657 = vsub.s32 2, %v4656
        %v4658 = vrot.slane %v530, %v4657
        %vm4659 = vcmask 523264
        %v4661 = vsel %vm4659, %v4646, 0
        %4663 = vmatprep.subr.mxu0 0.0
        %4664 = vmatpush1.msra.mxu0 %v4647
        %4665 = vmatprep.subr.mxu0 0.0
        %4666 = vmatpush1.msra.mxu0 %v4648
        %4667 = vmatprep.subr.mxu0 0.0
        %4668 = vmatpush1.msra.mxu0 %v4649
        %4669 = vmatprep.subr.mxu0 0.0
        %4670 = vmatpush1.msra.mxu0 %v4650
        %4671 = vmatprep.subr.mxu0 0.0
        %4672 = vmatpush1.msra.mxu0 %v4651
        %4673 = vmatprep.subr.mxu0 0.0
        %4674 = vmatpush1.msra.mxu0 %v4652
        %4675 = vmatprep.subr.mxu0 0.0
        %4676 = vmatpush1.msra.mxu0 %v4653
        %4677 = vmatprep.subr.mxu0 0.0
        %4678 = vmatpush1.msra.mxu0 %v4654
        %4679 = vmatprep.subr.mxu0 0.0
        %4680 = vmatpush1.msra.mxu0 0.0
        %4681 = vmatprep.subr.mxu0 0.0
        %4682 = vmatpush1.msra.mxu0 0.0
        %4683 = vmatprep.subr.mxu0 0.0
        %4684 = vmatpush1.msra.mxu0 0.0
        %4685 = vmatprep.subr.mxu0 0.0
        %4686 = vmatpush1.msra.mxu0 0.0
        %4687 = vmatprep.subr.mxu0 0.0
        %4688 = vmatpush1.msra.mxu0 0.0
        %4689 = vmatprep.subr.mxu0 0.0
        %4690 = vmatpush1.msra.mxu0 0.0
        %4691 = vmatprep.subr.mxu0 0.0
        %4692 = vmatpush1.msra.mxu0 0.0
        %4693 = vmatprep.subr.mxu0 0.0
        %4694 = vmatpush1.msra.mxu0 0.0
        %4695 = vmatprep.subr.mxu0 0.0
        %4696 = vmatpush1.msra.mxu0 0.0
        %4697 = vmatprep.subr.mxu0 0.0
        %4698 = vmatpush1.msra.mxu0 0.0
        %4699 = vmatprep.subr.mxu0 0.0
        %4700 = vmatpush1.msra.mxu0 0.0
        %4701 = vmatprep.subr.mxu0 0.0
        %4702 = vmatpush1.msra.mxu0 0.0
        %4703 = vmatprep.subr.mxu0 0.0
        %4704 = vmatpush1.msra.mxu0 0.0
        %4705 = vmatprep.subr.mxu0 0.0
        %4706 = vmatpush1.msra.mxu0 0.0
        %4707 = vmatprep.subr.mxu0 0.0
        %4708 = vmatpush1.msra.mxu0 0.0
        %4709 = vmatprep.subr.mxu0 0.0
        %4710 = vmatpush1.msra.mxu0 0.0
        %4711 = vmatprep.subr.mxu0 0.0
        %4712 = vmatpush1.msra.mxu0 0.0
        %4713 = vmatprep.subr.mxu0 0.0
        %4714 = vmatpush1.msra.mxu0 0.0
        %4715 = vmatprep.subr.mxu0 0.0
        %4716 = vmatpush1.msra.mxu0 0.0
        %4717 = vmatprep.subr.mxu0 0.0
        %4718 = vmatpush1.msra.mxu0 0.0
        %4719 = vmatprep.subr.mxu0 0.0
        %4720 = vmatpush1.msra.mxu0 0.0
        %4721 = vmatprep.subr.mxu0 0.0
        %4722 = vmatpush1.msra.mxu0 0.0
        %4723 = vmatprep.subr.mxu0 0.0
        %4724 = vmatpush1.msra.mxu0 0.0
        %4725 = vmatprep.subr.mxu0 0.0
        %4726 = vmatpush1.msra.mxu0 0.0
        %4727 = vmatprep.mubr.f32.mxu0 0.0
        %4728 = vmatmul.mubr.f32.gmra.mrb[0].mxu0 %v4661
        %v4729 = vpop.f32.mrb[0].mxu0
        %v4730 = vadd.f32 %v4658, %v4729
        %v4731 = vpop.f32.mrb[0].mxu0
        %4732 = vdwg.mxu0
        %v4733 = vld [vmem:[%s8] sm:$0xff]
        %v4734 = vld [vmem:[%s8 + $0x8] sm:$0xff]
        %v4735 = vld [vmem:[%s8 + $0x10] sm:$0xff]
        %v4736 = vld [vmem:[%s8 + $0x18] sm:$0xff]
        %v4737 = vld [vmem:[%s8 + $0x20] sm:$0xff]
        %v4738 = vld [vmem:[%s8 + $0x28] sm:$0xff]
        %v4739 = vld [vmem:[%s8 + $0x30] sm:$0xff]
        %v4740 = vld [vmem:[%s8 + $0x38] sm:$0xff]
        %v4741 = vlaneseq
        %v4742 = vshrl.u32 %v4741, 7
        %v4743 = vsub.s32 3, %v4742
        %v4744 = vrot.slane %v530, %v4743
        %4745 = vmatprep.subr.mxu0 0.0
        %4746 = vmatpush1.msra.mxu0 %v4733
        %4747 = vmatprep.subr.mxu0 0.0
        %4748 = vmatpush1.msra.mxu0 %v4734
        %4749 = vmatprep.subr.mxu0 0.0
        %4750 = vmatpush1.msra.mxu0 %v4735
        %4751 = vmatprep.subr.mxu0 0.0
        %4752 = vmatpush1.msra.mxu0 %v4736
        %4753 = vmatprep.subr.mxu0 0.0
        %4754 = vmatpush1.msra.mxu0 %v4737
        %4755 = vmatprep.subr.mxu0 0.0
        %4756 = vmatpush1.msra.mxu0 %v4738
        %4757 = vmatprep.subr.mxu0 0.0
        %4758 = vmatpush1.msra.mxu0 %v4739
        %4759 = vmatprep.subr.mxu0 0.0
        %4760 = vmatpush1.msra.mxu0 %v4740
        %4761 = vmatprep.subr.mxu0 0.0
        %4762 = vmatpush1.msra.mxu0 0.0
        %4763 = vmatprep.subr.mxu0 0.0
        %4764 = vmatpush1.msra.mxu0 0.0
        %4765 = vmatprep.subr.mxu0 0.0
        %4766 = vmatpush1.msra.mxu0 0.0
        %4767 = vmatprep.subr.mxu0 0.0
        %4768 = vmatpush1.msra.mxu0 0.0
        %4769 = vmatprep.subr.mxu0 0.0
        %4770 = vmatpush1.msra.mxu0 0.0
        %4771 = vmatprep.subr.mxu0 0.0
        %4772 = vmatpush1.msra.mxu0 0.0
        %4773 = vmatprep.subr.mxu0 0.0
        %4774 = vmatpush1.msra.mxu0 0.0
        %4775 = vmatprep.subr.mxu0 0.0
        %4776 = vmatpush1.msra.mxu0 0.0
        %4777 = vmatprep.subr.mxu0 0.0
        %4778 = vmatpush1.msra.mxu0 0.0
        %4779 = vmatprep.subr.mxu0 0.0
        %4780 = vmatpush1.msra.mxu0 0.0
        %4781 = vmatprep.subr.mxu0 0.0
        %4782 = vmatpush1.msra.mxu0 0.0
        %4783 = vmatprep.subr.mxu0 0.0
        %4784 = vmatpush1.msra.mxu0 0.0
        %4785 = vmatprep.subr.mxu0 0.0
        %4786 = vmatpush1.msra.mxu0 0.0
        %4787 = vmatprep.subr.mxu0 0.0
        %4788 = vmatpush1.msra.mxu0 0.0
        %4789 = vmatprep.subr.mxu0 0.0
        %4790 = vmatpush1.msra.mxu0 0.0
        %4791 = vmatprep.subr.mxu0 0.0
        %4792 = vmatpush1.msra.mxu0 0.0
        %4793 = vmatprep.subr.mxu0 0.0
        %4794 = vmatpush1.msra.mxu0 0.0
        %4795 = vmatprep.subr.mxu0 0.0
        %4796 = vmatpush1.msra.mxu0 0.0
        %4797 = vmatprep.subr.mxu0 0.0
        %4798 = vmatpush1.msra.mxu0 0.0
        %4799 = vmatprep.subr.mxu0 0.0
        %4800 = vmatpush1.msra.mxu0 0.0
        %4801 = vmatprep.subr.mxu0 0.0
        %4802 = vmatpush1.msra.mxu0 0.0
        %4803 = vmatprep.subr.mxu0 0.0
        %4804 = vmatpush1.msra.mxu0 0.0
        %4805 = vmatprep.subr.mxu0 0.0
        %4806 = vmatpush1.msra.mxu0 0.0
        %4807 = vmatprep.subr.mxu0 0.0
        %4808 = vmatpush1.msra.mxu0 0.0
        %4809 = vmatprep.mubr.f32.mxu0 0.0
        %4810 = vmatmul.mubr.f32.gmra.mrb[0].mxu0 %v4661
        %v4811 = vpop.f32.mrb[0].mxu0
        %v4812 = vadd.f32 %v4744, %v4811
        %v4813 = vpop.f32.mrb[0].mxu0
        %4814 = vdwg.mxu0
        %v4815 = vld [vmem:[%s522] sm:$0xff]
        %v4816 = vmul.f32 %v4812, 0.5
        %v4817 = vmul.f32 %v4816, 1.442695
        %v4818 = vpow.pop %v4817
        %v4819 = vmul.f32 %v4815, %v4818
        %v4820 = vadd.f32 %v4730, %v4819
        %vm4821 = vcmask 261120
        %v4822 = vsel %vm4821, %v4820, -inf
        %4823 = vmax.xlane.f32.xlu0 %v4822
        %v4824 = vpop.xlane.xlu0 %4823
        %v4825 = vsub.f32 %v4820, %v4824
        %v4826 = vmul.f32 %v4825, 1.442695
        %v4827 = vpow.pop %v4826
        %v4828 = vsel %vm4821, %v4827, 0.0
        %4829 = vadd.xlane.f32.xlu0 %v4828
        %v4830 = vpop.xlane.xlu0 %4829
        %v4831 = vrcp.pop %v4830
        %v4832 = vmul.f32 %v4827, %v4831
        %v4833 = vld [vmem:[%s9] sm:$0xff]
        %v4834 = vld [vmem:[%s9 + $0x8] sm:$0xff]
        %v4835 = vld [vmem:[%s9 + $0x10] sm:$0xff]
        %v4836 = vld [vmem:[%s9 + $0x18] sm:$0xff]
        %v4837 = vld [vmem:[%s9 + $0x20] sm:$0xff]
        %v4838 = vld [vmem:[%s9 + $0x28] sm:$0xff]
        %v4839 = vld [vmem:[%s9 + $0x30] sm:$0xff]
        %v4840 = vld [vmem:[%s9 + $0x38] sm:$0xff]
        %v4842 = vsel %vm4821, %v4832, 0
        %4844 = vmatprep.subr.mxu0 %v4834
        %4845 = vmatpush1.msra.mxu0 %v4833
        %4846 = vmatprep.subr.mxu0 %v4836
        %4847 = vmatpush1.msra.mxu0 %v4835
        %4848 = vmatprep.subr.mxu0 %v4838
        %4849 = vmatpush1.msra.mxu0 %v4837
        %4850 = vmatprep.subr.mxu0 %v4840
        %4851 = vmatpush1.msra.mxu0 %v4839
        %4852 = vmatprep.subr.mxu0 0.0
        %4853 = vmatpush1.msra.mxu0 0.0
        %4854 = vmatprep.subr.mxu0 0.0
        %4855 = vmatpush1.msra.mxu0 0.0
        %4856 = vmatprep.subr.mxu0 0.0
        %4857 = vmatpush1.msra.mxu0 0.0
        %4858 = vmatprep.subr.mxu0 0.0
        %4859 = vmatpush1.msra.mxu0 0.0
        %4860 = vmatprep.subr.mxu0 0.0
        %4861 = vmatpush1.msra.mxu0 0.0
        %4862 = vmatprep.subr.mxu0 0.0
        %4863 = vmatpush1.msra.mxu0 0.0
        %4864 = vmatprep.subr.mxu0 0.0
        %4865 = vmatpush1.msra.mxu0 0.0
        %4866 = vmatprep.subr.mxu0 0.0
        %4867 = vmatpush1.msra.mxu0 0.0
        %4868 = vmatprep.subr.mxu0 0.0
        %4869 = vmatpush1.msra.mxu0 0.0
        %4870 = vmatprep.subr.mxu0 0.0
        %4871 = vmatpush1.msra.mxu0 0.0
        %4872 = vmatprep.subr.mxu0 0.0
        %4873 = vmatpush1.msra.mxu0 0.0
        %4874 = vmatprep.subr.mxu0 0.0
        %4875 = vmatpush1.msra.mxu0 0.0
        %4876 = vmatprep.subr.mxu0 0.0
        %4877 = vmatpush1.msra.mxu0 0.0
        %4878 = vmatprep.subr.mxu0 0.0
        %4879 = vmatpush1.msra.mxu0 0.0
        %4880 = vmatprep.subr.mxu0 0.0
        %4881 = vmatpush1.msra.mxu0 0.0
        %4882 = vmatprep.subr.mxu0 0.0
        %4883 = vmatpush1.msra.mxu0 0.0
        %4884 = vmatprep.subr.mxu0 0.0
        %4885 = vmatpush1.msra.mxu0 0.0
        %4886 = vmatprep.subr.mxu0 0.0
        %4887 = vmatpush1.msra.mxu0 0.0
        %4888 = vmatprep.subr.mxu0 0.0
        %4889 = vmatpush1.msra.mxu0 0.0
        %4890 = vmatprep.subr.mxu0 0.0
        %4891 = vmatpush1.msra.mxu0 0.0
        %4892 = vmatprep.subr.mxu0 0.0
        %4893 = vmatpush1.msra.mxu0 0.0
        %4894 = vmatprep.subr.mxu0 0.0
        %4895 = vmatpush1.msra.mxu0 0.0
        %4896 = vmatprep.subr.mxu0 0.0
        %4897 = vmatpush1.msra.mxu0 0.0
        %4898 = vmatprep.subr.mxu0 0.0
        %4899 = vmatpush1.msra.mxu0 0.0
        %4900 = vmatprep.subr.mxu0 0.0
        %4901 = vmatpush1.msra.mxu0 0.0
        %4902 = vmatprep.subr.mxu0 0.0
        %4903 = vmatpush1.msra.mxu0 0.0
        %4904 = vmatprep.subr.mxu0 0.0
        %4905 = vmatpush1.msra.mxu0 0.0
        %4906 = vmatprep.subr.mxu0 0.0
        %4907 = vmatpush1.msra.mxu0 0.0
        %4908 = vmatprep.mubr.f32.mxu0 0.0
        %4909 = vmatmul.mubr.f32.gmra.mrb[0].mxu0 %v4842
        %v4910 = vpop.f32.mrb[0].mxu0
        %v4911 = vadd.f32 1e-06, %v4910
        %v4912 = vpop.f32.mrb[0].mxu0
        %v4913 = vadd.f32 1e-06, %v4912
        %4914 = vdwg.mxu0
        %v4915 = vlog2.pop %v4911
        %v4916 = vmul.f32 %v4915, 0.6931472
        %v4917 = vlog2.pop %v4913
        %v4918 = vmul.f32 %v4917, 0.6931472
        %v4919 = vsel %vm4821, %v4832, -inf
        %4920 = vmax.xlane.f32.xlu0 %v4919
        %v4921 = vpop.xlane.xlu0 %4920
        %vm4922 = vcmp.ge.f32.partialorder %v4832, %v4921
        %v4923 = vsel %vm4922, %v3114, 32
        %v4924 = vsel %vm4821, %v4923, 2147483647
        %v4925 = vand.u32 %v4924, 65535
        %v4926 = vshra.s32 %v4924, 16
        %v4927 = vcvt.s32.f32 %v4925
        %v4928 = vcvt.s32.f32 %v4926
        %4929 = vmin.xlane.f32.xlu0 %v4928
        %v4930 = vpop.xlane.xlu0 %4929
        %vm4931 = vcmp.eq.f32.partialorder %v4928, %v4930
        %v4932 = vsel %vm4931, %v4927, inf
        %4933 = vmin.xlane.f32.xlu0 %v4932
        %v4934 = vpop.xlane.xlu0 %4933
        %v4935 = vcvt.f32.s32 %v4934
        %v4936 = vcvt.f32.s32 %v4930
        %v4937 = vshll.u32 %v4936, 16
        %v4938 = vadd.s32 %v4937, %v4935
        %vm4939 = vcmp.eq.s32.totalorder %v3114, %v4938
        %v4940 = vsel %vm4939, 1, 0
        %v4941 = vcvt.s32.f32 %v4940
        %v4942 = vld [vmem:[%s10] sm:$0xff]
        %v4943 = vld [vmem:[%s10 + $0x8] sm:$0xff]
        %v4944 = vld [vmem:[%s10 + $0x10] sm:$0xff]
        %v4945 = vld [vmem:[%s10 + $0x18] sm:$0xff]
        %v4946 = vld [vmem:[%s10 + $0x20] sm:$0xff]
        %v4947 = vld [vmem:[%s10 + $0x28] sm:$0xff]
        %v4948 = vld [vmem:[%s10 + $0x30] sm:$0xff]
        %v4949 = vld [vmem:[%s10 + $0x38] sm:$0xff]
        %v4951 = vsel %vm4821, %v4941, 0
        %4953 = vmatprep.subr.mxu0 %v4943
        %4954 = vmatpush1.msra.mxu0 %v4942
        %4955 = vmatprep.subr.mxu0 %v4945
        %4956 = vmatpush1.msra.mxu0 %v4944
        %4957 = vmatprep.subr.mxu0 %v4947
        %4958 = vmatpush1.msra.mxu0 %v4946
        %4959 = vmatprep.subr.mxu0 %v4949
        %4960 = vmatpush1.msra.mxu0 %v4948
        %4961 = vmatprep.subr.mxu0 0.0
        %4962 = vmatpush1.msra.mxu0 0.0
        %4963 = vmatprep.subr.mxu0 0.0
        %4964 = vmatpush1.msra.mxu0 0.0
        %4965 = vmatprep.subr.mxu0 0.0
        %4966 = vmatpush1.msra.mxu0 0.0
        %4967 = vmatprep.subr.mxu0 0.0
        %4968 = vmatpush1.msra.mxu0 0.0
        %4969 = vmatprep.subr.mxu0 0.0
        %4970 = vmatpush1.msra.mxu0 0.0
        %4971 = vmatprep.subr.mxu0 0.0
        %4972 = vmatpush1.msra.mxu0 0.0
        %4973 = vmatprep.subr.mxu0 0.0
        %4974 = vmatpush1.msra.mxu0 0.0
        %4975 = vmatprep.subr.mxu0 0.0
        %4976 = vmatpush1.msra.mxu0 0.0
        %4977 = vmatprep.subr.mxu0 0.0
        %4978 = vmatpush1.msra.mxu0 0.0
        %4979 = vmatprep.subr.mxu0 0.0
        %4980 = vmatpush1.msra.mxu0 0.0
        %4981 = vmatprep.subr.mxu0 0.0
        %4982 = vmatpush1.msra.mxu0 0.0
        %4983 = vmatprep.subr.mxu0 0.0
        %4984 = vmatpush1.msra.mxu0 0.0
        %4985 = vmatprep.subr.mxu0 0.0
        %4986 = vmatpush1.msra.mxu0 0.0
        %4987 = vmatprep.subr.mxu0 0.0
        %4988 = vmatpush1.msra.mxu0 0.0
        %4989 = vmatprep.subr.mxu0 0.0
        %4990 = vmatpush1.msra.mxu0 0.0
        %4991 = vmatprep.subr.mxu0 0.0
        %4992 = vmatpush1.msra.mxu0 0.0
        %4993 = vmatprep.subr.mxu0 0.0
        %4994 = vmatpush1.msra.mxu0 0.0
        %4995 = vmatprep.subr.mxu0 0.0
        %4996 = vmatpush1.msra.mxu0 0.0
        %4997 = vmatprep.subr.mxu0 0.0
        %4998 = vmatpush1.msra.mxu0 0.0
        %4999 = vmatprep.subr.mxu0 0.0
        %5000 = vmatpush1.msra.mxu0 0.0
        %5001 = vmatprep.subr.mxu0 0.0
        %5002 = vmatpush1.msra.mxu0 0.0
        %5003 = vmatprep.subr.mxu0 0.0
        %5004 = vmatpush1.msra.mxu0 0.0
        %5005 = vmatprep.subr.mxu0 0.0
        %5006 = vmatpush1.msra.mxu0 0.0
        %5007 = vmatprep.subr.mxu0 0.0
        %5008 = vmatpush1.msra.mxu0 0.0
        %5009 = vmatprep.subr.mxu0 0.0
        %5010 = vmatpush1.msra.mxu0 0.0
        %5011 = vmatprep.subr.mxu0 0.0
        %5012 = vmatpush1.msra.mxu0 0.0
        %5013 = vmatprep.subr.mxu0 0.0
        %5014 = vmatpush1.msra.mxu0 0.0
        %5015 = vmatprep.subr.mxu0 0.0
        %5016 = vmatpush1.msra.mxu0 0.0
        %5017 = vmatprep.mubr.f32.mxu0 0.0
        %5018 = vmatmul.mubr.f32.gmra.mrb[0].mxu0 %v4951
        %v5019 = vpop.f32.mrb[0].mxu0
        %v5020 = vadd.f32 0.0, %v5019
        %v5021 = vpop.f32.mrb[0].mxu0
        %v5022 = vadd.f32 0.0, %v5021
        %5023 = vdwg.mxu0
        %v5024 = vld [vmem:[%s527] sm:$0xff]
        %v5025 = vld [vmem:[%s527 + $0x8] sm:$0xff]
        %v5026 = vsel %vm1567, %v5022, 0.0
        %v5027 = vadd.f32 %v5020, %v5026
        %5028 = vadd.xlane.f32.xlu0 %v5027
        %v5029 = vpop.xlane.xlu0 %5028
        %v5030 = vsel %vm1567, %v5025, 0.0
        %v5031 = vadd.f32 %v5024, %v5030
        %5032 = vadd.xlane.f32.xlu0 %v5031
        %v5033 = vpop.xlane.xlu0 %5032
        %v5034 = vadd.f32 %v5029, %v5033
        %v5035 = vrcp.pop 400.0
        %v5036 = vmul.f32 %v5034, %v5035
        %v5037 = vsub.f32 %v5020, %v5036
        %v5038 = vsub.f32 %v5022, %v5036
        %v5039 = vmul.f32 %v5037, %v5037
        %v5040 = vmul.f32 %v5038, %v5038
        %v5041 = vsel %vm1567, %v5040, 0.0
        %v5042 = vadd.f32 %v5039, %v5041
        %5043 = vadd.xlane.f32.xlu0 %v5042
        %v5044 = vpop.xlane.xlu0 %5043
        %v5045 = vsub.f32 %v5024, %v5036
        %v5046 = vsub.f32 %v5025, %v5036
        %v5047 = vmul.f32 %v5045, %v5045
        %v5048 = vmul.f32 %v5046, %v5046
        %v5049 = vsel %vm1567, %v5048, 0.0
        %v5050 = vadd.f32 %v5047, %v5049
        %5051 = vadd.xlane.f32.xlu0 %v5050
        %v5052 = vpop.xlane.xlu0 %5051
        %v5053 = vadd.f32 %v5044, %v5052
        %v5054 = vmul.f32 %v5053, %v5035
        %v5055 = vadd.f32 %v5054, 1e-05
        %v5056 = vrsqrt.pop %v5055
        %v5057 = vmul.f32 %v5037, %v5056
        %v5058 = vmul.f32 %v5038, %v5056
        %v5059 = vlaneseq
        %v5060 = vshrl.u32 %v5059, 7
        %v5061 = vsub.s32 0, %v5060
        %v5062 = vrot.slane %v528, %v5061
        %v5063 = vlaneseq
        %v5064 = vshrl.u32 %v5063, 7
        %v5065 = vsub.s32 0, %v5064
        %v5066 = vrot.slane %v529, %v5065
        %v5067 = vmul.f32 %v5057, %v5062
        %v5068 = vmul.f32 %v5058, %v5066
        %v5069 = vlaneseq
        %v5070 = vshrl.u32 %v5069, 7
        %v5071 = vsub.s32 2, %v5070
        %v5072 = vrot.slane %v528, %v5071
        %v5073 = vlaneseq
        %v5074 = vshrl.u32 %v5073, 7
        %v5075 = vsub.s32 2, %v5074
        %v5076 = vrot.slane %v529, %v5075
        %v5077 = vadd.f32 %v5067, %v5072
        %v5078 = vadd.f32 %v5068, %v5076
        %v5079 = vmul.f32 %v5045, %v5056
        %v5080 = vmul.f32 %v5046, %v5056
        %v5081 = vlaneseq
        %v5082 = vshrl.u32 %v5081, 7
        %v5083 = vsub.s32 1, %v5082
        %v5084 = vrot.slane %v528, %v5083
        %v5085 = vlaneseq
        %v5086 = vshrl.u32 %v5085, 7
        %v5087 = vsub.s32 1, %v5086
        %v5088 = vrot.slane %v529, %v5087
        %v5089 = vmul.f32 %v5079, %v5084
        %v5090 = vmul.f32 %v5080, %v5088
        %v5091 = vlaneseq
        %v5092 = vshrl.u32 %v5091, 7
        %v5093 = vsub.s32 3, %v5092
        %v5094 = vrot.slane %v528, %v5093
        %v5095 = vlaneseq
        %v5096 = vshrl.u32 %v5095, 7
        %v5097 = vsub.s32 3, %v5096
        %v5098 = vrot.slane %v529, %v5097
        %v5099 = vadd.f32 %v5089, %v5094
        %v5100 = vadd.f32 %v5090, %v5098
        %v5101 = vld [vmem:[%s11] sm:$0xff]
        %v5102 = vld [vmem:[%s11 + $0x8] sm:$0xff]
        %v5103 = vld [vmem:[%s11 + $0x10] sm:$0xff]
        %v5104 = vld [vmem:[%s11 + $0x18] sm:$0xff]
        %v5105 = vld [vmem:[%s11 + $0x20] sm:$0xff]
        %v5106 = vld [vmem:[%s11 + $0x28] sm:$0xff]
        %v5107 = vld [vmem:[%s11 + $0x30] sm:$0xff]
        %v5108 = vld [vmem:[%s11 + $0x38] sm:$0xff]
        %v5109 = vld [vmem:[%s11 + $0x40] sm:$0xff]
        %v5110 = vld [vmem:[%s11 + $0x48] sm:$0xff]
        %v5111 = vld [vmem:[%s11 + $0x50] sm:$0xff]
        %v5112 = vld [vmem:[%s11 + $0x58] sm:$0xff]
        %v5113 = vld [vmem:[%s11 + $0x60] sm:$0xff]
        %v5114 = vld [vmem:[%s11 + $0x68] sm:$0xff]
        %v5115 = vld [vmem:[%s11 + $0x70] sm:$0xff]
        %v5116 = vld [vmem:[%s11 + $0x78] sm:$0xff]
        %v5117 = vld [vmem:[%s11 + $0x80] sm:$0xff]
        %v5118 = vld [vmem:[%s11 + $0x88] sm:$0xff]
        %v5119 = vld [vmem:[%s11 + $0x90] sm:$0xff]
        %v5120 = vld [vmem:[%s11 + $0x98] sm:$0xff]
        %v5121 = vld [vmem:[%s11 + $0xa0] sm:$0xff]
        %v5122 = vld [vmem:[%s11 + $0xa8] sm:$0xff]
        %v5123 = vld [vmem:[%s11 + $0xb0] sm:$0xff]
        %v5124 = vld [vmem:[%s11 + $0xb8] sm:$0xff]
        %v5125 = vld [vmem:[%s11 + $0xc0] sm:$0xff]
        %v5126 = vld [vmem:[%s11 + $0xc8] sm:$0xff]
        %v5127 = vld [vmem:[%s11 + $0xd0] sm:$0xff]
        %v5128 = vld [vmem:[%s11 + $0xd8] sm:$0xff]
        %v5129 = vld [vmem:[%s11 + $0xe0] sm:$0xff]
        %v5130 = vld [vmem:[%s11 + $0xe8] sm:$0xff]
        %v5131 = vld [vmem:[%s11 + $0xf0] sm:$0xff]
        %v5132 = vld [vmem:[%s11 + $0xf8] sm:$0xff]
        %v5133 = vld [vmem:[%s11 + $0x100] sm:$0xff]
        %v5134 = vld [vmem:[%s11 + $0x108] sm:$0xff]
        %v5135 = vld [vmem:[%s11 + $0x110] sm:$0xff]
        %v5136 = vld [vmem:[%s11 + $0x118] sm:$0xff]
        %v5137 = vld [vmem:[%s11 + $0x120] sm:$0xff]
        %v5138 = vld [vmem:[%s11 + $0x128] sm:$0xff]
        %v5139 = vld [vmem:[%s11 + $0x130] sm:$0xff]
        %v5140 = vld [vmem:[%s11 + $0x138] sm:$0xff]
        %v5141 = vld [vmem:[%s11 + $0x140] sm:$0xff]
        %v5142 = vld [vmem:[%s11 + $0x148] sm:$0xff]
        %v5143 = vld [vmem:[%s11 + $0x150] sm:$0xff]
        %v5144 = vld [vmem:[%s11 + $0x158] sm:$0xff]
        %v5145 = vld [vmem:[%s11 + $0x160] sm:$0xff]
        %v5146 = vld [vmem:[%s11 + $0x168] sm:$0xff]
        %v5147 = vld [vmem:[%s11 + $0x170] sm:$0xff]
        %v5148 = vld [vmem:[%s11 + $0x178] sm:$0xff]
        %v5149 = vld [vmem:[%s11 + $0x180] sm:$0xff]
        %v5150 = vld [vmem:[%s11 + $0x188] sm:$0xff]
        %v5151 = vld [vmem:[%s12] sm:$0xff]
        %v5152 = vld [vmem:[%s12 + $0x8] sm:$0xff]
        %v5153 = vld [vmem:[%s12 + $0x10] sm:$0xff]
        %v5154 = vld [vmem:[%s12 + $0x18] sm:$0xff]
        %v5155 = vld [vmem:[%s12 + $0x20] sm:$0xff]
        %v5156 = vld [vmem:[%s12 + $0x28] sm:$0xff]
        %v5157 = vld [vmem:[%s12 + $0x30] sm:$0xff]
        %v5158 = vld [vmem:[%s12 + $0x38] sm:$0xff]
        %v5159 = vld [vmem:[%s12 + $0x40] sm:$0xff]
        %v5160 = vld [vmem:[%s12 + $0x48] sm:$0xff]
        %v5161 = vld [vmem:[%s12 + $0x50] sm:$0xff]
        %v5162 = vld [vmem:[%s12 + $0x58] sm:$0xff]
        %v5163 = vld [vmem:[%s12 + $0x60] sm:$0xff]
        %v5164 = vld [vmem:[%s12 + $0x68] sm:$0xff]
        %v5165 = vld [vmem:[%s12 + $0x70] sm:$0xff]
        %v5166 = vld [vmem:[%s12 + $0x78] sm:$0xff]
        %v5167 = vld [vmem:[%s12 + $0x80] sm:$0xff]
        %v5168 = vld [vmem:[%s12 + $0x88] sm:$0xff]
        %v5169 = vld [vmem:[%s12 + $0x90] sm:$0xff]
        %v5170 = vld [vmem:[%s12 + $0x98] sm:$0xff]
        %v5171 = vld [vmem:[%s12 + $0xa0] sm:$0xff]
        %v5172 = vld [vmem:[%s12 + $0xa8] sm:$0xff]
        %v5173 = vld [vmem:[%s12 + $0xb0] sm:$0xff]
        %v5174 = vld [vmem:[%s12 + $0xb8] sm:$0xff]
        %v5175 = vld [vmem:[%s12 + $0xc0] sm:$0xff]
        %v5176 = vld [vmem:[%s12 + $0xc8] sm:$0xff]
        %v5177 = vld [vmem:[%s12 + $0xd0] sm:$0xff]
        %v5178 = vld [vmem:[%s12 + $0xd8] sm:$0xff]
        %v5179 = vld [vmem:[%s12 + $0xe0] sm:$0xff]
        %v5180 = vld [vmem:[%s12 + $0xe8] sm:$0xff]
        %v5181 = vld [vmem:[%s12 + $0xf0] sm:$0xff]
        %v5182 = vld [vmem:[%s12 + $0xf8] sm:$0xff]
        %v5183 = vld [vmem:[%s12 + $0x100] sm:$0xff]
        %v5184 = vld [vmem:[%s12 + $0x108] sm:$0xff]
        %v5185 = vld [vmem:[%s12 + $0x110] sm:$0xff]
        %v5186 = vld [vmem:[%s12 + $0x118] sm:$0xff]
        %v5187 = vld [vmem:[%s12 + $0x120] sm:$0xff]
        %v5188 = vld [vmem:[%s12 + $0x128] sm:$0xff]
        %v5189 = vld [vmem:[%s12 + $0x130] sm:$0xff]
        %v5190 = vld [vmem:[%s12 + $0x138] sm:$0xff]
        %v5191 = vld [vmem:[%s12 + $0x140] sm:$0xff]
        %v5192 = vld [vmem:[%s12 + $0x148] sm:$0xff]
        %v5193 = vld [vmem:[%s12 + $0x150] sm:$0xff]
        %v5194 = vld [vmem:[%s12 + $0x158] sm:$0xff]
        %v5195 = vld [vmem:[%s12 + $0x160] sm:$0xff]
        %v5196 = vld [vmem:[%s12 + $0x168] sm:$0xff]
        %v5197 = vld [vmem:[%s12 + $0x170] sm:$0xff]
        %v5198 = vld [vmem:[%s12 + $0x178] sm:$0xff]
        %v5199 = vld [vmem:[%s12 + $0x180] sm:$0xff]
        %v5200 = vld [vmem:[%s12 + $0x188] sm:$0xff]
        %v5202 = vsel %vm1567, %v5100, 0
        %5204 = vmatprep.subr.mxu0 %v5152
        %5205 = vmatpush1.msra.mxu0 %v5151
        %5206 = vmatprep.subr.mxu0 %v5154
        %5207 = vmatpush1.msra.mxu0 %v5153
        %5208 = vmatprep.subr.mxu0 %v5156
        %5209 = vmatpush1.msra.mxu0 %v5155
        %5210 = vmatprep.subr.mxu0 %v5158
        %5211 = vmatpush1.msra.mxu0 %v5157
        %5212 = vmatprep.subr.mxu0 %v5160
        %5213 = vmatpush1.msra.mxu0 %v5159
        %5214 = vmatprep.subr.mxu0 %v5162
        %5215 = vmatpush1.msra.mxu0 %v5161
        %5216 = vmatprep.subr.mxu0 %v5164
        %5217 = vmatpush1.msra.mxu0 %v5163
        %5218 = vmatprep.subr.mxu0 %v5166
        %5219 = vmatpush1.msra.mxu0 %v5165
        %5220 = vmatprep.subr.mxu0 %v5168
        %5221 = vmatpush1.msra.mxu0 %v5167
        %5222 = vmatprep.subr.mxu0 %v5170
        %5223 = vmatpush1.msra.mxu0 %v5169
        %5224 = vmatprep.subr.mxu0 %v5172
        %5225 = vmatpush1.msra.mxu0 %v5171
        %5226 = vmatprep.subr.mxu0 %v5174
        %5227 = vmatpush1.msra.mxu0 %v5173
        %5228 = vmatprep.subr.mxu0 %v5176
        %5229 = vmatpush1.msra.mxu0 %v5175
        %5230 = vmatprep.subr.mxu0 %v5178
        %5231 = vmatpush1.msra.mxu0 %v5177
        %5232 = vmatprep.subr.mxu0 %v5180
        %5233 = vmatpush1.msra.mxu0 %v5179
        %5234 = vmatprep.subr.mxu0 %v5182
        %5235 = vmatpush1.msra.mxu0 %v5181
        %5236 = vmatprep.subr.mxu0 %v5184
        %5237 = vmatpush1.msra.mxu0 %v5183
        %5238 = vmatprep.subr.mxu0 %v5186
        %5239 = vmatpush1.msra.mxu0 %v5185
        %5240 = vmatprep.subr.mxu0 %v5188
        %5241 = vmatpush1.msra.mxu0 %v5187
        %5242 = vmatprep.subr.mxu0 %v5190
        %5243 = vmatpush1.msra.mxu0 %v5189
        %5244 = vmatprep.subr.mxu0 %v5192
        %5245 = vmatpush1.msra.mxu0 %v5191
        %5246 = vmatprep.subr.mxu0 %v5194
        %5247 = vmatpush1.msra.mxu0 %v5193
        %5248 = vmatprep.subr.mxu0 %v5196
        %5249 = vmatpush1.msra.mxu0 %v5195
        %5250 = vmatprep.subr.mxu0 %v5198
        %5251 = vmatpush1.msra.mxu0 %v5197
        %5252 = vmatprep.subr.mxu0 %v5200
        %5253 = vmatpush1.msra.mxu0 %v5199
        %5254 = vmatprep.subr.mxu0 0.0
        %5255 = vmatpush1.msra.mxu0 0.0
        %5256 = vmatprep.subr.mxu0 0.0
        %5257 = vmatpush1.msra.mxu0 0.0
        %5258 = vmatprep.subr.mxu0 0.0
        %5259 = vmatpush1.msra.mxu0 0.0
        %5260 = vmatprep.subr.mxu0 0.0
        %5261 = vmatpush1.msra.mxu0 0.0
        %5262 = vmatprep.subr.mxu0 0.0
        %5263 = vmatpush1.msra.mxu0 0.0
        %5264 = vmatprep.subr.mxu0 0.0
        %5265 = vmatpush1.msra.mxu0 0.0
        %5266 = vmatprep.subr.mxu0 0.0
        %5267 = vmatpush1.msra.mxu0 0.0
        %5268 = vmatprep.mubr.f32.mxu0 %v5202
        %5269 = vmatmul.mubr.f32.gmra.mrb[0].mxu0 %v5099
        %v5270 = vpop.f32.mrb[0].mxu0
        %v5271 = vadd.f32 0.0, %v5270
        %v5272 = vpop.f32.mrb[0].mxu0
        %v5273 = vadd.f32 0.0, %v5272
        %5274 = vdwg.mxu0
        %v5276 = vsel %vm1567, %v5078, 0
        %5278 = vmatprep.subr.mxu0 %v5102
        %5279 = vmatpush1.msra.mxu0 %v5101
        %5280 = vmatprep.subr.mxu0 %v5104
        %5281 = vmatpush1.msra.mxu0 %v5103
        %5282 = vmatprep.subr.mxu0 %v5106
        %5283 = vmatpush1.msra.mxu0 %v5105
        %5284 = vmatprep.subr.mxu0 %v5108
        %5285 = vmatpush1.msra.mxu0 %v5107
        %5286 = vmatprep.subr.mxu0 %v5110
        %5287 = vmatpush1.msra.mxu0 %v5109
        %5288 = vmatprep.subr.mxu0 %v5112
        %5289 = vmatpush1.msra.mxu0 %v5111
        %5290 = vmatprep.subr.mxu0 %v5114
        %5291 = vmatpush1.msra.mxu0 %v5113
        %5292 = vmatprep.subr.mxu0 %v5116
        %5293 = vmatpush1.msra.mxu0 %v5115
        %5294 = vmatprep.subr.mxu0 %v5118
        %5295 = vmatpush1.msra.mxu0 %v5117
        %5296 = vmatprep.subr.mxu0 %v5120
        %5297 = vmatpush1.msra.mxu0 %v5119
        %5298 = vmatprep.subr.mxu0 %v5122
        %5299 = vmatpush1.msra.mxu0 %v5121
        %5300 = vmatprep.subr.mxu0 %v5124
        %5301 = vmatpush1.msra.mxu0 %v5123
        %5302 = vmatprep.subr.mxu0 %v5126
        %5303 = vmatpush1.msra.mxu0 %v5125
        %5304 = vmatprep.subr.mxu0 %v5128
        %5305 = vmatpush1.msra.mxu0 %v5127
        %5306 = vmatprep.subr.mxu0 %v5130
        %5307 = vmatpush1.msra.mxu0 %v5129
        %5308 = vmatprep.subr.mxu0 %v5132
        %5309 = vmatpush1.msra.mxu0 %v5131
        %5310 = vmatprep.subr.mxu0 %v5134
        %5311 = vmatpush1.msra.mxu0 %v5133
        %5312 = vmatprep.subr.mxu0 %v5136
        %5313 = vmatpush1.msra.mxu0 %v5135
        %5314 = vmatprep.subr.mxu0 %v5138
        %5315 = vmatpush1.msra.mxu0 %v5137
        %5316 = vmatprep.subr.mxu0 %v5140
        %5317 = vmatpush1.msra.mxu0 %v5139
        %5318 = vmatprep.subr.mxu0 %v5142
        %5319 = vmatpush1.msra.mxu0 %v5141
        %5320 = vmatprep.subr.mxu0 %v5144
        %5321 = vmatpush1.msra.mxu0 %v5143
        %5322 = vmatprep.subr.mxu0 %v5146
        %5323 = vmatpush1.msra.mxu0 %v5145
        %5324 = vmatprep.subr.mxu0 %v5148
        %5325 = vmatpush1.msra.mxu0 %v5147
        %5326 = vmatprep.subr.mxu0 %v5150
        %5327 = vmatpush1.msra.mxu0 %v5149
        %5328 = vmatprep.subr.mxu0 0.0
        %5329 = vmatpush1.msra.mxu0 0.0
        %5330 = vmatprep.subr.mxu0 0.0
        %5331 = vmatpush1.msra.mxu0 0.0
        %5332 = vmatprep.subr.mxu0 0.0
        %5333 = vmatpush1.msra.mxu0 0.0
        %5334 = vmatprep.subr.mxu0 0.0
        %5335 = vmatpush1.msra.mxu0 0.0
        %5336 = vmatprep.subr.mxu0 0.0
        %5337 = vmatpush1.msra.mxu0 0.0
        %5338 = vmatprep.subr.mxu0 0.0
        %5339 = vmatpush1.msra.mxu0 0.0
        %5340 = vmatprep.subr.mxu0 0.0
        %5341 = vmatpush1.msra.mxu0 0.0
        %5342 = vmatprep.mubr.f32.mxu0 %v5276
        %5343 = vmatmul.mubr.f32.gmra.mrb[0].mxu0 %v5077
        %v5344 = vpop.f32.mrb[0].mxu0
        %v5345 = vadd.f32 %v5271, %v5344
        %v5346 = vpop.f32.mrb[0].mxu0
        %v5347 = vadd.f32 %v5273, %v5346
        %5348 = vdwg.mxu0
        %v5349 = vlaneseq
        %v5350 = vshrl.u32 %v5349, 7
        %v5351 = vsub.s32 4, %v5350
        %v5352 = vrot.slane %v528, %v5351
        %v5353 = vlaneseq
        %v5354 = vshrl.u32 %v5353, 7
        %v5355 = vsub.s32 4, %v5354
        %v5356 = vrot.slane %v529, %v5355
        %v5357 = vadd.f32 %v5345, %v5352
        %v5358 = vadd.f32 %v5347, %v5356
        %v5359 = vsel %vm1567, %v5358, 0.0
        %v5360 = vadd.f32 %v5357, %v5359
        %5361 = vadd.xlane.f32.xlu0 %v5360
        %v5362 = vpop.xlane.xlu0 %5361
        %v5363 = vrcp.pop 200.0
        %v5364 = vmul.f32 %v5362, %v5363
        %v5365 = vsub.f32 %v5357, %v5364
        %v5366 = vsub.f32 %v5358, %v5364
        %v5367 = vmul.f32 %v5365, %v5365
        %v5368 = vmul.f32 %v5366, %v5366
        %v5369 = vsel %vm1567, %v5368, 0.0
        %v5370 = vadd.f32 %v5367, %v5369
        %5371 = vadd.xlane.f32.xlu0 %v5370
        %v5372 = vpop.xlane.xlu0 %5371
        %v5373 = vmul.f32 %v5372, %v5363
        %v5374 = vadd.f32 %v5373, 1e-05
        %v5375 = vrsqrt.pop %v5374
        %v5376 = vmul.f32 %v5365, %v5375
        %v5377 = vmul.f32 %v5366, %v5375
        %v5378 = vlaneseq
        %v5379 = vshrl.u32 %v5378, 7
        %v5380 = vsub.s32 5, %v5379
        %v5381 = vrot.slane %v528, %v5380
        %v5382 = vlaneseq
        %v5383 = vshrl.u32 %v5382, 7
        %v5384 = vsub.s32 5, %v5383
        %v5385 = vrot.slane %v529, %v5384
        %v5386 = vmul.f32 %v5376, %v5381
        %v5387 = vmul.f32 %v5377, %v5385
        %v5388 = vlaneseq
        %v5389 = vshrl.u32 %v5388, 7
        %v5390 = vsub.s32 6, %v5389
        %v5391 = vrot.slane %v528, %v5390
        %v5392 = vlaneseq
        %v5393 = vshrl.u32 %v5392, 7
        %v5394 = vsub.s32 6, %v5393
        %v5395 = vrot.slane %v529, %v5394
        %v5396 = vadd.f32 %v5386, %v5391
        %v5397 = vadd.f32 %v5387, %v5395
        %v5398 = vmax.f32 %v5396, 0.0
        %v5399 = vmax.f32 %v5397, 0.0
        %v5400 = vmax.f32 %v4916, %v4918
        %5401 = vmax.xlane.f32.xlu0 %v5400
        %v5402 = vpop.xlane.xlu0 %5401
        %v5403 = vsub.f32 %v4916, %v5402
        %v5404 = vsub.f32 %v4918, %v5402
        %v5405 = vmul.f32 %v5403, 1.442695
        %v5406 = vpow.pop %v5405
        %v5407 = vmul.f32 %v5404, 1.442695
        %v5408 = vpow.pop %v5407
        %v5409 = vadd.f32 %v5406, %v5408
        %5410 = vadd.xlane.f32.xlu0 %v5409
        %v5411 = vpop.xlane.xlu0 %5410
        %v5412 = vlog2.pop %v5411
        %v5413 = vmul.f32 %v5412, 0.6931472
        %v5414 = vadd.f32 %v5402, %v5413
        %v5415 = vsub.f32 %v4916, %v5414
        %v5416 = vsub.f32 %v4918, %v5414
        %v5417 = vmul.f32 %v4447, %v5415
        %v5418 = vmul.f32 %v4448, %v5416
        %v5419 = vadd.f32 %v5417, %v5418
        %5420 = vadd.xlane.f32.xlu0 %v5419
        %v5421 = vpop.xlane.xlu0 %5420
        %v5422 = vsub.f32 0.0, %v5421
        %v5423 = vadd.f32 %v4812, 1.0
        %v5424 = vmul.f32 %v4730, %v4730
        %v5425 = vsub.f32 %v5423, %v5424
        %v5426 = vmul.f32 %v4812, 1.442695
        %v5427 = vpow.pop %v5426
        %v5428 = vsub.f32 %v5425, %v5427
        %v5429 = vsel %vm4821, %v5428, 0.0
        %5430 = vadd.xlane.f32.xlu0 %v5429
        %v5431 = vpop.xlane.xlu0 %5430
        %v5432 = vmul.f32 %v5431, -0.5
        %v5433 = vadd.f32 %v5422, %v5432
        %v5434 = vsel %vm1567, %v5399, %v5433
        %5435 = vst [vmem:[%s506] sm:$0xff] %v5398
        %5436 = vst [vmem:[%s506 + $0x8] sm:$0xff] %v5434
        %s5437 = sand.u32 %s350, 1
        %s5438 = scalar_lea.sflag [#allocation3], %s5437
        %s5439 = sand.u32 %s350, 1
        %s5440 = smul.addr %s5439, 16
        %s5441 = scalar_lea.vmem [#allocation2], %s5440
        // Predicated region
        $region77: #{tpu_custom_call.1} parent=75 // pred_check
          %p5442 = pneg %p360
        $region78: #{tpu_custom_call.1} parent=75 // pred_check_branch
          %5444 = sbr.rel (%p5442) target = $region80
        $region79: #{tpu_custom_call.1} parent=75 // pred_region
          %s5446 = ssub.s32 256, 256
          %5447 = vsyncadd %s5438, %s5446
          %s5448 = smul.addr %s28, 2
          %s5449 = smul.addr %s5448, 128
          %s5450 = scalar_lea.hbm %s14, %s5449
          %s5452 = sshll.u32 %s5441, 4
          %s5453 = int_to_ptr.vmem [resolvable:$true] %s5452
          %5455 = dma.vmem_to_hbm [thread:$0]  %s5453, 256, %s5450, %s5438
        $region80: #{tpu_custom_call.1} parent=75 // pred_fallthru
          _
      $region76: #{tpu_custom_call.1} parent=5 // pred_fallthru
        _
      %p5456 = scmp.le.s32.totalorder 2, %s23
      // Predicated region
      $region81: #{tpu_custom_call.1} parent=5 // pred_check
        %p5457 = pneg %p5456
      $region82: #{tpu_custom_call.1} parent=5 // pred_check_branch
        %5459 = sbr.rel (%p5457) target = $region84
      $region83: #{tpu_custom_call.1} parent=5 // pred_region
        %s5460 = ssub.s32 %s23, 2
        // Predicated region
        $region85: #{tpu_custom_call.1} parent=83 // pred_check
          %p5461 = pneg %p366
        $region86: #{tpu_custom_call.1} parent=83 // pred_check_branch
          %5463 = sbr.rel (%p5461) target = $region88
        $region87: #{tpu_custom_call.1} parent=83 // pred_region
          %s5464 = sand.u32 %s351, 1
          %s5465 = scalar_lea.sflag [#allocation3], %s5464
          %s5466 = sand.u32 %s351, 1
          %s5467 = smul.addr %s5466, 16
          %s5468 = scalar_lea.vmem [#allocation2], %s5467
          %5469 = dma.done %s5465, 256
        $region88: #{tpu_custom_call.1} parent=83 // pred_fallthru
          _
      $region84: #{tpu_custom_call.1} parent=5 // pred_fallthru
        _
    $region6: #{tpu_custom_call.1} parent=1 // loop_footer
      %s27 = sadd.s32 1, %s23
    $region7: #{tpu_custom_call.1} parent=1 // loop_footer_branch
      %22 = sbr.rel target = $region3
    $region8: #{tpu_custom_call.1} parent=1 // loop_exit
      _
    %5470 = vsyncpa [#allocation3], 1
    %s5471 = scalar_lea.sflag [#allocation3], 1
    %5472 = vsyncpa %s5471, 1

</llo_original>
